<compile_context>
chip_gen: v7x
topology: tpu7x:2x2x1
jax: 0.10.0
libtpu: 0.0.40
codegen_flags: <defaults>
</compile_context>

<pallas_src>
import functools

import jax
import jax.numpy as jnp
from jax import lax
from jax.experimental import pallas as pl
from jax.experimental.pallas import tpu as pltpu

_N_CLS = 10
_MLP_HID = 64


def _cornet_kernel(x_ref, wbig_ref, bcat_ref, w2_ref, b2_ref, w3_ref, b3_ref,
                   aux_ref, thr_ref, out_ref, acc_ref, sl_ref, *,
                   time_steps, tile_b, sigma):
    f32 = jnp.float32
    T = time_steps
    n_cls = _N_CLS
    k = pl.program_id(1)
    kc = x_ref.shape[1]

    @pl.when(k == 0)
    def _():
        acc_ref[...] = jnp.zeros_like(acc_ref)

    # Fused avg-pool + linear1 + decoder matmul (one MXU pass over the raw
    # activation chunk):  acc += x_chunk @ Wbig_chunk, where
    #   Wbig[c*HW + p, 0:64]  = W1[c, :] / HW
    #   Wbig[c*HW + p, 64:74] = Wd[c, :] / HW
    x_bf = x_ref[...].astype(wbig_ref.dtype)
    row0 = pl.multiple_of(k * kc, 8)
    w_chunk = wbig_ref[pl.ds(row0, kc), :]
    acc_ref[...] += jnp.dot(x_bf, w_chunk, preferred_element_type=f32)

    @pl.when(k == pl.num_programs(1) - 1)
    def _():
        y = acc_ref[...] + bcat_ref[...]                       # (tile_n, 128)
        h = jnp.maximum(y[:, 0:_MLP_HID], 0.0)
        h = jnp.maximum(
            jnp.dot(h, w2_ref[...], preferred_element_type=f32) + b2_ref[...], 0.0)
        s_lin = jnp.dot(h, w3_ref[...], preferred_element_type=f32) + b3_ref[...]
        logit = y[:, _MLP_HID:_MLP_HID + n_cls]                # (tile_n, 10)

        # Row-aligned per-time parameters: two full-tile VPU ops, no per-t
        # scalar broadcasts inside the loops (review item 7).
        wt = aux_ref[:, 0:1]
        bt = aux_ref[:, 1:2]
        fw = aux_ref[:, 2:3]
        sl_ref[:, 0:n_cls] = s_lin * wt + bt                   # scaled s trajectory
        sl_ref[:, 16:16 + n_cls] = logit * fw                  # scaled logit trajectory

        thr = thr_ref[0]

        # Pass 1: running cumsum + first threshold-crossing time.  Rows of
        # time t within the (batch-major) tile are a stride-T sublane slice.
        run = jnp.zeros((tile_b, n_cls), f32)
        dec = jnp.full((tile_b, n_cls), float(T), f32)
        for t in range(T):
            row = sl_ref[pl.ds(t, tile_b, stride=T), :]
            run = run + row[:, 0:n_cls]
            dec = jnp.minimum(dec, jnp.where(run >= thr, float(t), float(T)))
        dt = jnp.min(dec, axis=1, keepdims=True)               # (tile_b, 1)

        # All T soft-index weights in one EUP burst (review item 8).
        t_iota = lax.broadcasted_iota(jnp.int32, (tile_b, T), 1).astype(f32)
        soft = jax.nn.sigmoid((dt - t_iota + 0.5) * sigma)     # (tile_b, T)

        # Pass 2: soft-index weighted sum of the decoder trajectory.
        out = jnp.zeros((tile_b, n_cls), f32)
        for t in range(T):
            row = sl_ref[pl.ds(t, tile_b, stride=T), :]
            out = out + row[:, 16:16 + n_cls] * soft[:, t:t + 1]

        # Merged lane-dense output block: cols 0:10 logits, col 10 decision time.
        out_ref[0, :, 0:n_cls] = out
        out_ref[0, :, n_cls:n_cls + 1] = dt


def _pick_tile_b(batch, time_steps, *, chunk_row_bytes, act_vmem_budget):
    """Whole batches per tile: divides `batch`, tile_n sublane-aligned, the
    double-buffered activation block fits the budget, and >=2 grid tiles when
    possible (v7x megacore); prefer tile_b that is a multiple of 8."""
    max_rows = max(8, act_vmem_budget // (2 * chunk_row_bytes))

    def candidates(require_two_tiles):
        cands = []
        for c in range(1, batch + 1):
            if batch % c:
                continue
            rows = c * time_steps
            if rows % 8 != 0 and c != batch:       # (8,128) sublane constraint
                continue
            if rows > max_rows:
                continue
            if require_two_tiles and batch >= 2 and batch // c < 2:
                continue
            cands.append(c)
        return cands

    cands = candidates(True) or candidates(False)
    if not cands:
        return batch                                # single tile == full array
    aligned = [c for c in cands if c % 8 == 0]
    return max(aligned) if aligned else max(cands)


def cornet_forward(hidden_state, params, *, batch, time_steps, sigma,
                   matmul_dtype=jnp.bfloat16,
                   act_vmem_budget=12 * 1024 * 1024):
    """hidden_state: (batch*time_steps, 512, 7, 7) float32 NCHW, batch-major rows."""
    T = time_steps
    N = batch * T
    assert hidden_state.shape[0] == N
    C = int(hidden_state.shape[1])
    HW = int(hidden_state.shape[2]) * int(hidden_state.shape[3])
    K = C * HW
    n_cls = _N_CLS

    # Flatten (free, contiguous view): x2[r, c*HW + p] = hidden_state[r, c].ravel()[p]
    x2 = hidden_state.reshape(N, K).astype(jnp.float32)

    # Lane-dense K chunks (multiple of 128) for the streamed matmul.
    kc = K // 4 if (K % 512 == 0 and K >= 2048) else K
    num_k = K // kc

    tile_b = _pick_tile_b(batch, T, chunk_row_bytes=kc * 4,
                          act_vmem_budget=act_vmem_budget)
    num_tiles = batch // tile_b
    tile_n = tile_b * T

    # Fused pool + linear1 + decoder weight / bias (built once per call; tiny
    # compared with the activation for realistic batch sizes).
    pad = 128 - _MLP_HID - n_cls
    cat = jnp.concatenate(
        [params["w1"].astype(jnp.float32), params["wd"].astype(jnp.float32),
         jnp.zeros((C, pad), jnp.float32)], axis=1) / float(HW)          # (C, 128)
    wbig = jnp.broadcast_to(cat[:, None, :], (C, HW, 128)).reshape(K, 128)
    wbig = wbig.astype(matmul_dtype)
    bcat = jnp.concatenate(
        [params["b1"].reshape(1, _MLP_HID), params["bd"].reshape(1, n_cls),
         jnp.zeros((1, pad), jnp.float32)], axis=1).astype(jnp.float32)  # (1, 128)

    # Row-aligned per-time parameters for one batch tile (row r -> t = r % T).
    wt = jnp.tile(params["w"].reshape(T), tile_b)
    bt = jnp.tile(params["b"].reshape(T), tile_b)
    fw = jnp.tile(params["fc2_w"].reshape(T), tile_b)
    aux = jnp.stack([wt, bt, fw, jnp.zeros_like(wt)], axis=1).astype(jnp.float32)

    thr = params["threshold"].reshape(1).astype(jnp.float32)

    kernel = functools.partial(_cornet_kernel, time_steps=T, tile_b=tile_b,
                               sigma=float(sigma))

    def _const(shape):
        zeros = (0,) * len(shape)
        return pl.BlockSpec(shape, lambda i, k, _z=zeros: _z)

    in_specs = [
        pl.BlockSpec((tile_n, kc), lambda i, k: (i, k)),      # streamed activation
        _const((K, 128)),                                     # fused weight (resident)
        _const((1, 128)),                                     # fused bias
        _const((_MLP_HID, _MLP_HID)), _const((1, _MLP_HID)),  # linear2
        _const((_MLP_HID, n_cls)), _const((1, n_cls)),        # linear3
        _const((tile_n, 4)),                                  # per-row time params
        pl.BlockSpec(memory_space=pltpu.MemorySpace.SMEM),    # threshold
    ]
    out_specs = pl.BlockSpec((1, tile_b, 16), lambda i, k: (i, 0, 0))
    out_shape = jax.ShapeDtypeStruct((num_tiles, tile_b, 16), jnp.float32)
    scratch = [pltpu.VMEM((tile_n, 128), jnp.float32),        # f32 accumulator
               pltpu.VMEM((tile_n, 32), jnp.float32)]         # scaled trajectories

    # Explicit VMEM accounting (review item 12): double-buffered activation
    # chunk + (possibly double-buffered) resident fused weight + small stuff.
    itemsize = jnp.dtype(matmul_dtype).itemsize
    act_buf = 2 * tile_n * kc * 4
    weight_buf = 2 * K * 128 * itemsize
    small = (2 * (128 + _MLP_HID * _MLP_HID + _MLP_HID + _MLP_HID * n_cls
                  + n_cls + tile_n * 4) * 4
             + tile_n * 128 * 4 + tile_n * 32 * 4 + 2 * tile_b * 16 * 4)
    vmem_limit = int(min(56 * 1024 * 1024,
                         act_buf + weight_buf + small + 4 * 1024 * 1024))

    flops = 2 * N * K * 128 + 2 * N * (_MLP_HID * _MLP_HID + _MLP_HID * n_cls)
    cost = pl.CostEstimate(
        flops=int(flops),
        transcendentals=int(N),
        bytes_accessed=int(N * K * 4 + K * 128 * itemsize + batch * 16 * 4))

    merged = pl.pallas_call(
        kernel,
        grid=(num_tiles, num_k),
        in_specs=in_specs,
        out_specs=out_specs,
        out_shape=out_shape,
        scratch_shapes=scratch,
        compiler_params=pltpu.CompilerParams(
            dimension_semantics=("parallel", "arbitrary"),
            vmem_limit_bytes=vmem_limit),
        cost_estimate=cost,
    )(x2, wbig, bcat,
      params["w2"].astype(jnp.float32), params["b2"].reshape(1, -1).astype(jnp.float32),
      params["w3"].astype(jnp.float32), params["b3"].reshape(1, -1).astype(jnp.float32),
      aux, thr)

    merged = merged.reshape(batch, 16)
    return merged[:, :n_cls], merged[:, n_cls]


def cornet_reference(hidden_state, params, *, batch, time_steps, sigma):
    """Pure-JAX f32 reference with identical (inferred) semantics."""
    N = batch * time_steps
    C = hidden_state.shape[1]
    x = hidden_state.reshape(N, C, -1).astype(jnp.float32)
    pooled = jnp.mean(x, axis=2)
    h = jax.nn.relu(pooled @ params["w1"] + params["b1"])
    h = jax.nn.relu(h @ params["w2"] + params["b2"])
    s_lin = (h @ params["w3"] + params["b3"]).reshape(batch, time_steps, 10)
    logit = (pooled @ params["wd"] + params["bd"]).reshape(batch, time_steps, 10)
    s_traj = (s_lin * params["w"].reshape(1, time_steps, 1)
              + params["b"].reshape(1, time_steps, 1))
    s_acc = jnp.cumsum(s_traj, axis=1)
    evidence = s_acc - params["threshold"]
    t_idx = jnp.arange(time_steps).reshape(1, time_steps, 1)
    cand = jnp.where(evidence >= 0, t_idx, time_steps)
    decision_time = jnp.min(cand, axis=1).astype(jnp.float32)            # (B, 10)
    dt_min = jnp.min(decision_time, axis=1)                              # (B,)
    soft = jax.nn.sigmoid(
        (dt_min[:, None] - jnp.arange(time_steps) + 0.5) * sigma)        # (B, T)
    logit_traj = logit * params["fc2_w"].reshape(1, time_steps, 1)
    decision_logits = jnp.sum(logit_traj * soft[:, :, None], axis=1)     # (B, 10)
    return decision_logits, dt_min


def _check(hidden_state, params, *, batch, time_steps, sigma, matmul_dtype,
           act_vmem_budget, atol, rtol):
    logits, dt_min = cornet_forward(hidden_state, params, batch=batch,
                                    time_steps=time_steps, sigma=sigma,
                                    matmul_dtype=matmul_dtype,
                                    act_vmem_budget=act_vmem_budget)
    jax.block_until_ready((logits, dt_min))
    ref_logits, ref_dt = cornet_reference(hidden_state, params, batch=batch,
                                          time_steps=time_steps, sigma=sigma)
    assert logits.shape == (batch, 10) and dt_min.shape == (batch,)
    assert jnp.allclose(logits, ref_logits, rtol=rtol, atol=atol), (
        float(jnp.max(jnp.abs(logits - ref_logits))))
    assert jnp.allclose(dt_min, ref_dt, rtol=1e-5, atol=1e-5)


if __name__ == "__main__":
    B, T = 4, 8          # small batch / time_steps (module default is 20)
    SIGMA = 2.0
    key = jax.random.PRNGKey(0)
    keys = jax.random.split(key, 8)

    params = {
        # self.linear : Linear(512,64) -> ReLU -> Linear(64,64) -> ReLU -> Linear(64,10)
        "w1": jax.random.normal(keys[0], (512, 64), jnp.float32) / jnp.sqrt(512.0),
        "b1": jax.random.normal(keys[1], (1, 64), jnp.float32) * 0.01,
        "w2": jax.random.normal(keys[2], (64, 64), jnp.float32) / jnp.sqrt(64.0),
        "b2": jnp.zeros((1, 64), jnp.float32),
        "w3": jax.random.normal(keys[3], (64, 10), jnp.float32) / jnp.sqrt(64.0),
        "b3": jnp.zeros((1, 10), jnp.float32),
        # self.decoder : Linear(512, 10)
        "wd": jax.random.normal(keys[4], (512, 10), jnp.float32) / jnp.sqrt(512.0),
        "bd": jnp.zeros((1, 10), jnp.float32),
        # per-time parameters, as in __init__
        "w": jnp.ones((1, T), jnp.float32) * 0.1,
        "b": jnp.zeros((1, T), jnp.float32),
        "fc2_w": jax.random.normal(keys[5], (1, T), jnp.float32) * 0.1,  # nn.Linear(T,1).weight
        "threshold": jnp.array(1.0, jnp.float32),
    }

    # hidden_state is whatever .view(-1, 512, 7, 7) accepts: (B*T, 512, 7, 7) NCHW
    hidden_state = jax.random.normal(keys[6], (B * T, 512, 7, 7), jnp.float32)

    # Config A: module-default parameters, bf16 MXU path, default tiling
    # -> grid (2 batch tiles x 4 K-chunks).
    _check(hidden_state, params, batch=B, time_steps=T, sigma=SIGMA,
           matmul_dtype=jnp.bfloat16, act_vmem_budget=12 * 1024 * 1024,
           atol=1e-2, rtol=1e-2)

    # Config B: deterministic threshold crossing at t=2 (w=0 so the crossing
    # is data-independent), f32 MXU path, tiny VMEM budget -> grid (4 x 4).
    params_b = dict(params)
    params_b["w"] = jnp.zeros((1, T), jnp.float32)
    params_b["b"] = jnp.ones((1, T), jnp.float32) * 0.35
    _check(hidden_state, params_b, batch=B, time_steps=T, sigma=SIGMA,
           matmul_dtype=jnp.float32, act_vmem_budget=600 * 1024,
           atol=1e-3, rtol=1e-3)

    print("KERNEL_OK")
</pallas_src>

<mosaic_0001>
module attributes {stable_mosaic.version = 11 : i64} {
  func.func @_cornet_kernel(%arg0: i32, %arg1: i32, %arg2: memref<16x6272xf32, #tpu.memory_space<vmem>>, %arg3: memref<25088x128xbf16, #tpu.memory_space<vmem>>, %arg4: memref<1x128xf32, #tpu.memory_space<vmem>>, %arg5: memref<64x64xf32, #tpu.memory_space<vmem>>, %arg6: memref<1x64xf32, #tpu.memory_space<vmem>>, %arg7: memref<64x10xf32, #tpu.memory_space<vmem>>, %arg8: memref<1x10xf32, #tpu.memory_space<vmem>>, %arg9: memref<16x4xf32, #tpu.memory_space<vmem>>, %arg10: memref<1xf32, #tpu.memory_space<smem>>, %arg11: memref<1x2x16xf32, #tpu.memory_space<vmem>>, %arg12: memref<16x128xf32, #tpu.memory_space<vmem>>, %arg13: memref<16x32xf32, #tpu.memory_space<vmem>>) attributes {dimension_semantics = [#tpu.dimension_semantics<parallel>, #tpu.dimension_semantics<arbitrary>], iteration_bounds = array<i64: 2, 4>, scalar_prefetch = 0 : i64, scratch_operands = 2 : i64, tpu.core_type = #tpu.core_type<tc>, window_params = [{transform_indices = @transform_0, window_bounds = array<i64: 16, 6272>}, {pipeline_mode = #tpu.pipeline_mode<synchronous>, transform_indices = @transform_1, window_bounds = array<i64: 25088, 128>}, {pipeline_mode = #tpu.pipeline_mode<synchronous>, transform_indices = @transform_2, window_bounds = array<i64: 1, 128>}, {pipeline_mode = #tpu.pipeline_mode<synchronous>, transform_indices = @transform_3, window_bounds = array<i64: 64, 64>}, {pipeline_mode = #tpu.pipeline_mode<synchronous>, transform_indices = @transform_4, window_bounds = array<i64: 1, 64>}, {pipeline_mode = #tpu.pipeline_mode<synchronous>, transform_indices = @transform_5, window_bounds = array<i64: 64, 10>}, {pipeline_mode = #tpu.pipeline_mode<synchronous>, transform_indices = @transform_6, window_bounds = array<i64: 1, 10>}, {pipeline_mode = #tpu.pipeline_mode<synchronous>, transform_indices = @transform_7, window_bounds = array<i64: 16, 4>}, {transform_indices = @transform_8, window_bounds = array<i64: 1>}, {transform_indices = @transform_9, window_bounds = array<i64: 1, 2, 16>}]} {
    %c0_i32 = arith.constant 0 : i32
    %0 = arith.cmpi eq, %arg1, %c0_i32 : i32
    %1 = arith.extui %0 : i1 to i32
    %c0_i32_0 = arith.constant 0 : i32
    %2 = arith.cmpi ne, %1, %c0_i32_0 : i32
    scf.if %2 {
      %cst_8 = arith.constant 0.000000e+00 : f32
      %16 = vector.broadcast %cst_8 : f32 to vector<16x128xf32>
      %c0_9 = arith.constant 0 : index
      %c0_10 = arith.constant 0 : index
      %17 = vector.load %arg12[%c0_9, %c0_10] : memref<16x128xf32, #tpu.memory_space<vmem>>, vector<16x128xf32>
      tpu.vector_store %arg12[%c0_9, %c0_10], %16 {strides = array<i32>} : memref<16x128xf32, #tpu.memory_space<vmem>>, vector<16x128xf32>,
    } else {
    }
    %c0 = arith.constant 0 : index
    %c0_1 = arith.constant 0 : index
    %3 = vector.load %arg2[%c0, %c0_1] : memref<16x6272xf32, #tpu.memory_space<vmem>>, vector<16x6272xf32>
    %4 = arith.truncf %3 : vector<16x6272xf32> to vector<16x6272xbf16>
    %c6272_i32 = arith.constant 6272 : i32
    %5 = arith.muli %arg1, %c6272_i32 : i32
    %6 = tpu.assume_multiple %5, 8 : i32
    %7 = arith.index_cast %6 : i32 to index
    %c0_2 = arith.constant 0 : index
    %8 = vector.load %arg3[%7, %c0_2] : memref<25088x128xbf16, #tpu.memory_space<vmem>>, vector<6272x128xbf16>
    %c0_3 = arith.constant 0 : index
    %c0_4 = arith.constant 0 : index
    %9 = vector.load %arg12[%c0_3, %c0_4] : memref<16x128xf32, #tpu.memory_space<vmem>>, vector<16x128xf32>
    %cst = arith.constant dense<0.000000e+00> : vector<16x128xf32>
    %10 = tpu.matmul %4, %8, %cst {dimension_numbers = #tpu.dot_dimension_numbers<[1], [0], [0], [1], [0, 0, 1, 1], [], []>} : vector<16x6272xbf16>, vector<6272x128xbf16>, vector<16x128xf32> -> vector<16x128xf32>
    %11 = arith.addf %9, %10 : vector<16x128xf32>
    %c0_5 = arith.constant 0 : index
    %c0_6 = arith.constant 0 : index
    %12 = vector.load %arg12[%c0_5, %c0_6] : memref<16x128xf32, #tpu.memory_space<vmem>>, vector<16x128xf32>
    tpu.vector_store %arg12[%c0_5, %c0_6], %11 {strides = array<i32>} : memref<16x128xf32, #tpu.memory_space<vmem>>, vector<16x128xf32>,
    %c3_i32 = arith.constant 3 : i32
    %13 = arith.cmpi eq, %arg1, %c3_i32 : i32
    %14 = arith.extui %13 : i1 to i32
    %c0_i32_7 = arith.constant 0 : i32
    %15 = arith.cmpi ne, %14, %c0_i32_7 : i32
    scf.if %15 {
      %c0_8 = arith.constant 0 : index
      %c0_9 = arith.constant 0 : index
      %16 = vector.load %arg12[%c0_8, %c0_9] : memref<16x128xf32, #tpu.memory_space<vmem>>, vector<16x128xf32>
      %c0_10 = arith.constant 0 : index
      %c0_11 = arith.constant 0 : index
      %17 = vector.load %arg4[%c0_10, %c0_11] : memref<1x128xf32, #tpu.memory_space<vmem>>, vector<1x128xf32>
      %18 = vector.broadcast %17 : vector<1x128xf32> to vector<16x128xf32>
      %19 = arith.addf %16, %18 : vector<16x128xf32>
      %20 = vector.extract_strided_slice %19 {offsets = [0, 0], sizes = [16, 64], strides = [1, 1]} : vector<16x128xf32> to vector<16x64xf32>
      %cst_12 = arith.constant 0.000000e+00 : f32
      %21 = vector.broadcast %cst_12 : f32 to vector<16x64xf32>
      %22 = arith.maximumf %20, %21 : vector<16x64xf32>
      %c0_13 = arith.constant 0 : index
      %c0_14 = arith.constant 0 : index
      %23 = vector.load %arg5[%c0_13, %c0_14] : memref<64x64xf32, #tpu.memory_space<vmem>>, vector<64x64xf32>
      %cst_15 = arith.constant dense<0.000000e+00> : vector<16x64xf32>
      %24 = tpu.matmul %22, %23, %cst_15 {dimension_numbers = #tpu.dot_dimension_numbers<[1], [0], [0], [1], [0, 0, 1, 1], [], []>} : vector<16x64xf32>, vector<64x64xf32>, vector<16x64xf32> -> vector<16x64xf32>
      %c0_16 = arith.constant 0 : index
      %c0_17 = arith.constant 0 : index
      %25 = vector.load %arg6[%c0_16, %c0_17] : memref<1x64xf32, #tpu.memory_space<vmem>>, vector<1x64xf32>
      %26 = vector.broadcast %25 : vector<1x64xf32> to vector<16x64xf32>
      %27 = arith.addf %24, %26 : vector<16x64xf32>
      %cst_18 = arith.constant 0.000000e+00 : f32
      %28 = vector.broadcast %cst_18 : f32 to vector<16x64xf32>
      %29 = arith.maximumf %27, %28 : vector<16x64xf32>
      %c0_19 = arith.constant 0 : index
      %c0_20 = arith.constant 0 : index
      %30 = vector.load %arg7[%c0_19, %c0_20] : memref<64x10xf32, #tpu.memory_space<vmem>>, vector<64x10xf32>
      %cst_21 = arith.constant dense<0.000000e+00> : vector<16x10xf32>
      %31 = tpu.matmul %29, %30, %cst_21 {dimension_numbers = #tpu.dot_dimension_numbers<[1], [0], [0], [1], [0, 0, 1, 1], [], []>} : vector<16x64xf32>, vector<64x10xf32>, vector<16x10xf32> -> vector<16x10xf32>
      %c0_22 = arith.constant 0 : index
      %c0_23 = arith.constant 0 : index
      %32 = vector.load %arg8[%c0_22, %c0_23] : memref<1x10xf32, #tpu.memory_space<vmem>>, vector<1x10xf32>
      %33 = vector.broadcast %32 : vector<1x10xf32> to vector<16x10xf32>
      %34 = arith.addf %31, %33 : vector<16x10xf32>
      %35 = vector.extract_strided_slice %19 {offsets = [0, 64], sizes = [16, 10], strides = [1, 1]} : vector<16x128xf32> to vector<16x10xf32>
      %c0_24 = arith.constant 0 : index
      %c0_25 = arith.constant 0 : index
      %36 = vector.load %arg9[%c0_24, %c0_25] : memref<16x4xf32, #tpu.memory_space<vmem>>, vector<16x1xf32>
      %c0_26 = arith.constant 0 : index
      %c1 = arith.constant 1 : index
      %37 = vector.load %arg9[%c0_26, %c1] : memref<16x4xf32, #tpu.memory_space<vmem>>, vector<16x1xf32>
      %c0_27 = arith.constant 0 : index
      %c2 = arith.constant 2 : index
      %38 = vector.load %arg9[%c0_27, %c2] : memref<16x4xf32, #tpu.memory_space<vmem>>, vector<16x1xf32>
      %39 = vector.broadcast %36 : vector<16x1xf32> to vector<16x10xf32>
      %40 = arith.mulf %34, %39 : vector<16x10xf32>
      %41 = vector.broadcast %37 : vector<16x1xf32> to vector<16x10xf32>
      %42 = arith.addf %40, %41 : vector<16x10xf32>
      %c0_28 = arith.constant 0 : index
      %c0_29 = arith.constant 0 : index
      %43 = vector.load %arg13[%c0_28, %c0_29] : memref<16x32xf32, #tpu.memory_space<vmem>>, vector<16x10xf32>
      tpu.vector_store %arg13[%c0_28, %c0_29], %42 {strides = array<i32>} : memref<16x32xf32, #tpu.memory_space<vmem>>, vector<16x10xf32>,
      %44 = vector.broadcast %38 : vector<16x1xf32> to vector<16x10xf32>
      %45 = arith.mulf %35, %44 : vector<16x10xf32>
      %c0_30 = arith.constant 0 : index
      %c16 = arith.constant 16 : index
      %46 = vector.load %arg13[%c0_30, %c16] : memref<16x32xf32, #tpu.memory_space<vmem>>, vector<16x10xf32>
      tpu.vector_store %arg13[%c0_30, %c16], %45 {strides = array<i32>} : memref<16x32xf32, #tpu.memory_space<vmem>>, vector<16x10xf32>,
      %c0_31 = arith.constant 0 : index
      %47 = memref.load %arg10[%c0_31] : memref<1xf32, #tpu.memory_space<smem>>
      %cst_32 = arith.constant 0.000000e+00 : f32
      %48 = vector.broadcast %cst_32 : f32 to vector<2x10xf32>
      %cst_33 = arith.constant 8.000000e+00 : f32
      %49 = vector.broadcast %cst_33 : f32 to vector<2x10xf32>
      %c0_34 = arith.constant 0 : index
      %c0_35 = arith.constant 0 : index
      %50 = tpu.strided_load %arg13[%c0_34, %c0_35] {strides = array<i32: 8, 1>} : memref<16x32xf32, #tpu.memory_space<vmem>>, vector<2x32xf32>
      %51 = vector.extract_strided_slice %50 {offsets = [0, 0], sizes = [2, 10], strides = [1, 1]} : vector<2x32xf32> to vector<2x10xf32>
      %52 = arith.addf %48, %51 : vector<2x10xf32>
      %53 = vector.broadcast %47 : f32 to vector<2x10xf32>
      %54 = arith.cmpf oge, %52, %53 : vector<2x10xf32>
      %cst_36 = arith.constant 0.000000e+00 : f32
      %cst_37 = arith.constant 8.000000e+00 : f32
      %55 = vector.broadcast %cst_36 : f32 to vector<2x10xf32>
      %56 = vector.broadcast %cst_37 : f32 to vector<2x10xf32>
      %57 = arith.select %54, %55, %56 : vector<2x10xi1>, vector<2x10xf32>
      %58 = arith.minimumf %49, %57 : vector<2x10xf32>
      %c1_38 = arith.constant 1 : index
      %c0_39 = arith.constant 0 : index
      %59 = tpu.strided_load %arg13[%c1_38, %c0_39] {strides = array<i32: 8, 1>} : memref<16x32xf32, #tpu.memory_space<vmem>>, vector<2x32xf32>
      %60 = vector.extract_strided_slice %59 {offsets = [0, 0], sizes = [2, 10], strides = [1, 1]} : vector<2x32xf32> to vector<2x10xf32>
      %61 = arith.addf %52, %60 : vector<2x10xf32>
      %62 = vector.broadcast %47 : f32 to vector<2x10xf32>
      %63 = arith.cmpf oge, %61, %62 : vector<2x10xf32>
      %cst_40 = arith.constant 1.000000e+00 : f32
      %cst_41 = arith.constant 8.000000e+00 : f32
      %64 = vector.broadcast %cst_40 : f32 to vector<2x10xf32>
      %65 = vector.broadcast %cst_41 : f32 to vector<2x10xf32>
      %66 = arith.select %63, %64, %65 : vector<2x10xi1>, vector<2x10xf32>
      %67 = arith.minimumf %58, %66 : vector<2x10xf32>
      %c2_42 = arith.constant 2 : index
      %c0_43 = arith.constant 0 : index
      %68 = tpu.strided_load %arg13[%c2_42, %c0_43] {strides = array<i32: 8, 1>} : memref<16x32xf32, #tpu.memory_space<vmem>>, vector<2x32xf32>
      %69 = vector.extract_strided_slice %68 {offsets = [0, 0], sizes = [2, 10], strides = [1, 1]} : vector<2x32xf32> to vector<2x10xf32>
      %70 = arith.addf %61, %69 : vector<2x10xf32>
      %71 = vector.broadcast %47 : f32 to vector<2x10xf32>
      %72 = arith.cmpf oge, %70, %71 : vector<2x10xf32>
      %cst_44 = arith.constant 2.000000e+00 : f32
      %cst_45 = arith.constant 8.000000e+00 : f32
      %73 = vector.broadcast %cst_44 : f32 to vector<2x10xf32>
      %74 = vector.broadcast %cst_45 : f32 to vector<2x10xf32>
      %75 = arith.select %72, %73, %74 : vector<2x10xi1>, vector<2x10xf32>
      %76 = arith.minimumf %67, %75 : vector<2x10xf32>
      %c3 = arith.constant 3 : index
      %c0_46 = arith.constant 0 : index
      %77 = tpu.strided_load %arg13[%c3, %c0_46] {strides = array<i32: 8, 1>} : memref<16x32xf32, #tpu.memory_space<vmem>>, vector<2x32xf32>
      %78 = vector.extract_strided_slice %77 {offsets = [0, 0], sizes = [2, 10], strides = [1, 1]} : vector<2x32xf32> to vector<2x10xf32>
      %79 = arith.addf %70, %78 : vector<2x10xf32>
      %80 = vector.broadcast %47 : f32 to vector<2x10xf32>
      %81 = arith.cmpf oge, %79, %80 : vector<2x10xf32>
      %cst_47 = arith.constant 3.000000e+00 : f32
      %cst_48 = arith.constant 8.000000e+00 : f32
      %82 = vector.broadcast %cst_47 : f32 to vector<2x10xf32>
      %83 = vector.broadcast %cst_48 : f32 to vector<2x10xf32>
      %84 = arith.select %81, %82, %83 : vector<2x10xi1>, vector<2x10xf32>
      %85 = arith.minimumf %76, %84 : vector<2x10xf32>
      %c4 = arith.constant 4 : index
      %c0_49 = arith.constant 0 : index
      %86 = tpu.strided_load %arg13[%c4, %c0_49] {strides = array<i32: 8, 1>} : memref<16x32xf32, #tpu.memory_space<vmem>>, vector<2x32xf32>
      %87 = vector.extract_strided_slice %86 {offsets = [0, 0], sizes = [2, 10], strides = [1, 1]} : vector<2x32xf32> to vector<2x10xf32>
      %88 = arith.addf %79, %87 : vector<2x10xf32>
      %89 = vector.broadcast %47 : f32 to vector<2x10xf32>
      %90 = arith.cmpf oge, %88, %89 : vector<2x10xf32>
      %cst_50 = arith.constant 4.000000e+00 : f32
      %cst_51 = arith.constant 8.000000e+00 : f32
      %91 = vector.broadcast %cst_50 : f32 to vector<2x10xf32>
      %92 = vector.broadcast %cst_51 : f32 to vector<2x10xf32>
      %93 = arith.select %90, %91, %92 : vector<2x10xi1>, vector<2x10xf32>
      %94 = arith.minimumf %85, %93 : vector<2x10xf32>
      %c5 = arith.constant 5 : index
      %c0_52 = arith.constant 0 : index
      %95 = tpu.strided_load %arg13[%c5, %c0_52] {strides = array<i32: 8, 1>} : memref<16x32xf32, #tpu.memory_space<vmem>>, vector<2x32xf32>
      %96 = vector.extract_strided_slice %95 {offsets = [0, 0], sizes = [2, 10], strides = [1, 1]} : vector<2x32xf32> to vector<2x10xf32>
      %97 = arith.addf %88, %96 : vector<2x10xf32>
      %98 = vector.broadcast %47 : f32 to vector<2x10xf32>
      %99 = arith.cmpf oge, %97, %98 : vector<2x10xf32>
      %cst_53 = arith.constant 5.000000e+00 : f32
      %cst_54 = arith.constant 8.000000e+00 : f32
      %100 = vector.broadcast %cst_53 : f32 to vector<2x10xf32>
      %101 = vector.broadcast %cst_54 : f32 to vector<2x10xf32>
      %102 = arith.select %99, %100, %101 : vector<2x10xi1>, vector<2x10xf32>
      %103 = arith.minimumf %94, %102 : vector<2x10xf32>
      %c6 = arith.constant 6 : index
      %c0_55 = arith.constant 0 : index
      %104 = tpu.strided_load %arg13[%c6, %c0_55] {strides = array<i32: 8, 1>} : memref<16x32xf32, #tpu.memory_space<vmem>>, vector<2x32xf32>
      %105 = vector.extract_strided_slice %104 {offsets = [0, 0], sizes = [2, 10], strides = [1, 1]} : vector<2x32xf32> to vector<2x10xf32>
      %106 = arith.addf %97, %105 : vector<2x10xf32>
      %107 = vector.broadcast %47 : f32 to vector<2x10xf32>
      %108 = arith.cmpf oge, %106, %107 : vector<2x10xf32>
      %cst_56 = arith.constant 6.000000e+00 : f32
      %cst_57 = arith.constant 8.000000e+00 : f32
      %109 = vector.broadcast %cst_56 : f32 to vector<2x10xf32>
      %110 = vector.broadcast %cst_57 : f32 to vector<2x10xf32>
      %111 = arith.select %108, %109, %110 : vector<2x10xi1>, vector<2x10xf32>
      %112 = arith.minimumf %103, %111 : vector<2x10xf32>
      %c7 = arith.constant 7 : index
      %c0_58 = arith.constant 0 : index
      %113 = tpu.strided_load %arg13[%c7, %c0_58] {strides = array<i32: 8, 1>} : memref<16x32xf32, #tpu.memory_space<vmem>>, vector<2x32xf32>
      %114 = vector.extract_strided_slice %113 {offsets = [0, 0], sizes = [2, 10], strides = [1, 1]} : vector<2x32xf32> to vector<2x10xf32>
      %115 = arith.addf %106, %114 : vector<2x10xf32>
      %116 = vector.broadcast %47 : f32 to vector<2x10xf32>
      %117 = arith.cmpf oge, %115, %116 : vector<2x10xf32>
      %cst_59 = arith.constant 7.000000e+00 : f32
      %cst_60 = arith.constant 8.000000e+00 : f32
      %118 = vector.broadcast %cst_59 : f32 to vector<2x10xf32>
      %119 = vector.broadcast %cst_60 : f32 to vector<2x10xf32>
      %120 = arith.select %117, %118, %119 : vector<2x10xi1>, vector<2x10xf32>
      %121 = arith.minimumf %112, %120 : vector<2x10xf32>
      %cst_61 = arith.constant dense<0x7F800000> : vector<2xf32>
      %122 = vector.multi_reduction <minimumf>, %121, %cst_61 [1] : vector<2x10xf32> to vector<2xf32>
      %123 = vector.shape_cast %122 : vector<2xf32> to vector<2x1xf32>
      %124 = tpu.iota {dimensions = array<i32: 1>} : vector<2x8xi32>
      %125 = arith.sitofp %124 : vector<2x8xi32> to vector<2x8xf32>
      %126 = vector.broadcast %123 : vector<2x1xf32> to vector<2x8xf32>
      %127 = arith.subf %126, %125 : vector<2x8xf32>
      %cst_62 = arith.constant 5.000000e-01 : f32
      %128 = vector.broadcast %cst_62 : f32 to vector<2x8xf32>
      %129 = arith.addf %127, %128 : vector<2x8xf32>
      %cst_63 = arith.constant 2.000000e+00 : f32
      %130 = vector.broadcast %cst_63 : f32 to vector<2x8xf32>
      %131 = arith.mulf %129, %130 : vector<2x8xf32>
      %132 = arith.negf %131 : vector<2x8xf32>
      %133 = math.exp %132 : vector<2x8xf32>
      %cst_64 = arith.constant 1.000000e+00 : f32
      %134 = vector.broadcast %cst_64 : f32 to vector<2x8xf32>
      %135 = arith.addf %134, %133 : vector<2x8xf32>
      %136 = arith.divf %134, %135 : vector<2x8xf32>
      %cst_65 = arith.constant 0.000000e+00 : f32
      %137 = vector.broadcast %cst_65 : f32 to vector<2x10xf32>
      %c0_66 = arith.constant 0 : index
      %c0_67 = arith.constant 0 : index
      %138 = tpu.strided_load %arg13[%c0_66, %c0_67] {strides = array<i32: 8, 1>} : memref<16x32xf32, #tpu.memory_space<vmem>>, vector<2x32xf32>
      %139 = vector.extract_strided_slice %138 {offsets = [0, 16], sizes = [2, 10], strides = [1, 1]} : vector<2x32xf32> to vector<2x10xf32>
      %140 = vector.extract_strided_slice %136 {offsets = [0, 0], sizes = [2, 1], strides = [1, 1]} : vector<2x8xf32> to vector<2x1xf32>
      %141 = vector.broadcast %140 : vector<2x1xf32> to vector<2x10xf32>
      %142 = arith.mulf %139, %141 : vector<2x10xf32>
      %143 = arith.addf %137, %142 : vector<2x10xf32>
      %c1_68 = arith.constant 1 : index
      %c0_69 = arith.constant 0 : index
      %144 = tpu.strided_load %arg13[%c1_68, %c0_69] {strides = array<i32: 8, 1>} : memref<16x32xf32, #tpu.memory_space<vmem>>, vector<2x32xf32>
      %145 = vector.extract_strided_slice %144 {offsets = [0, 16], sizes = [2, 10], strides = [1, 1]} : vector<2x32xf32> to vector<2x10xf32>
      %146 = vector.extract_strided_slice %136 {offsets = [0, 1], sizes = [2, 1], strides = [1, 1]} : vector<2x8xf32> to vector<2x1xf32>
      %147 = vector.broadcast %146 : vector<2x1xf32> to vector<2x10xf32>
      %148 = arith.mulf %145, %147 : vector<2x10xf32>
      %149 = arith.addf %143, %148 : vector<2x10xf32>
      %c2_70 = arith.constant 2 : index
      %c0_71 = arith.constant 0 : index
      %150 = tpu.strided_load %arg13[%c2_70, %c0_71] {strides = array<i32: 8, 1>} : memref<16x32xf32, #tpu.memory_space<vmem>>, vector<2x32xf32>
      %151 = vector.extract_strided_slice %150 {offsets = [0, 16], sizes = [2, 10], strides = [1, 1]} : vector<2x32xf32> to vector<2x10xf32>
      %152 = vector.extract_strided_slice %136 {offsets = [0, 2], sizes = [2, 1], strides = [1, 1]} : vector<2x8xf32> to vector<2x1xf32>
      %153 = vector.broadcast %152 : vector<2x1xf32> to vector<2x10xf32>
      %154 = arith.mulf %151, %153 : vector<2x10xf32>
      %155 = arith.addf %149, %154 : vector<2x10xf32>
      %c3_72 = arith.constant 3 : index
      %c0_73 = arith.constant 0 : index
      %156 = tpu.strided_load %arg13[%c3_72, %c0_73] {strides = array<i32: 8, 1>} : memref<16x32xf32, #tpu.memory_space<vmem>>, vector<2x32xf32>
      %157 = vector.extract_strided_slice %156 {offsets = [0, 16], sizes = [2, 10], strides = [1, 1]} : vector<2x32xf32> to vector<2x10xf32>
      %158 = vector.extract_strided_slice %136 {offsets = [0, 3], sizes = [2, 1], strides = [1, 1]} : vector<2x8xf32> to vector<2x1xf32>
      %159 = vector.broadcast %158 : vector<2x1xf32> to vector<2x10xf32>
      %160 = arith.mulf %157, %159 : vector<2x10xf32>
      %161 = arith.addf %155, %160 : vector<2x10xf32>
      %c4_74 = arith.constant 4 : index
      %c0_75 = arith.constant 0 : index
      %162 = tpu.strided_load %arg13[%c4_74, %c0_75] {strides = array<i32: 8, 1>} : memref<16x32xf32, #tpu.memory_space<vmem>>, vector<2x32xf32>
      %163 = vector.extract_strided_slice %162 {offsets = [0, 16], sizes = [2, 10], strides = [1, 1]} : vector<2x32xf32> to vector<2x10xf32>
      %164 = vector.extract_strided_slice %136 {offsets = [0, 4], sizes = [2, 1], strides = [1, 1]} : vector<2x8xf32> to vector<2x1xf32>
      %165 = vector.broadcast %164 : vector<2x1xf32> to vector<2x10xf32>
      %166 = arith.mulf %163, %165 : vector<2x10xf32>
      %167 = arith.addf %161, %166 : vector<2x10xf32>
      %c5_76 = arith.constant 5 : index
      %c0_77 = arith.constant 0 : index
      %168 = tpu.strided_load %arg13[%c5_76, %c0_77] {strides = array<i32: 8, 1>} : memref<16x32xf32, #tpu.memory_space<vmem>>, vector<2x32xf32>
      %169 = vector.extract_strided_slice %168 {offsets = [0, 16], sizes = [2, 10], strides = [1, 1]} : vector<2x32xf32> to vector<2x10xf32>
      %170 = vector.extract_strided_slice %136 {offsets = [0, 5], sizes = [2, 1], strides = [1, 1]} : vector<2x8xf32> to vector<2x1xf32>
      %171 = vector.broadcast %170 : vector<2x1xf32> to vector<2x10xf32>
      %172 = arith.mulf %169, %171 : vector<2x10xf32>
      %173 = arith.addf %167, %172 : vector<2x10xf32>
      %c6_78 = arith.constant 6 : index
      %c0_79 = arith.constant 0 : index
      %174 = tpu.strided_load %arg13[%c6_78, %c0_79] {strides = array<i32: 8, 1>} : memref<16x32xf32, #tpu.memory_space<vmem>>, vector<2x32xf32>
      %175 = vector.extract_strided_slice %174 {offsets = [0, 16], sizes = [2, 10], strides = [1, 1]} : vector<2x32xf32> to vector<2x10xf32>
      %176 = vector.extract_strided_slice %136 {offsets = [0, 6], sizes = [2, 1], strides = [1, 1]} : vector<2x8xf32> to vector<2x1xf32>
      %177 = vector.broadcast %176 : vector<2x1xf32> to vector<2x10xf32>
      %178 = arith.mulf %175, %177 : vector<2x10xf32>
      %179 = arith.addf %173, %178 : vector<2x10xf32>
      %c7_80 = arith.constant 7 : index
      %c0_81 = arith.constant 0 : index
      %180 = tpu.strided_load %arg13[%c7_80, %c0_81] {strides = array<i32: 8, 1>} : memref<16x32xf32, #tpu.memory_space<vmem>>, vector<2x32xf32>
      %181 = vector.extract_strided_slice %180 {offsets = [0, 16], sizes = [2, 10], strides = [1, 1]} : vector<2x32xf32> to vector<2x10xf32>
      %182 = vector.extract_strided_slice %136 {offsets = [0, 7], sizes = [2, 1], strides = [1, 1]} : vector<2x8xf32> to vector<2x1xf32>
      %183 = vector.broadcast %182 : vector<2x1xf32> to vector<2x10xf32>
      %184 = arith.mulf %181, %183 : vector<2x10xf32>
      %185 = arith.addf %179, %184 : vector<2x10xf32>
      %c0_82 = arith.constant 0 : index
      %c0_83 = arith.constant 0 : index
      %c0_84 = arith.constant 0 : index
      %186 = vector.load %arg11[%c0_82, %c0_83, %c0_84] : memref<1x2x16xf32, #tpu.memory_space<vmem>>, vector<1x2x10xf32>
      %187 = vector.shape_cast %186 : vector<1x2x10xf32> to vector<2x10xf32>
      %188 = vector.shape_cast %185 : vector<2x10xf32> to vector<1x2x10xf32>
      tpu.vector_store %arg11[%c0_82, %c0_83, %c0_84], %188 {strides = array<i32>} : memref<1x2x16xf32, #tpu.memory_space<vmem>>, vector<1x2x10xf32>,
      %c0_85 = arith.constant 0 : index
      %c0_86 = arith.constant 0 : index
      %c10 = arith.constant 10 : index
      %189 = vector.load %arg11[%c0_85, %c0_86, %c10] : memref<1x2x16xf32, #tpu.memory_space<vmem>>, vector<1x2x1xf32>
      %190 = vector.shape_cast %189 : vector<1x2x1xf32> to vector<2x1xf32>
      %191 = vector.shape_cast %123 : vector<2x1xf32> to vector<1x2x1xf32>
      tpu.vector_store %arg11[%c0_85, %c0_86, %c10], %191 {strides = array<i32>} : memref<1x2x16xf32, #tpu.memory_space<vmem>>, vector<1x2x1xf32>,
    } else {
    }
    return
  }
  func.func @transform_0(%arg0: i32, %arg1: i32) -> (i32, i32) {
    %c0_i32 = arith.constant 0 : i32
    return %arg0, %arg1 : i32, i32
  }
  func.func @transform_1(%arg0: i32, %arg1: i32) -> (i32, i32) {
    %c0_i32 = arith.constant 0 : i32
    %c0_i32_0 = arith.constant 0 : i32
    %c0_i32_1 = arith.constant 0 : i32
    return %c0_i32, %c0_i32_0 : i32, i32
  }
  func.func @transform_2(%arg0: i32, %arg1: i32) -> (i32, i32) {
    %c0_i32 = arith.constant 0 : i32
    %c0_i32_0 = arith.constant 0 : i32
    %c0_i32_1 = arith.constant 0 : i32
    return %c0_i32, %c0_i32_0 : i32, i32
  }
  func.func @transform_3(%arg0: i32, %arg1: i32) -> (i32, i32) {
    %c0_i32 = arith.constant 0 : i32
    %c0_i32_0 = arith.constant 0 : i32
    %c0_i32_1 = arith.constant 0 : i32
    return %c0_i32, %c0_i32_0 : i32, i32
  }
  func.func @transform_4(%arg0: i32, %arg1: i32) -> (i32, i32) {
    %c0_i32 = arith.constant 0 : i32
    %c0_i32_0 = arith.constant 0 : i32
    %c0_i32_1 = arith.constant 0 : i32
    return %c0_i32, %c0_i32_0 : i32, i32
  }
  func.func @transform_5(%arg0: i32, %arg1: i32) -> (i32, i32) {
    %c0_i32 = arith.constant 0 : i32
    %c0_i32_0 = arith.constant 0 : i32
    %c0_i32_1 = arith.constant 0 : i32
    return %c0_i32, %c0_i32_0 : i32, i32
  }
  func.func @transform_6(%arg0: i32, %arg1: i32) -> (i32, i32) {
    %c0_i32 = arith.constant 0 : i32
    %c0_i32_0 = arith.constant 0 : i32
    %c0_i32_1 = arith.constant 0 : i32
    return %c0_i32, %c0_i32_0 : i32, i32
  }
  func.func @transform_7(%arg0: i32, %arg1: i32) -> (i32, i32) {
    %c0_i32 = arith.constant 0 : i32
    %c0_i32_0 = arith.constant 0 : i32
    %c0_i32_1 = arith.constant 0 : i32
    return %c0_i32, %c0_i32_0 : i32, i32
  }
  func.func @transform_8(%arg0: i32, %arg1: i32) -> i32 {
    %c0_i32 = arith.constant 0 : i32
    %c0_i32_0 = arith.constant 0 : i32
    return %c0_i32 : i32
  }
  func.func @transform_9(%arg0: i32, %arg1: i32) -> (i32, i32, i32) {
    %c0_i32 = arith.constant 0 : i32
    %c0_i32_0 = arith.constant 0 : i32
    %c0_i32_1 = arith.constant 0 : i32
    return %arg0, %c0_i32, %c0_i32_0 : i32, i32, i32
  }
}

</mosaic_0001>

<llo_original>
// kernel: tpu_custom_call.1
$region0: #{tpu_custom_call.1}
  #allocation0 [shape = 'u32[]', space=smem, size = 0x4, offset = 0x4, fixed_abs, tag = 'smem constant byte address 0x4 - core index']
  #allocation1 [shape = 'u32[144,128]{1,0:T(1,128)}', space=vmem, size = 0x12000, scoped, tag = 'internal scratch']
  #allocation2 [shape = 'f32[16,128]{1,0:T(8,128)}', space=vmem, size = 0x2000, scoped, tag = 'scratch operand']
  #allocation3 [shape = 'f32[16,32]{1,0:T(8,128)}', space=vmem, size = 0x2000, scoped, tag = 'scratch operand']
  #allocation4 [shape = 'f32[1]{0:T(128)S(6)}', space=smem, size = 0x200, scoped, tag = 'scoped memory for tpu_custom_call.1']
  %s0 = inlined_call_operand.hbm [shape: f32[32,25088], index: 0, kind: input, shape index: {}]
  %s1 = inlined_call_operand.hbm [shape: bf16[25088,128], index: 1, kind: input, shape index: {}]
  %s2 = inlined_call_operand.hbm [shape: f32[1,128], index: 2, kind: input, shape index: {}]
  %s3 = inlined_call_operand.hbm [shape: f32[64,64], index: 3, kind: input, shape index: {}]
  %s4 = inlined_call_operand.hbm [shape: f32[1,64], index: 4, kind: input, shape index: {}]
  %s5 = inlined_call_operand.vmem [shape: f32[64,10], index: 5, kind: input, shape index: {}]
  %s6 = inlined_call_operand.hbm [shape: f32[1,10], index: 6, kind: input, shape index: {}]
  %s7 = inlined_call_operand.vmem [shape: f32[16,4], index: 7, kind: input, shape index: {}]
  %s8 = inlined_call_operand.<no memory space> [shape: f32[1], index: 8, kind: input, shape index: {}]
  %s9 = inlined_call_operand.hbm [shape: f32[2,2,16], index: 9, kind: output, shape index: {}]
  %s10 = sld [smem:[#allocation0]]
  $region101: #{tpu_custom_call.1} parent=0
    _
  %s12 = ssub.s32 1, %s10
  %s13 = scalar_select 0, %s12, %s10
  %14 = sst [smem:[#allocation4]] %s8
  $region1: #{tpu_custom_call.1} parent=0
    #allocation5 [shape = 'u8[802816]{0}', space=vmem, size = 0xc4000, scoped, tag = 'input window, operand 0']
    #allocation6 [shape = 's32[2]{0}', space=sflag, size = 0x8, scoped, tag = 'scoped memory for tpu_custom_call.1']
    #allocation7 [shape = 's32[2]{0}', space=sflag, size = 0x8, scoped, tag = 'scoped memory for tpu_custom_call.1']
    #allocation8 [shape = 'u8[6422528]{0}', space=vmem, size = 0x620000, scoped, tag = 'input window, operand 1, single buffered']
    #allocation9 [shape = 's32[1]{0}', space=sflag, size = 0x4, scoped, tag = 'scoped memory for tpu_custom_call.1']
    #allocation10 [shape = 'u8[512]{0}', space=vmem, size = 0x400, scoped, tag = 'input window, operand 2, single buffered']
    #allocation11 [shape = 'u8[32768]{0}', space=vmem, size = 0x8000, scoped, tag = 'input window, operand 3, single buffered']
    #allocation12 [shape = 's32[1]{0}', space=sflag, size = 0x4, scoped, tag = 'scoped memory for tpu_custom_call.1']
    #allocation13 [shape = 'u8[512]{0}', space=vmem, size = 0x400, scoped, tag = 'input window, operand 4, single buffered']
    #allocation14 [shape = 'u8[512]{0}', space=vmem, size = 0x400, scoped, tag = 'input window, operand 6, single buffered']
    #allocation15 [shape = 's32[1]{0}', space=sflag, size = 0x4, scoped, tag = 'scoped memory for tpu_custom_call.1']
    #allocation16 [shape = 'u8[2048]{0}', space=vmem, size = 0x800, scoped, tag = 'output window, operand 0']
    %15 = vsyncpa [#allocation6], 0
    %s16 = scalar_lea.sflag [#allocation6], 1
    %17 = vsyncpa %s16, 0
    %18 = vsyncpa [#allocation9], 0
    %19 = vsyncpa [#allocation12], 0
    %20 = vsyncpa [#allocation15], 0
    %21 = vsyncpa [#allocation7], 0
    %s22 = scalar_lea.sflag [#allocation7], 1
    %23 = vsyncpa %s22, 0
    loop: start=0, step=1, limit=10
    $region2: #{tpu_custom_call.1} parent=1 // loop_pre_header
      _
    $region3: #{tpu_custom_call.1} parent=1 // loop_header
      %s25 = sphi 0, %s29
      %p26 = scmp.ge.s32.totalorder %s25, 10
      %s32 = sphi 0, %s44
      %s33 = sphi 0, %s40
      %s34 = sphi 0, %s32
      %s35 = sphi 0, %s33
      %s36 = sphi 0, %s34
      %s37 = sphi 0, %s35
      %s49 = sphi 0, %s51
      %s52 = sphi 0, %s49
      %s53 = sphi 0, %s52
      %s69 = sphi 0, %s53
      %s73 = sphi 0, %s73
      %s75 = sphi 0, %s73
      %s76 = sphi 0, %s75
      %s90 = sphi 0, %s76
      %s94 = sphi 0, %s94
      %s96 = sphi 0, %s94
      %s97 = sphi 0, %s96
      %s111 = sphi 0, %s97
      %s115 = sphi 0, %s115
      %s117 = sphi 0, %s115
      %s118 = sphi 0, %s117
      %s132 = sphi 0, %s118
      %s136 = sphi 0, %s136
      %s138 = sphi 0, %s136
      %s139 = sphi 0, %s138
      %s153 = sphi 0, %s139
      %s157 = sphi 0, %s157
      %s159 = sphi 0, %s157
      %s160 = sphi 0, %s159
      %s174 = sphi 0, %s160
      %s178 = sphi 0, %s178
      %s180 = sphi 0, %s178
      %s181 = sphi 0, %s180
      %s195 = sphi 0, %s181
      %s199 = sphi 0, %s199
      %s201 = sphi 0, %s199
      %s202 = sphi 0, %s201
      %s216 = sphi 0, %s202
      %s220 = sphi 0, %s220
      %s222 = sphi 0, %s220
      %s223 = sphi 0, %s222
      %s237 = sphi 0, %s223
      %s243 = sphi 0, %s245
      %s246 = sphi 0, %s243
      %s247 = sphi 0, %s246
      %s263 = sphi 0, %s247
    $region4: #{tpu_custom_call.1} parent=1 // loop_header_branch
      %28 = sbr.rel (%p26) target = $region8
    $region5: #{tpu_custom_call.1} parent=1 // loop_body
      %s30 = ssub.s32 %s25, 1
      %s31 = ssub.s32 %s25, 2
      %s38 = sadd.s32 1, %s33
      %p39 = scmp.ge.s32.totalorder %s38, 4
      %s40 = scalar_select %p39, 0, %s38
      %s41 = sadd.s32 1, %s32
      %s42 = scalar_select %p39, %s41, %s32
      %p43 = scmp.ge.s32.totalorder %s42, 2
      %s44 = scalar_select %p43, 0, %s42
      %s45 = ssub.s32 %s32, %s44
      %s46 = ssub.s32 %s33, %s40
      %s47 = sor.u32 %s45, %s46
      %p48 = scmp.eq.s32.totalorder %s47, 0
      %s50 = sadd.s32 %s49, 1
      %s51 = scalar_select %p48, %s49, %s50
      %p54 = pneg %p48
      %p55 = scmp.eq.s32.totalorder %s25, 7
      %p56 = por %p54, %p55
      %p57 = scmp.ne.s32.totalorder %s49, %s52
      %p58 = scmp.eq.s32.totalorder %s25, 0
      %p59 = por %p57, %p58
      %p60 = scmp.ne.s32.totalorder %s49, %s52
      %p61 = scmp.eq.s32.totalorder %s30, 7
      %p62 = por %p60, %p61
      %p63 = scmp.ne.s32.totalorder %s52, %s53
      %p64 = scmp.eq.s32.totalorder %s30, 0
      %p65 = por %p63, %p64
      %p66 = scmp.ne.s32.totalorder %s52, %s53
      %p67 = scmp.eq.s32.totalorder %s31, 7
      %p68 = por %p66, %p67
      %p70 = scmp.ne.s32.totalorder %s53, %s69
      %p71 = scmp.eq.s32.totalorder %s31, 0
      %p72 = por %p70, %p71
      %s74 = sadd.s32 %s73, 1
      %p77 = scmp.eq.s32.totalorder %s25, 7
      %p78 = scmp.ne.s32.totalorder %s73, %s75
      %p79 = scmp.eq.s32.totalorder %s25, 0
      %p80 = por %p78, %p79
      %p81 = scmp.ne.s32.totalorder %s73, %s75
      %p82 = scmp.eq.s32.totalorder %s30, 7
      %p83 = por %p81, %p82
      %p84 = scmp.ne.s32.totalorder %s75, %s76
      %p85 = scmp.eq.s32.totalorder %s30, 0
      %p86 = por %p84, %p85
      %p87 = scmp.ne.s32.totalorder %s75, %s76
      %p88 = scmp.eq.s32.totalorder %s31, 7
      %p89 = por %p87, %p88
      %p91 = scmp.ne.s32.totalorder %s76, %s90
      %p92 = scmp.eq.s32.totalorder %s31, 0
      %p93 = por %p91, %p92
      %s95 = sadd.s32 %s94, 1
      %p98 = scmp.eq.s32.totalorder %s25, 7
      %p99 = scmp.ne.s32.totalorder %s94, %s96
      %p100 = scmp.eq.s32.totalorder %s25, 0
      %p101 = por %p99, %p100
      %p102 = scmp.ne.s32.totalorder %s94, %s96
      %p103 = scmp.eq.s32.totalorder %s30, 7
      %p104 = por %p102, %p103
      %p105 = scmp.ne.s32.totalorder %s96, %s97
      %p106 = scmp.eq.s32.totalorder %s30, 0
      %p107 = por %p105, %p106
      %p108 = scmp.ne.s32.totalorder %s96, %s97
      %p109 = scmp.eq.s32.totalorder %s31, 7
      %p110 = por %p108, %p109
      %p112 = scmp.ne.s32.totalorder %s97, %s111
      %p113 = scmp.eq.s32.totalorder %s31, 0
      %p114 = por %p112, %p113
      %s116 = sadd.s32 %s115, 1
      %p119 = scmp.eq.s32.totalorder %s25, 7
      %p120 = scmp.ne.s32.totalorder %s115, %s117
      %p121 = scmp.eq.s32.totalorder %s25, 0
      %p122 = por %p120, %p121
      %p123 = scmp.ne.s32.totalorder %s115, %s117
      %p124 = scmp.eq.s32.totalorder %s30, 7
      %p125 = por %p123, %p124
      %p126 = scmp.ne.s32.totalorder %s117, %s118
      %p127 = scmp.eq.s32.totalorder %s30, 0
      %p128 = por %p126, %p127
      %p129 = scmp.ne.s32.totalorder %s117, %s118
      %p130 = scmp.eq.s32.totalorder %s31, 7
      %p131 = por %p129, %p130
      %p133 = scmp.ne.s32.totalorder %s118, %s132
      %p134 = scmp.eq.s32.totalorder %s31, 0
      %p135 = por %p133, %p134
      %s137 = sadd.s32 %s136, 1
      %p140 = scmp.eq.s32.totalorder %s25, 7
      %p141 = scmp.ne.s32.totalorder %s136, %s138
      %p142 = scmp.eq.s32.totalorder %s25, 0
      %p143 = por %p141, %p142
      %p144 = scmp.ne.s32.totalorder %s136, %s138
      %p145 = scmp.eq.s32.totalorder %s30, 7
      %p146 = por %p144, %p145
      %p147 = scmp.ne.s32.totalorder %s138, %s139
      %p148 = scmp.eq.s32.totalorder %s30, 0
      %p149 = por %p147, %p148
      %p150 = scmp.ne.s32.totalorder %s138, %s139
      %p151 = scmp.eq.s32.totalorder %s31, 7
      %p152 = por %p150, %p151
      %p154 = scmp.ne.s32.totalorder %s139, %s153
      %p155 = scmp.eq.s32.totalorder %s31, 0
      %p156 = por %p154, %p155
      %s158 = sadd.s32 %s157, 1
      %p161 = scmp.eq.s32.totalorder %s25, 7
      %p162 = scmp.ne.s32.totalorder %s157, %s159
      %p163 = scmp.eq.s32.totalorder %s25, 0
      %p164 = por %p162, %p163
      %p165 = scmp.ne.s32.totalorder %s157, %s159
      %p166 = scmp.eq.s32.totalorder %s30, 7
      %p167 = por %p165, %p166
      %p168 = scmp.ne.s32.totalorder %s159, %s160
      %p169 = scmp.eq.s32.totalorder %s30, 0
      %p170 = por %p168, %p169
      %p171 = scmp.ne.s32.totalorder %s159, %s160
      %p172 = scmp.eq.s32.totalorder %s31, 7
      %p173 = por %p171, %p172
      %p175 = scmp.ne.s32.totalorder %s160, %s174
      %p176 = scmp.eq.s32.totalorder %s31, 0
      %p177 = por %p175, %p176
      %s179 = sadd.s32 %s178, 1
      %p182 = scmp.eq.s32.totalorder %s25, 7
      %p183 = scmp.ne.s32.totalorder %s178, %s180
      %p184 = scmp.eq.s32.totalorder %s25, 0
      %p185 = por %p183, %p184
      %p186 = scmp.ne.s32.totalorder %s178, %s180
      %p187 = scmp.eq.s32.totalorder %s30, 7
      %p188 = por %p186, %p187
      %p189 = scmp.ne.s32.totalorder %s180, %s181
      %p190 = scmp.eq.s32.totalorder %s30, 0
      %p191 = por %p189, %p190
      %p192 = scmp.ne.s32.totalorder %s180, %s181
      %p193 = scmp.eq.s32.totalorder %s31, 7
      %p194 = por %p192, %p193
      %p196 = scmp.ne.s32.totalorder %s181, %s195
      %p197 = scmp.eq.s32.totalorder %s31, 0
      %p198 = por %p196, %p197
      %s200 = sadd.s32 %s199, 1
      %p203 = scmp.eq.s32.totalorder %s25, 7
      %p204 = scmp.ne.s32.totalorder %s199, %s201
      %p205 = scmp.eq.s32.totalorder %s25, 0
      %p206 = por %p204, %p205
      %p207 = scmp.ne.s32.totalorder %s199, %s201
      %p208 = scmp.eq.s32.totalorder %s30, 7
      %p209 = por %p207, %p208
      %p210 = scmp.ne.s32.totalorder %s201, %s202
      %p211 = scmp.eq.s32.totalorder %s30, 0
      %p212 = por %p210, %p211
      %p213 = scmp.ne.s32.totalorder %s201, %s202
      %p214 = scmp.eq.s32.totalorder %s31, 7
      %p215 = por %p213, %p214
      %p217 = scmp.ne.s32.totalorder %s202, %s216
      %p218 = scmp.eq.s32.totalorder %s31, 0
      %p219 = por %p217, %p218
      %s221 = sadd.s32 %s220, 1
      %p224 = scmp.eq.s32.totalorder %s25, 7
      %p225 = scmp.ne.s32.totalorder %s220, %s222
      %p226 = scmp.eq.s32.totalorder %s25, 0
      %p227 = por %p225, %p226
      %p228 = scmp.ne.s32.totalorder %s220, %s222
      %p229 = scmp.eq.s32.totalorder %s30, 7
      %p230 = por %p228, %p229
      %p231 = scmp.ne.s32.totalorder %s222, %s223
      %p232 = scmp.eq.s32.totalorder %s30, 0
      %p233 = por %p231, %p232
      %p234 = scmp.ne.s32.totalorder %s222, %s223
      %p235 = scmp.eq.s32.totalorder %s31, 7
      %p236 = por %p234, %p235
      %p238 = scmp.ne.s32.totalorder %s223, %s237
      %p239 = scmp.eq.s32.totalorder %s31, 0
      %p240 = por %p238, %p239
      %s241 = ssub.s32 %s32, %s44
      %p242 = scmp.eq.s32.totalorder %s241, 0
      %s244 = sadd.s32 %s243, 1
      %s245 = scalar_select %p242, %s243, %s244
      %p248 = pneg %p242
      %p249 = scmp.eq.s32.totalorder %s25, 7
      %p250 = por %p248, %p249
      %p251 = scmp.ne.s32.totalorder %s243, %s246
      %p252 = scmp.eq.s32.totalorder %s25, 0
      %p253 = por %p251, %p252
      %p254 = scmp.ne.s32.totalorder %s243, %s246
      %p255 = scmp.eq.s32.totalorder %s30, 7
      %p256 = por %p254, %p255
      %p257 = scmp.ne.s32.totalorder %s246, %s247
      %p258 = scmp.eq.s32.totalorder %s30, 0
      %p259 = por %p257, %p258
      %p260 = scmp.ne.s32.totalorder %s246, %s247
      %p261 = scmp.eq.s32.totalorder %s31, 7
      %p262 = por %p260, %p261
      %p264 = scmp.ne.s32.totalorder %s247, %s263
      %p265 = scmp.eq.s32.totalorder %s31, 0
      %p266 = por %p264, %p265
      %p267 = scmp.le.s32.totalorder 1, %s25
      %p268 = scmp.lt.s32.totalorder %s25, 9
      %p269 = pnand %p267, %p268
      %p270 = pneg %p269
      // Predicated region
      $region9: #{tpu_custom_call.1} parent=5 // pred_check
        _
      $region10: #{tpu_custom_call.1} parent=5 // pred_check_branch
        %272 = sbr.rel (%p269) target = $region12
      $region11: #{tpu_custom_call.1} parent=5 // pred_region
        %s273 = ssub.s32 %s25, 1
        // Predicated region
        $region13: #{tpu_custom_call.1} parent=11 // pred_check
          %p274 = pneg %p86
        $region14: #{tpu_custom_call.1} parent=11 // pred_check_branch
          %276 = sbr.rel (%p274) target = $region16
        $region15: #{tpu_custom_call.1} parent=11 // pred_region
          %s278 = ssub.s32 200704, 200704
          %279 = vsyncadd [#allocation9], %s278
          %s280 = sshll.u32 [#allocation8], 4
          %s281 = int_to_ptr.vmem [resolvable:$true] %s280
          %286 = dma.hbm_to_vmem [thread:$0]  %s1, 200704, %s281, [#allocation9], 64, 64, 4
        $region16: #{tpu_custom_call.1} parent=11 // pred_fallthru
          _
        // Predicated region
        $region17: #{tpu_custom_call.1} parent=11 // pred_check
          %p287 = pneg %p107
        $region18: #{tpu_custom_call.1} parent=11 // pred_check_branch
          %289 = sbr.rel (%p287) target = $region20
        $region19: #{tpu_custom_call.1} parent=11 // pred_region
          %s291 = ssub.s32 16, 16
          %292 = vsyncadd [#allocation9], %s291
          %s294 = sshll.u32 [#allocation10], 4
          %s295 = int_to_ptr.vmem [resolvable:$true] %s294
          %297 = dma.hbm_to_vmem [thread:$0]  %s2, 16, %s295, [#allocation9]
        $region20: #{tpu_custom_call.1} parent=11 // pred_fallthru
          _
        // Predicated region
        $region21: #{tpu_custom_call.1} parent=11 // pred_check
          %p298 = pneg %p128
        $region22: #{tpu_custom_call.1} parent=11 // pred_check_branch
          %300 = sbr.rel (%p298) target = $region24
        $region23: #{tpu_custom_call.1} parent=11 // pred_region
          %s302 = ssub.s32 1024, 1024
          %303 = vsyncadd [#allocation12], %s302
          %s304 = sshll.u32 [#allocation11], 4
          %s305 = int_to_ptr.vmem [resolvable:$true] %s304
          %310 = dma.hbm_to_vmem [thread:$0]  %s3, 1024, %s305, [#allocation12], 128, 128, 8
        $region24: #{tpu_custom_call.1} parent=11 // pred_fallthru
          _
        // Predicated region
        $region25: #{tpu_custom_call.1} parent=11 // pred_check
          %p311 = pneg %p149
        $region26: #{tpu_custom_call.1} parent=11 // pred_check_branch
          %313 = sbr.rel (%p311) target = $region28
        $region27: #{tpu_custom_call.1} parent=11 // pred_region
          %s315 = ssub.s32 16, 16
          %316 = vsyncadd [#allocation12], %s315
          %s318 = sshll.u32 [#allocation13], 4
          %s319 = int_to_ptr.vmem [resolvable:$true] %s318
          %321 = dma.hbm_to_vmem [thread:$0]  %s4, 16, %s319, [#allocation12]
        $region28: #{tpu_custom_call.1} parent=11 // pred_fallthru
          _
        // Predicated region
        $region29: #{tpu_custom_call.1} parent=11 // pred_check
          %p322 = pneg %p170
        $region30: #{tpu_custom_call.1} parent=11 // pred_check_branch
          %324 = sbr.rel (%p322) target = $region32
        $region31: #{tpu_custom_call.1} parent=11 // pred_region
          _
        $region32: #{tpu_custom_call.1} parent=11 // pred_fallthru
          _
        // Predicated region
        $region33: #{tpu_custom_call.1} parent=11 // pred_check
          %p325 = pneg %p191
        $region34: #{tpu_custom_call.1} parent=11 // pred_check_branch
          %327 = sbr.rel (%p325) target = $region36
        $region35: #{tpu_custom_call.1} parent=11 // pred_region
          %s329 = ssub.s32 16, 16
          %330 = vsyncadd [#allocation15], %s329
          %s332 = sshll.u32 [#allocation14], 4
          %s333 = int_to_ptr.vmem [resolvable:$true] %s332
          %335 = dma.hbm_to_vmem [thread:$0]  %s6, 16, %s333, [#allocation15]
        $region36: #{tpu_custom_call.1} parent=11 // pred_fallthru
          _
        // Predicated region
        $region37: #{tpu_custom_call.1} parent=11 // pred_check
          %p336 = pneg %p212
        $region38: #{tpu_custom_call.1} parent=11 // pred_check_branch
          %338 = sbr.rel (%p336) target = $region40
        $region39: #{tpu_custom_call.1} parent=11 // pred_region
          _
        $region40: #{tpu_custom_call.1} parent=11 // pred_fallthru
          _
        // Predicated region
        $region41: #{tpu_custom_call.1} parent=11 // pred_check
          %p339 = pneg %p233
        $region42: #{tpu_custom_call.1} parent=11 // pred_check_branch
          %341 = sbr.rel (%p339) target = $region44
        $region43: #{tpu_custom_call.1} parent=11 // pred_region
          _
        $region44: #{tpu_custom_call.1} parent=11 // pred_fallthru
          _
      $region12: #{tpu_custom_call.1} parent=5 // pred_fallthru
        _
      %p342 = scmp.lt.s32.totalorder %s25, 8
      // Predicated region
      $region45: #{tpu_custom_call.1} parent=5 // pred_check
        %p343 = pneg %p342
      $region46: #{tpu_custom_call.1} parent=5 // pred_check_branch
        %345 = sbr.rel (%p343) target = $region48
      $region47: #{tpu_custom_call.1} parent=5 // pred_region
        // Predicated region
        $region49: #{tpu_custom_call.1} parent=47 // pred_check
          %p346 = pneg %p59
        $region50: #{tpu_custom_call.1} parent=47 // pred_check_branch
          %348 = sbr.rel (%p346) target = $region52
        $region51: #{tpu_custom_call.1} parent=47 // pred_region
          %s349 = sand.u32 %s49, 1
          %s350 = scalar_lea.sflag [#allocation6], %s349
          %s351 = sand.u32 %s49, 1
          %s352 = smul.addr %s351, 784
          %s353 = scalar_lea.vmem [#allocation5], %s352
          %s354 = smul.u32 2, %s32
          %s355 = smul.u32 49, %s33
          %s357 = ssub.s32 12544, 12544
          %358 = vsyncadd %s350, %s357
          %s359 = smul.addr %s354, 196
          %s360 = sadd.s32 %s355, %s359
          %s361 = smul.addr %s360, 128
          %s362 = scalar_lea.hbm %s0, %s361
          %s363 = sshll.u32 %s353, 4
          %s364 = int_to_ptr.vmem [resolvable:$true] %s363
          %369 = dma.hbm_to_vmem [thread:$0]  %s362, 12544, %s364, %s350, 25088, 6272, 392
        $region52: #{tpu_custom_call.1} parent=47 // pred_fallthru
          _
      $region48: #{tpu_custom_call.1} parent=5 // pred_fallthru
        _
      %p370 = scmp.le.s32.totalorder 1, %s25
      %p371 = scmp.lt.s32.totalorder %s25, 9
      %p372 = pnand %p370, %p371
      %p373 = pneg %p372
      // Predicated region
      $region53: #{tpu_custom_call.1} parent=5 // pred_check
        _
      $region54: #{tpu_custom_call.1} parent=5 // pred_check_branch
        %375 = sbr.rel (%p372) target = $region56
      $region55: #{tpu_custom_call.1} parent=5 // pred_region
        %s376 = ssub.s32 %s25, 1
        %s377 = sand.u32 %s52, 1
        %s378 = scalar_lea.sflag [#allocation6], %s377
        %s379 = sand.u32 %s52, 1
        %s380 = smul.addr %s379, 784
        %s381 = scalar_lea.vmem [#allocation5], %s380
        // Predicated region
        $region57: #{tpu_custom_call.1} parent=55 // pred_check
          %p382 = pneg %p65
        $region58: #{tpu_custom_call.1} parent=55 // pred_check_branch
          %384 = sbr.rel (%p382) target = $region60
        $region59: #{tpu_custom_call.1} parent=55 // pred_region
          %385 = dma.done %s378, 12544
        $region60: #{tpu_custom_call.1} parent=55 // pred_fallthru
          _
        // Predicated region
        $region61: #{tpu_custom_call.1} parent=55 // pred_check
          %p386 = pneg %p86
        $region62: #{tpu_custom_call.1} parent=55 // pred_check_branch
          %388 = sbr.rel (%p386) target = $region64
        $region63: #{tpu_custom_call.1} parent=55 // pred_region
          %389 = dma.done [#allocation9], 200704
        $region64: #{tpu_custom_call.1} parent=55 // pred_fallthru
          _
        // Predicated region
        $region65: #{tpu_custom_call.1} parent=55 // pred_check
          %p390 = pneg %p107
        $region66: #{tpu_custom_call.1} parent=55 // pred_check_branch
          %392 = sbr.rel (%p390) target = $region68
        $region67: #{tpu_custom_call.1} parent=55 // pred_region
          %393 = dma.done [#allocation9], 16
        $region68: #{tpu_custom_call.1} parent=55 // pred_fallthru
          _
        // Predicated region
        $region69: #{tpu_custom_call.1} parent=55 // pred_check
          %p394 = pneg %p128
        $region70: #{tpu_custom_call.1} parent=55 // pred_check_branch
          %396 = sbr.rel (%p394) target = $region72
        $region71: #{tpu_custom_call.1} parent=55 // pred_region
          %397 = dma.done [#allocation12], 1024
        $region72: #{tpu_custom_call.1} parent=55 // pred_fallthru
          _
        // Predicated region
        $region73: #{tpu_custom_call.1} parent=55 // pred_check
          %p398 = pneg %p149
        $region74: #{tpu_custom_call.1} parent=55 // pred_check_branch
          %400 = sbr.rel (%p398) target = $region76
        $region75: #{tpu_custom_call.1} parent=55 // pred_region
          %401 = dma.done [#allocation12], 16
        $region76: #{tpu_custom_call.1} parent=55 // pred_fallthru
          _
        // Predicated region
        $region77: #{tpu_custom_call.1} parent=55 // pred_check
          %p402 = pneg %p191
        $region78: #{tpu_custom_call.1} parent=55 // pred_check_branch
          %404 = sbr.rel (%p402) target = $region80
        $region79: #{tpu_custom_call.1} parent=55 // pred_region
          %405 = dma.done [#allocation15], 16
        $region80: #{tpu_custom_call.1} parent=55 // pred_fallthru
          _
        %s406 = sand.u32 %s52, 1
        %s407 = scalar_lea.sflag [#allocation6], %s406
        %s408 = sand.u32 %s52, 1
        %s409 = smul.addr %s408, 784
        %s410 = scalar_lea.vmem [#allocation5], %s409
        %p411 = pneg %p65
        %p412 = pneg %p62
        %p413 = pneg %p86
        %p414 = pneg %p83
        %p415 = pneg %p107
        %p416 = pneg %p104
        %p417 = pneg %p128
        %p418 = pneg %p125
        %p419 = pneg %p149
        %p420 = pneg %p146
        %p421 = pneg %p170
        %p422 = pneg %p167
        %p423 = pneg %p191
        %p424 = pneg %p188
        %p425 = pneg %p212
        %p426 = pneg %p209
        %p427 = pneg %p233
        %p428 = pneg %p230
        %p429 = pneg %p259
        %p430 = pneg %p256
        %s431 = sand.u32 %s246, 1
        %s432 = scalar_lea.sflag [#allocation7], %s431
        %s433 = sand.u32 %s246, 1
        %s434 = smul.addr %s433, 2
        %s435 = scalar_lea.vmem [#allocation16], %s434
        %s436 = smul.u32 2, %s34
        %s437 = smul.u32 49, %s35
        %p439 = scmp.eq.s32.totalorder %s35, 0
        // Predicated region
        $region81: #{tpu_custom_call.1} parent=55 // pred_check
          %p440 = pneg %p439
        $region82: #{tpu_custom_call.1} parent=55 // pred_check_branch
          %442 = sbr.rel (%p440) target = $region84
        $region83: #{tpu_custom_call.1} parent=55 // pred_region
          %443 = vst [vmem:[#allocation2] sm:$0xff] 0.0
          %444 = vst [vmem:[#allocation2 + $0x8] sm:$0xff] 0.0
        $region84: #{tpu_custom_call.1} parent=55 // pred_fallthru
          _
        %v445 = vld [vmem:[%s381] sm:$0xff]
        %v446 = vld [vmem:[%s381 + $0x8] sm:$0xff]
        %v447 = vld [vmem:[%s381 + $0x10] sm:$0xff]
        %v448 = vld [vmem:[%s381 + $0x18] sm:$0xff]
        %v449 = vld [vmem:[%s381 + $0x20] sm:$0xff]
        %v450 = vld [vmem:[%s381 + $0x28] sm:$0xff]
        %v451 = vld [vmem:[%s381 + $0x30] sm:$0xff]
        %v452 = vld [vmem:[%s381 + $0x38] sm:$0xff]
        %v453 = vld [vmem:[%s381 + $0x40] sm:$0xff]
        %v454 = vld [vmem:[%s381 + $0x48] sm:$0xff]
        %v455 = vld [vmem:[%s381 + $0x50] sm:$0xff]
        %v456 = vld [vmem:[%s381 + $0x58] sm:$0xff]
        %v457 = vld [vmem:[%s381 + $0x60] sm:$0xff]
        %v458 = vld [vmem:[%s381 + $0x68] sm:$0xff]
        %v459 = vld [vmem:[%s381 + $0x70] sm:$0xff]
        %v460 = vld [vmem:[%s381 + $0x78] sm:$0xff]
        %v461 = vld [vmem:[%s381 + $0x80] sm:$0xff]
        %v462 = vld [vmem:[%s381 + $0x88] sm:$0xff]
        %v463 = vld [vmem:[%s381 + $0x90] sm:$0xff]
        %v464 = vld [vmem:[%s381 + $0x98] sm:$0xff]
        %v465 = vld [vmem:[%s381 + $0xa0] sm:$0xff]
        %v466 = vld [vmem:[%s381 + $0xa8] sm:$0xff]
        %v467 = vld [vmem:[%s381 + $0xb0] sm:$0xff]
        %v468 = vld [vmem:[%s381 + $0xb8] sm:$0xff]
        %v469 = vld [vmem:[%s381 + $0xc0] sm:$0xff]
        %v470 = vld [vmem:[%s381 + $0xc8] sm:$0xff]
        %v471 = vld [vmem:[%s381 + $0xd0] sm:$0xff]
        %v472 = vld [vmem:[%s381 + $0xd8] sm:$0xff]
        %v473 = vld [vmem:[%s381 + $0xe0] sm:$0xff]
        %v474 = vld [vmem:[%s381 + $0xe8] sm:$0xff]
        %v475 = vld [vmem:[%s381 + $0xf0] sm:$0xff]
        %v476 = vld [vmem:[%s381 + $0xf8] sm:$0xff]
        %v477 = vld [vmem:[%s381 + $0x100] sm:$0xff]
        %v478 = vld [vmem:[%s381 + $0x108] sm:$0xff]
        %v479 = vld [vmem:[%s381 + $0x110] sm:$0xff]
        %v480 = vld [vmem:[%s381 + $0x118] sm:$0xff]
        %v481 = vld [vmem:[%s381 + $0x120] sm:$0xff]
        %v482 = vld [vmem:[%s381 + $0x128] sm:$0xff]
        %v483 = vld [vmem:[%s381 + $0x130] sm:$0xff]
        %v484 = vld [vmem:[%s381 + $0x138] sm:$0xff]
        %v485 = vld [vmem:[%s381 + $0x140] sm:$0xff]
        %v486 = vld [vmem:[%s381 + $0x148] sm:$0xff]
        %v487 = vld [vmem:[%s381 + $0x150] sm:$0xff]
        %v488 = vld [vmem:[%s381 + $0x158] sm:$0xff]
        %v489 = vld [vmem:[%s381 + $0x160] sm:$0xff]
        %v490 = vld [vmem:[%s381 + $0x168] sm:$0xff]
        %v491 = vld [vmem:[%s381 + $0x170] sm:$0xff]
        %v492 = vld [vmem:[%s381 + $0x178] sm:$0xff]
        %v493 = vld [vmem:[%s381 + $0x180] sm:$0xff]
        %v494 = vld [vmem:[%s381 + $0x188] sm:$0xff]
        %v495 = vld [vmem:[%s381 + $0x190] sm:$0xff]
        %v496 = vld [vmem:[%s381 + $0x198] sm:$0xff]
        %v497 = vld [vmem:[%s381 + $0x1a0] sm:$0xff]
        %v498 = vld [vmem:[%s381 + $0x1a8] sm:$0xff]
        %v499 = vld [vmem:[%s381 + $0x1b0] sm:$0xff]
        %v500 = vld [vmem:[%s381 + $0x1b8] sm:$0xff]
        %v501 = vld [vmem:[%s381 + $0x1c0] sm:$0xff]
        %v502 = vld [vmem:[%s381 + $0x1c8] sm:$0xff]
        %v503 = vld [vmem:[%s381 + $0x1d0] sm:$0xff]
        %v504 = vld [vmem:[%s381 + $0x1d8] sm:$0xff]
        %v505 = vld [vmem:[%s381 + $0x1e0] sm:$0xff]
        %v506 = vld [vmem:[%s381 + $0x1e8] sm:$0xff]
        %v507 = vld [vmem:[%s381 + $0x1f0] sm:$0xff]
        %v508 = vld [vmem:[%s381 + $0x1f8] sm:$0xff]
        %v509 = vld [vmem:[%s381 + $0x200] sm:$0xff]
        %v510 = vld [vmem:[%s381 + $0x208] sm:$0xff]
        %v511 = vld [vmem:[%s381 + $0x210] sm:$0xff]
        %v512 = vld [vmem:[%s381 + $0x218] sm:$0xff]
        %v513 = vld [vmem:[%s381 + $0x220] sm:$0xff]
        %v514 = vld [vmem:[%s381 + $0x228] sm:$0xff]
        %v515 = vld [vmem:[%s381 + $0x230] sm:$0xff]
        %v516 = vld [vmem:[%s381 + $0x238] sm:$0xff]
        %v517 = vld [vmem:[%s381 + $0x240] sm:$0xff]
        %v518 = vld [vmem:[%s381 + $0x248] sm:$0xff]
        %v519 = vld [vmem:[%s381 + $0x250] sm:$0xff]
        %v520 = vld [vmem:[%s381 + $0x258] sm:$0xff]
        %v521 = vld [vmem:[%s381 + $0x260] sm:$0xff]
        %v522 = vld [vmem:[%s381 + $0x268] sm:$0xff]
        %v523 = vld [vmem:[%s381 + $0x270] sm:$0xff]
        %v524 = vld [vmem:[%s381 + $0x278] sm:$0xff]
        %v525 = vld [vmem:[%s381 + $0x280] sm:$0xff]
        %v526 = vld [vmem:[%s381 + $0x288] sm:$0xff]
        %v527 = vld [vmem:[%s381 + $0x290] sm:$0xff]
        %v528 = vld [vmem:[%s381 + $0x298] sm:$0xff]
        %v529 = vld [vmem:[%s381 + $0x2a0] sm:$0xff]
        %v530 = vld [vmem:[%s381 + $0x2a8] sm:$0xff]
        %v531 = vld [vmem:[%s381 + $0x2b0] sm:$0xff]
        %v532 = vld [vmem:[%s381 + $0x2b8] sm:$0xff]
        %v533 = vld [vmem:[%s381 + $0x2c0] sm:$0xff]
        %v534 = vld [vmem:[%s381 + $0x2c8] sm:$0xff]
        %v535 = vld [vmem:[%s381 + $0x2d0] sm:$0xff]
        %v536 = vld [vmem:[%s381 + $0x2d8] sm:$0xff]
        %v537 = vld [vmem:[%s381 + $0x2e0] sm:$0xff]
        %v538 = vld [vmem:[%s381 + $0x2e8] sm:$0xff]
        %v539 = vld [vmem:[%s381 + $0x2f0] sm:$0xff]
        %v540 = vld [vmem:[%s381 + $0x2f8] sm:$0xff]
        %v541 = vld [vmem:[%s381 + $0x300] sm:$0xff]
        %v542 = vld [vmem:[%s381 + $0x308] sm:$0xff]
        %v543 = vpack.c.bf16 %v494, %v445
        %v544 = vpack.c.bf16 %v495, %v446
        %v545 = vpack.c.bf16 %v496, %v447
        %v546 = vpack.c.bf16 %v497, %v448
        %v547 = vpack.c.bf16 %v498, %v449
        %v548 = vpack.c.bf16 %v499, %v450
        %v549 = vpack.c.bf16 %v500, %v451
        %v550 = vpack.c.bf16 %v501, %v452
        %v551 = vpack.c.bf16 %v502, %v453
        %v552 = vpack.c.bf16 %v503, %v454
        %v553 = vpack.c.bf16 %v504, %v455
        %v554 = vpack.c.bf16 %v505, %v456
        %v555 = vpack.c.bf16 %v506, %v457
        %v556 = vpack.c.bf16 %v507, %v458
        %v557 = vpack.c.bf16 %v508, %v459
        %v558 = vpack.c.bf16 %v509, %v460
        %v559 = vpack.c.bf16 %v510, %v461
        %v560 = vpack.c.bf16 %v511, %v462
        %v561 = vpack.c.bf16 %v512, %v463
        %v562 = vpack.c.bf16 %v513, %v464
        %v563 = vpack.c.bf16 %v514, %v465
        %v564 = vpack.c.bf16 %v515, %v466
        %v565 = vpack.c.bf16 %v516, %v467
        %v566 = vpack.c.bf16 %v517, %v468
        %v567 = vpack.c.bf16 %v518, %v469
        %v568 = vpack.c.bf16 %v519, %v470
        %v569 = vpack.c.bf16 %v520, %v471
        %v570 = vpack.c.bf16 %v521, %v472
        %v571 = vpack.c.bf16 %v522, %v473
        %v572 = vpack.c.bf16 %v523, %v474
        %v573 = vpack.c.bf16 %v524, %v475
        %v574 = vpack.c.bf16 %v525, %v476
        %v575 = vpack.c.bf16 %v526, %v477
        %v576 = vpack.c.bf16 %v527, %v478
        %v577 = vpack.c.bf16 %v528, %v479
        %v578 = vpack.c.bf16 %v529, %v480
        %v579 = vpack.c.bf16 %v530, %v481
        %v580 = vpack.c.bf16 %v531, %v482
        %v581 = vpack.c.bf16 %v532, %v483
        %v582 = vpack.c.bf16 %v533, %v484
        %v583 = vpack.c.bf16 %v534, %v485
        %v584 = vpack.c.bf16 %v535, %v486
        %v585 = vpack.c.bf16 %v536, %v487
        %v586 = vpack.c.bf16 %v537, %v488
        %v587 = vpack.c.bf16 %v538, %v489
        %v588 = vpack.c.bf16 %v539, %v490
        %v589 = vpack.c.bf16 %v540, %v491
        %v590 = vpack.c.bf16 %v541, %v492
        %v591 = vpack.c.bf16 %v542, %v493
        %s592 = smul.u32 %s35, 6272
        %s593 = sshra.s32 %s592, 3
        %s594 = sand.u32 %s592, 7
        %s595 = smul.addr %s593, 4
        %s596 = scalar_lea.vmem [#allocation8], %s595
        %v597 = vld [vmem:[%s596] sm:$0xf]
        %v598 = vld [vmem:[%s596 + $0x4] sm:$0xf]
        %v599 = vld [vmem:[%s596 + $0x8] sm:$0xf]
        %v600 = vld [vmem:[%s596 + $0xc] sm:$0xf]
        %v601 = vld [vmem:[%s596 + $0x10] sm:$0xf]
        %v602 = vld [vmem:[%s596 + $0x14] sm:$0xf]
        %v603 = vld [vmem:[%s596 + $0x18] sm:$0xf]
        %v604 = vld [vmem:[%s596 + $0x1c] sm:$0xf]
        %v605 = vld [vmem:[%s596 + $0x20] sm:$0xf]
        %v606 = vld [vmem:[%s596 + $0x24] sm:$0xf]
        %v607 = vld [vmem:[%s596 + $0x28] sm:$0xf]
        %v608 = vld [vmem:[%s596 + $0x2c] sm:$0xf]
        %v609 = vld [vmem:[%s596 + $0x30] sm:$0xf]
        %v610 = vld [vmem:[%s596 + $0x34] sm:$0xf]
        %v611 = vld [vmem:[%s596 + $0x38] sm:$0xf]
        %v612 = vld [vmem:[%s596 + $0x3c] sm:$0xf]
        %v613 = vld [vmem:[%s596 + $0x40] sm:$0xf]
        %v614 = vld [vmem:[%s596 + $0x44] sm:$0xf]
        %v615 = vld [vmem:[%s596 + $0x48] sm:$0xf]
        %v616 = vld [vmem:[%s596 + $0x4c] sm:$0xf]
        %v617 = vld [vmem:[%s596 + $0x50] sm:$0xf]
        %v618 = vld [vmem:[%s596 + $0x54] sm:$0xf]
        %v619 = vld [vmem:[%s596 + $0x58] sm:$0xf]
        %v620 = vld [vmem:[%s596 + $0x5c] sm:$0xf]
        %v621 = vld [vmem:[%s596 + $0x60] sm:$0xf]
        %v622 = vld [vmem:[%s596 + $0x64] sm:$0xf]
        %v623 = vld [vmem:[%s596 + $0x68] sm:$0xf]
        %v624 = vld [vmem:[%s596 + $0x6c] sm:$0xf]
        %v625 = vld [vmem:[%s596 + $0x70] sm:$0xf]
        %v626 = vld [vmem:[%s596 + $0x74] sm:$0xf]
        %v627 = vld [vmem:[%s596 + $0x78] sm:$0xf]
        %v628 = vld [vmem:[%s596 + $0x7c] sm:$0xf]
        %v629 = vld [vmem:[%s596 + $0x80] sm:$0xf]
        %v630 = vld [vmem:[%s596 + $0x84] sm:$0xf]
        %v631 = vld [vmem:[%s596 + $0x88] sm:$0xf]
        %v632 = vld [vmem:[%s596 + $0x8c] sm:$0xf]
        %v633 = vld [vmem:[%s596 + $0x90] sm:$0xf]
        %v634 = vld [vmem:[%s596 + $0x94] sm:$0xf]
        %v635 = vld [vmem:[%s596 + $0x98] sm:$0xf]
        %v636 = vld [vmem:[%s596 + $0x9c] sm:$0xf]
        %v637 = vld [vmem:[%s596 + $0xa0] sm:$0xf]
        %v638 = vld [vmem:[%s596 + $0xa4] sm:$0xf]
        %v639 = vld [vmem:[%s596 + $0xa8] sm:$0xf]
        %v640 = vld [vmem:[%s596 + $0xac] sm:$0xf]
        %v641 = vld [vmem:[%s596 + $0xb0] sm:$0xf]
        %v642 = vld [vmem:[%s596 + $0xb4] sm:$0xf]
        %v643 = vld [vmem:[%s596 + $0xb8] sm:$0xf]
        %v644 = vld [vmem:[%s596 + $0xbc] sm:$0xf]
        %v645 = vld [vmem:[%s596 + $0xc0] sm:$0xf]
        %v646 = vld [vmem:[%s596 + $0xc4] sm:$0xf]
        %v647 = vld [vmem:[%s596 + $0xc8] sm:$0xf]
        %v648 = vld [vmem:[%s596 + $0xcc] sm:$0xf]
        %v649 = vld [vmem:[%s596 + $0xd0] sm:$0xf]
        %v650 = vld [vmem:[%s596 + $0xd4] sm:$0xf]
        %v651 = vld [vmem:[%s596 + $0xd8] sm:$0xf]
        %v652 = vld [vmem:[%s596 + $0xdc] sm:$0xf]
        %v653 = vld [vmem:[%s596 + $0xe0] sm:$0xf]
        %v654 = vld [vmem:[%s596 + $0xe4] sm:$0xf]
        %v655 = vld [vmem:[%s596 + $0xe8] sm:$0xf]
        %v656 = vld [vmem:[%s596 + $0xec] sm:$0xf]
        %v657 = vld [vmem:[%s596 + $0xf0] sm:$0xf]
        %v658 = vld [vmem:[%s596 + $0xf4] sm:$0xf]
        %v659 = vld [vmem:[%s596 + $0xf8] sm:$0xf]
        %v660 = vld [vmem:[%s596 + $0xfc] sm:$0xf]
        %v661 = vld [vmem:[%s596 + $0x100] sm:$0xf]
        %v662 = vld [vmem:[%s596 + $0x104] sm:$0xf]
        %v663 = vld [vmem:[%s596 + $0x108] sm:$0xf]
        %v664 = vld [vmem:[%s596 + $0x10c] sm:$0xf]
        %v665 = vld [vmem:[%s596 + $0x110] sm:$0xf]
        %v666 = vld [vmem:[%s596 + $0x114] sm:$0xf]
        %v667 = vld [vmem:[%s596 + $0x118] sm:$0xf]
        %v668 = vld [vmem:[%s596 + $0x11c] sm:$0xf]
        %v669 = vld [vmem:[%s596 + $0x120] sm:$0xf]
        %v670 = vld [vmem:[%s596 + $0x124] sm:$0xf]
        %v671 = vld [vmem:[%s596 + $0x128] sm:$0xf]
        %v672 = vld [vmem:[%s596 + $0x12c] sm:$0xf]
        %v673 = vld [vmem:[%s596 + $0x130] sm:$0xf]
        %v674 = vld [vmem:[%s596 + $0x134] sm:$0xf]
        %v675 = vld [vmem:[%s596 + $0x138] sm:$0xf]
        %v676 = vld [vmem:[%s596 + $0x13c] sm:$0xf]
        %v677 = vld [vmem:[%s596 + $0x140] sm:$0xf]
        %v678 = vld [vmem:[%s596 + $0x144] sm:$0xf]
        %v679 = vld [vmem:[%s596 + $0x148] sm:$0xf]
        %v680 = vld [vmem:[%s596 + $0x14c] sm:$0xf]
        %v681 = vld [vmem:[%s596 + $0x150] sm:$0xf]
        %v682 = vld [vmem:[%s596 + $0x154] sm:$0xf]
        %v683 = vld [vmem:[%s596 + $0x158] sm:$0xf]
        %v684 = vld [vmem:[%s596 + $0x15c] sm:$0xf]
        %v685 = vld [vmem:[%s596 + $0x160] sm:$0xf]
        %v686 = vld [vmem:[%s596 + $0x164] sm:$0xf]
        %v687 = vld [vmem:[%s596 + $0x168] sm:$0xf]
        %v688 = vld [vmem:[%s596 + $0x16c] sm:$0xf]
        %v689 = vld [vmem:[%s596 + $0x170] sm:$0xf]
        %v690 = vld [vmem:[%s596 + $0x174] sm:$0xf]
        %v691 = vld [vmem:[%s596 + $0x178] sm:$0xf]
        %v692 = vld [vmem:[%s596 + $0x17c] sm:$0xf]
        %v693 = vld [vmem:[%s596 + $0x180] sm:$0xf]
        %v694 = vld [vmem:[%s596 + $0x184] sm:$0xf]
        %v695 = vld [vmem:[%s596 + $0x188] sm:$0xf]
        %v696 = vld [vmem:[%s596 + $0x18c] sm:$0xf]
        %v697 = vld [vmem:[%s596 + $0x190] sm:$0xf]
        %v698 = vld [vmem:[%s596 + $0x194] sm:$0xf]
        %v699 = vld [vmem:[%s596 + $0x198] sm:$0xf]
        %v700 = vld [vmem:[%s596 + $0x19c] sm:$0xf]
        %v701 = vld [vmem:[%s596 + $0x1a0] sm:$0xf]
        %v702 = vld [vmem:[%s596 + $0x1a4] sm:$0xf]
        %v703 = vld [vmem:[%s596 + $0x1a8] sm:$0xf]
        %v704 = vld [vmem:[%s596 + $0x1ac] sm:$0xf]
        %v705 = vld [vmem:[%s596 + $0x1b0] sm:$0xf]
        %v706 = vld [vmem:[%s596 + $0x1b4] sm:$0xf]
        %v707 = vld [vmem:[%s596 + $0x1b8] sm:$0xf]
        %v708 = vld [vmem:[%s596 + $0x1bc] sm:$0xf]
        %v709 = vld [vmem:[%s596 + $0x1c0] sm:$0xf]
        %v710 = vld [vmem:[%s596 + $0x1c4] sm:$0xf]
        %v711 = vld [vmem:[%s596 + $0x1c8] sm:$0xf]
        %v712 = vld [vmem:[%s596 + $0x1cc] sm:$0xf]
        %v713 = vld [vmem:[%s596 + $0x1d0] sm:$0xf]
        %v714 = vld [vmem:[%s596 + $0x1d4] sm:$0xf]
        %v715 = vld [vmem:[%s596 + $0x1d8] sm:$0xf]
        %v716 = vld [vmem:[%s596 + $0x1dc] sm:$0xf]
        %v717 = vld [vmem:[%s596 + $0x1e0] sm:$0xf]
        %v718 = vld [vmem:[%s596 + $0x1e4] sm:$0xf]
        %v719 = vld [vmem:[%s596 + $0x1e8] sm:$0xf]
        %v720 = vld [vmem:[%s596 + $0x1ec] sm:$0xf]
        %v721 = vld [vmem:[%s596 + $0x1f0] sm:$0xf]
        %v722 = vld [vmem:[%s596 + $0x1f4] sm:$0xf]
        %v723 = vld [vmem:[%s596 + $0x1f8] sm:$0xf]
        %v724 = vld [vmem:[%s596 + $0x1fc] sm:$0xf]
        %v725 = vld [vmem:[%s596 + $0x200] sm:$0xf]
        %v726 = vld [vmem:[%s596 + $0x204] sm:$0xf]
        %v727 = vld [vmem:[%s596 + $0x208] sm:$0xf]
        %v728 = vld [vmem:[%s596 + $0x20c] sm:$0xf]
        %v729 = vld [vmem:[%s596 + $0x210] sm:$0xf]
        %v730 = vld [vmem:[%s596 + $0x214] sm:$0xf]
        %v731 = vld [vmem:[%s596 + $0x218] sm:$0xf]
        %v732 = vld [vmem:[%s596 + $0x21c] sm:$0xf]
        %v733 = vld [vmem:[%s596 + $0x220] sm:$0xf]
        %v734 = vld [vmem:[%s596 + $0x224] sm:$0xf]
        %v735 = vld [vmem:[%s596 + $0x228] sm:$0xf]
        %v736 = vld [vmem:[%s596 + $0x22c] sm:$0xf]
        %v737 = vld [vmem:[%s596 + $0x230] sm:$0xf]
        %v738 = vld [vmem:[%s596 + $0x234] sm:$0xf]
        %v739 = vld [vmem:[%s596 + $0x238] sm:$0xf]
        %v740 = vld [vmem:[%s596 + $0x23c] sm:$0xf]
        %v741 = vld [vmem:[%s596 + $0x240] sm:$0xf]
        %v742 = vld [vmem:[%s596 + $0x244] sm:$0xf]
        %v743 = vld [vmem:[%s596 + $0x248] sm:$0xf]
        %v744 = vld [vmem:[%s596 + $0x24c] sm:$0xf]
        %v745 = vld [vmem:[%s596 + $0x250] sm:$0xf]
        %v746 = vld [vmem:[%s596 + $0x254] sm:$0xf]
        %v747 = vld [vmem:[%s596 + $0x258] sm:$0xf]
        %v748 = vld [vmem:[%s596 + $0x25c] sm:$0xf]
        %v749 = vld [vmem:[%s596 + $0x260] sm:$0xf]
        %v750 = vld [vmem:[%s596 + $0x264] sm:$0xf]
        %v751 = vld [vmem:[%s596 + $0x268] sm:$0xf]
        %v752 = vld [vmem:[%s596 + $0x26c] sm:$0xf]
        %v753 = vld [vmem:[%s596 + $0x270] sm:$0xf]
        %v754 = vld [vmem:[%s596 + $0x274] sm:$0xf]
        %v755 = vld [vmem:[%s596 + $0x278] sm:$0xf]
        %v756 = vld [vmem:[%s596 + $0x27c] sm:$0xf]
        %v757 = vld [vmem:[%s596 + $0x280] sm:$0xf]
        %v758 = vld [vmem:[%s596 + $0x284] sm:$0xf]
        %v759 = vld [vmem:[%s596 + $0x288] sm:$0xf]
        %v760 = vld [vmem:[%s596 + $0x28c] sm:$0xf]
        %v761 = vld [vmem:[%s596 + $0x290] sm:$0xf]
        %v762 = vld [vmem:[%s596 + $0x294] sm:$0xf]
        %v763 = vld [vmem:[%s596 + $0x298] sm:$0xf]
        %v764 = vld [vmem:[%s596 + $0x29c] sm:$0xf]
        %v765 = vld [vmem:[%s596 + $0x2a0] sm:$0xf]
        %v766 = vld [vmem:[%s596 + $0x2a4] sm:$0xf]
        %v767 = vld [vmem:[%s596 + $0x2a8] sm:$0xf]
        %v768 = vld [vmem:[%s596 + $0x2ac] sm:$0xf]
        %v769 = vld [vmem:[%s596 + $0x2b0] sm:$0xf]
        %v770 = vld [vmem:[%s596 + $0x2b4] sm:$0xf]
        %v771 = vld [vmem:[%s596 + $0x2b8] sm:$0xf]
        %v772 = vld [vmem:[%s596 + $0x2bc] sm:$0xf]
        %v773 = vld [vmem:[%s596 + $0x2c0] sm:$0xf]
        %v774 = vld [vmem:[%s596 + $0x2c4] sm:$0xf]
        %v775 = vld [vmem:[%s596 + $0x2c8] sm:$0xf]
        %v776 = vld [vmem:[%s596 + $0x2cc] sm:$0xf]
        %v777 = vld [vmem:[%s596 + $0x2d0] sm:$0xf]
        %v778 = vld [vmem:[%s596 + $0x2d4] sm:$0xf]
        %v779 = vld [vmem:[%s596 + $0x2d8] sm:$0xf]
        %v780 = vld [vmem:[%s596 + $0x2dc] sm:$0xf]
        %v781 = vld [vmem:[%s596 + $0x2e0] sm:$0xf]
        %v782 = vld [vmem:[%s596 + $0x2e4] sm:$0xf]
        %v783 = vld [vmem:[%s596 + $0x2e8] sm:$0xf]
        %v784 = vld [vmem:[%s596 + $0x2ec] sm:$0xf]
        %v785 = vld [vmem:[%s596 + $0x2f0] sm:$0xf]
        %v786 = vld [vmem:[%s596 + $0x2f4] sm:$0xf]
        %v787 = vld [vmem:[%s596 + $0x2f8] sm:$0xf]
        %v788 = vld [vmem:[%s596 + $0x2fc] sm:$0xf]
        %v789 = vld [vmem:[%s596 + $0x300] sm:$0xf]
        %v790 = vld [vmem:[%s596 + $0x304] sm:$0xf]
        %v791 = vld [vmem:[%s596 + $0x308] sm:$0xf]
        %v792 = vld [vmem:[%s596 + $0x30c] sm:$0xf]
        %v793 = vld [vmem:[%s596 + $0x310] sm:$0xf]
        %v794 = vld [vmem:[%s596 + $0x314] sm:$0xf]
        %v795 = vld [vmem:[%s596 + $0x318] sm:$0xf]
        %v796 = vld [vmem:[%s596 + $0x31c] sm:$0xf]
        %v797 = vld [vmem:[%s596 + $0x320] sm:$0xf]
        %v798 = vld [vmem:[%s596 + $0x324] sm:$0xf]
        %v799 = vld [vmem:[%s596 + $0x328] sm:$0xf]
        %v800 = vld [vmem:[%s596 + $0x32c] sm:$0xf]
        %v801 = vld [vmem:[%s596 + $0x330] sm:$0xf]
        %v802 = vld [vmem:[%s596 + $0x334] sm:$0xf]
        %v803 = vld [vmem:[%s596 + $0x338] sm:$0xf]
        %v804 = vld [vmem:[%s596 + $0x33c] sm:$0xf]
        %v805 = vld [vmem:[%s596 + $0x340] sm:$0xf]
        %v806 = vld [vmem:[%s596 + $0x344] sm:$0xf]
        %v807 = vld [vmem:[%s596 + $0x348] sm:$0xf]
        %v808 = vld [vmem:[%s596 + $0x34c] sm:$0xf]
        %v809 = vld [vmem:[%s596 + $0x350] sm:$0xf]
        %v810 = vld [vmem:[%s596 + $0x354] sm:$0xf]
        %v811 = vld [vmem:[%s596 + $0x358] sm:$0xf]
        %v812 = vld [vmem:[%s596 + $0x35c] sm:$0xf]
        %v813 = vld [vmem:[%s596 + $0x360] sm:$0xf]
        %v814 = vld [vmem:[%s596 + $0x364] sm:$0xf]
        %v815 = vld [vmem:[%s596 + $0x368] sm:$0xf]
        %v816 = vld [vmem:[%s596 + $0x36c] sm:$0xf]
        %v817 = vld [vmem:[%s596 + $0x370] sm:$0xf]
        %v818 = vld [vmem:[%s596 + $0x374] sm:$0xf]
        %v819 = vld [vmem:[%s596 + $0x378] sm:$0xf]
        %v820 = vld [vmem:[%s596 + $0x37c] sm:$0xf]
        %v821 = vld [vmem:[%s596 + $0x380] sm:$0xf]
        %v822 = vld [vmem:[%s596 + $0x384] sm:$0xf]
        %v823 = vld [vmem:[%s596 + $0x388] sm:$0xf]
        %v824 = vld [vmem:[%s596 + $0x38c] sm:$0xf]
        %v825 = vld [vmem:[%s596 + $0x390] sm:$0xf]
        %v826 = vld [vmem:[%s596 + $0x394] sm:$0xf]
        %v827 = vld [vmem:[%s596 + $0x398] sm:$0xf]
        %v828 = vld [vmem:[%s596 + $0x39c] sm:$0xf]
        %v829 = vld [vmem:[%s596 + $0x3a0] sm:$0xf]
        %v830 = vld [vmem:[%s596 + $0x3a4] sm:$0xf]
        %v831 = vld [vmem:[%s596 + $0x3a8] sm:$0xf]
        %v832 = vld [vmem:[%s596 + $0x3ac] sm:$0xf]
        %v833 = vld [vmem:[%s596 + $0x3b0] sm:$0xf]
        %v834 = vld [vmem:[%s596 + $0x3b4] sm:$0xf]
        %v835 = vld [vmem:[%s596 + $0x3b8] sm:$0xf]
        %v836 = vld [vmem:[%s596 + $0x3bc] sm:$0xf]
        %v837 = vld [vmem:[%s596 + $0x3c0] sm:$0xf]
        %v838 = vld [vmem:[%s596 + $0x3c4] sm:$0xf]
        %v839 = vld [vmem:[%s596 + $0x3c8] sm:$0xf]
        %v840 = vld [vmem:[%s596 + $0x3cc] sm:$0xf]
        %v841 = vld [vmem:[%s596 + $0x3d0] sm:$0xf]
        %v842 = vld [vmem:[%s596 + $0x3d4] sm:$0xf]
        %v843 = vld [vmem:[%s596 + $0x3d8] sm:$0xf]
        %v844 = vld [vmem:[%s596 + $0x3dc] sm:$0xf]
        %v845 = vld [vmem:[%s596 + $0x3e0] sm:$0xf]
        %v846 = vld [vmem:[%s596 + $0x3e4] sm:$0xf]
        %v847 = vld [vmem:[%s596 + $0x3e8] sm:$0xf]
        %v848 = vld [vmem:[%s596 + $0x3ec] sm:$0xf]
        %v849 = vld [vmem:[%s596 + $0x3f0] sm:$0xf]
        %v850 = vld [vmem:[%s596 + $0x3f4] sm:$0xf]
        %v851 = vld [vmem:[%s596 + $0x3f8] sm:$0xf]
        %v852 = vld [vmem:[%s596 + $0x3fc] sm:$0xf]
        %v853 = vld [vmem:[%s596 + $0x400] sm:$0xf]
        %v854 = vld [vmem:[%s596 + $0x404] sm:$0xf]
        %v855 = vld [vmem:[%s596 + $0x408] sm:$0xf]
        %v856 = vld [vmem:[%s596 + $0x40c] sm:$0xf]
        %v857 = vld [vmem:[%s596 + $0x410] sm:$0xf]
        %v858 = vld [vmem:[%s596 + $0x414] sm:$0xf]
        %v859 = vld [vmem:[%s596 + $0x418] sm:$0xf]
        %v860 = vld [vmem:[%s596 + $0x41c] sm:$0xf]
        %v861 = vld [vmem:[%s596 + $0x420] sm:$0xf]
        %v862 = vld [vmem:[%s596 + $0x424] sm:$0xf]
        %v863 = vld [vmem:[%s596 + $0x428] sm:$0xf]
        %v864 = vld [vmem:[%s596 + $0x42c] sm:$0xf]
        %v865 = vld [vmem:[%s596 + $0x430] sm:$0xf]
        %v866 = vld [vmem:[%s596 + $0x434] sm:$0xf]
        %v867 = vld [vmem:[%s596 + $0x438] sm:$0xf]
        %v868 = vld [vmem:[%s596 + $0x43c] sm:$0xf]
        %v869 = vld [vmem:[%s596 + $0x440] sm:$0xf]
        %v870 = vld [vmem:[%s596 + $0x444] sm:$0xf]
        %v871 = vld [vmem:[%s596 + $0x448] sm:$0xf]
        %v872 = vld [vmem:[%s596 + $0x44c] sm:$0xf]
        %v873 = vld [vmem:[%s596 + $0x450] sm:$0xf]
        %v874 = vld [vmem:[%s596 + $0x454] sm:$0xf]
        %v875 = vld [vmem:[%s596 + $0x458] sm:$0xf]
        %v876 = vld [vmem:[%s596 + $0x45c] sm:$0xf]
        %v877 = vld [vmem:[%s596 + $0x460] sm:$0xf]
        %v878 = vld [vmem:[%s596 + $0x464] sm:$0xf]
        %v879 = vld [vmem:[%s596 + $0x468] sm:$0xf]
        %v880 = vld [vmem:[%s596 + $0x46c] sm:$0xf]
        %v881 = vld [vmem:[%s596 + $0x470] sm:$0xf]
        %v882 = vld [vmem:[%s596 + $0x474] sm:$0xf]
        %v883 = vld [vmem:[%s596 + $0x478] sm:$0xf]
        %v884 = vld [vmem:[%s596 + $0x47c] sm:$0xf]
        %v885 = vld [vmem:[%s596 + $0x480] sm:$0xf]
        %v886 = vld [vmem:[%s596 + $0x484] sm:$0xf]
        %v887 = vld [vmem:[%s596 + $0x488] sm:$0xf]
        %v888 = vld [vmem:[%s596 + $0x48c] sm:$0xf]
        %v889 = vld [vmem:[%s596 + $0x490] sm:$0xf]
        %v890 = vld [vmem:[%s596 + $0x494] sm:$0xf]
        %v891 = vld [vmem:[%s596 + $0x498] sm:$0xf]
        %v892 = vld [vmem:[%s596 + $0x49c] sm:$0xf]
        %v893 = vld [vmem:[%s596 + $0x4a0] sm:$0xf]
        %v894 = vld [vmem:[%s596 + $0x4a4] sm:$0xf]
        %v895 = vld [vmem:[%s596 + $0x4a8] sm:$0xf]
        %v896 = vld [vmem:[%s596 + $0x4ac] sm:$0xf]
        %v897 = vld [vmem:[%s596 + $0x4b0] sm:$0xf]
        %v898 = vld [vmem:[%s596 + $0x4b4] sm:$0xf]
        %v899 = vld [vmem:[%s596 + $0x4b8] sm:$0xf]
        %v900 = vld [vmem:[%s596 + $0x4bc] sm:$0xf]
        %v901 = vld [vmem:[%s596 + $0x4c0] sm:$0xf]
        %v902 = vld [vmem:[%s596 + $0x4c4] sm:$0xf]
        %v903 = vld [vmem:[%s596 + $0x4c8] sm:$0xf]
        %v904 = vld [vmem:[%s596 + $0x4cc] sm:$0xf]
        %v905 = vld [vmem:[%s596 + $0x4d0] sm:$0xf]
        %v906 = vld [vmem:[%s596 + $0x4d4] sm:$0xf]
        %v907 = vld [vmem:[%s596 + $0x4d8] sm:$0xf]
        %v908 = vld [vmem:[%s596 + $0x4dc] sm:$0xf]
        %v909 = vld [vmem:[%s596 + $0x4e0] sm:$0xf]
        %v910 = vld [vmem:[%s596 + $0x4e4] sm:$0xf]
        %v911 = vld [vmem:[%s596 + $0x4e8] sm:$0xf]
        %v912 = vld [vmem:[%s596 + $0x4ec] sm:$0xf]
        %v913 = vld [vmem:[%s596 + $0x4f0] sm:$0xf]
        %v914 = vld [vmem:[%s596 + $0x4f4] sm:$0xf]
        %v915 = vld [vmem:[%s596 + $0x4f8] sm:$0xf]
        %v916 = vld [vmem:[%s596 + $0x4fc] sm:$0xf]
        %v917 = vld [vmem:[%s596 + $0x500] sm:$0xf]
        %v918 = vld [vmem:[%s596 + $0x504] sm:$0xf]
        %v919 = vld [vmem:[%s596 + $0x508] sm:$0xf]
        %v920 = vld [vmem:[%s596 + $0x50c] sm:$0xf]
        %v921 = vld [vmem:[%s596 + $0x510] sm:$0xf]
        %v922 = vld [vmem:[%s596 + $0x514] sm:$0xf]
        %v923 = vld [vmem:[%s596 + $0x518] sm:$0xf]
        %v924 = vld [vmem:[%s596 + $0x51c] sm:$0xf]
        %v925 = vld [vmem:[%s596 + $0x520] sm:$0xf]
        %v926 = vld [vmem:[%s596 + $0x524] sm:$0xf]
        %v927 = vld [vmem:[%s596 + $0x528] sm:$0xf]
        %v928 = vld [vmem:[%s596 + $0x52c] sm:$0xf]
        %v929 = vld [vmem:[%s596 + $0x530] sm:$0xf]
        %v930 = vld [vmem:[%s596 + $0x534] sm:$0xf]
        %v931 = vld [vmem:[%s596 + $0x538] sm:$0xf]
        %v932 = vld [vmem:[%s596 + $0x53c] sm:$0xf]
        %v933 = vld [vmem:[%s596 + $0x540] sm:$0xf]
        %v934 = vld [vmem:[%s596 + $0x544] sm:$0xf]
        %v935 = vld [vmem:[%s596 + $0x548] sm:$0xf]
        %v936 = vld [vmem:[%s596 + $0x54c] sm:$0xf]
        %v937 = vld [vmem:[%s596 + $0x550] sm:$0xf]
        %v938 = vld [vmem:[%s596 + $0x554] sm:$0xf]
        %v939 = vld [vmem:[%s596 + $0x558] sm:$0xf]
        %v940 = vld [vmem:[%s596 + $0x55c] sm:$0xf]
        %v941 = vld [vmem:[%s596 + $0x560] sm:$0xf]
        %v942 = vld [vmem:[%s596 + $0x564] sm:$0xf]
        %v943 = vld [vmem:[%s596 + $0x568] sm:$0xf]
        %v944 = vld [vmem:[%s596 + $0x56c] sm:$0xf]
        %v945 = vld [vmem:[%s596 + $0x570] sm:$0xf]
        %v946 = vld [vmem:[%s596 + $0x574] sm:$0xf]
        %v947 = vld [vmem:[%s596 + $0x578] sm:$0xf]
        %v948 = vld [vmem:[%s596 + $0x57c] sm:$0xf]
        %v949 = vld [vmem:[%s596 + $0x580] sm:$0xf]
        %v950 = vld [vmem:[%s596 + $0x584] sm:$0xf]
        %v951 = vld [vmem:[%s596 + $0x588] sm:$0xf]
        %v952 = vld [vmem:[%s596 + $0x58c] sm:$0xf]
        %v953 = vld [vmem:[%s596 + $0x590] sm:$0xf]
        %v954 = vld [vmem:[%s596 + $0x594] sm:$0xf]
        %v955 = vld [vmem:[%s596 + $0x598] sm:$0xf]
        %v956 = vld [vmem:[%s596 + $0x59c] sm:$0xf]
        %v957 = vld [vmem:[%s596 + $0x5a0] sm:$0xf]
        %v958 = vld [vmem:[%s596 + $0x5a4] sm:$0xf]
        %v959 = vld [vmem:[%s596 + $0x5a8] sm:$0xf]
        %v960 = vld [vmem:[%s596 + $0x5ac] sm:$0xf]
        %v961 = vld [vmem:[%s596 + $0x5b0] sm:$0xf]
        %v962 = vld [vmem:[%s596 + $0x5b4] sm:$0xf]
        %v963 = vld [vmem:[%s596 + $0x5b8] sm:$0xf]
        %v964 = vld [vmem:[%s596 + $0x5bc] sm:$0xf]
        %v965 = vld [vmem:[%s596 + $0x5c0] sm:$0xf]
        %v966 = vld [vmem:[%s596 + $0x5c4] sm:$0xf]
        %v967 = vld [vmem:[%s596 + $0x5c8] sm:$0xf]
        %v968 = vld [vmem:[%s596 + $0x5cc] sm:$0xf]
        %v969 = vld [vmem:[%s596 + $0x5d0] sm:$0xf]
        %v970 = vld [vmem:[%s596 + $0x5d4] sm:$0xf]
        %v971 = vld [vmem:[%s596 + $0x5d8] sm:$0xf]
        %v972 = vld [vmem:[%s596 + $0x5dc] sm:$0xf]
        %v973 = vld [vmem:[%s596 + $0x5e0] sm:$0xf]
        %v974 = vld [vmem:[%s596 + $0x5e4] sm:$0xf]
        %v975 = vld [vmem:[%s596 + $0x5e8] sm:$0xf]
        %v976 = vld [vmem:[%s596 + $0x5ec] sm:$0xf]
        %v977 = vld [vmem:[%s596 + $0x5f0] sm:$0xf]
        %v978 = vld [vmem:[%s596 + $0x5f4] sm:$0xf]
        %v979 = vld [vmem:[%s596 + $0x5f8] sm:$0xf]
        %v980 = vld [vmem:[%s596 + $0x5fc] sm:$0xf]
        %v981 = vld [vmem:[%s596 + $0x600] sm:$0xf]
        %v982 = vld [vmem:[%s596 + $0x604] sm:$0xf]
        %v983 = vld [vmem:[%s596 + $0x608] sm:$0xf]
        %v984 = vld [vmem:[%s596 + $0x60c] sm:$0xf]
        %v985 = vld [vmem:[%s596 + $0x610] sm:$0xf]
        %v986 = vld [vmem:[%s596 + $0x614] sm:$0xf]
        %v987 = vld [vmem:[%s596 + $0x618] sm:$0xf]
        %v988 = vld [vmem:[%s596 + $0x61c] sm:$0xf]
        %v989 = vld [vmem:[%s596 + $0x620] sm:$0xf]
        %v990 = vld [vmem:[%s596 + $0x624] sm:$0xf]
        %v991 = vld [vmem:[%s596 + $0x628] sm:$0xf]
        %v992 = vld [vmem:[%s596 + $0x62c] sm:$0xf]
        %v993 = vld [vmem:[%s596 + $0x630] sm:$0xf]
        %v994 = vld [vmem:[%s596 + $0x634] sm:$0xf]
        %v995 = vld [vmem:[%s596 + $0x638] sm:$0xf]
        %v996 = vld [vmem:[%s596 + $0x63c] sm:$0xf]
        %v997 = vld [vmem:[%s596 + $0x640] sm:$0xf]
        %v998 = vld [vmem:[%s596 + $0x644] sm:$0xf]
        %v999 = vld [vmem:[%s596 + $0x648] sm:$0xf]
        %v1000 = vld [vmem:[%s596 + $0x64c] sm:$0xf]
        %v1001 = vld [vmem:[%s596 + $0x650] sm:$0xf]
        %v1002 = vld [vmem:[%s596 + $0x654] sm:$0xf]
        %v1003 = vld [vmem:[%s596 + $0x658] sm:$0xf]
        %v1004 = vld [vmem:[%s596 + $0x65c] sm:$0xf]
        %v1005 = vld [vmem:[%s596 + $0x660] sm:$0xf]
        %v1006 = vld [vmem:[%s596 + $0x664] sm:$0xf]
        %v1007 = vld [vmem:[%s596 + $0x668] sm:$0xf]
        %v1008 = vld [vmem:[%s596 + $0x66c] sm:$0xf]
        %v1009 = vld [vmem:[%s596 + $0x670] sm:$0xf]
        %v1010 = vld [vmem:[%s596 + $0x674] sm:$0xf]
        %v1011 = vld [vmem:[%s596 + $0x678] sm:$0xf]
        %v1012 = vld [vmem:[%s596 + $0x67c] sm:$0xf]
        %v1013 = vld [vmem:[%s596 + $0x680] sm:$0xf]
        %v1014 = vld [vmem:[%s596 + $0x684] sm:$0xf]
        %v1015 = vld [vmem:[%s596 + $0x688] sm:$0xf]
        %v1016 = vld [vmem:[%s596 + $0x68c] sm:$0xf]
        %v1017 = vld [vmem:[%s596 + $0x690] sm:$0xf]
        %v1018 = vld [vmem:[%s596 + $0x694] sm:$0xf]
        %v1019 = vld [vmem:[%s596 + $0x698] sm:$0xf]
        %v1020 = vld [vmem:[%s596 + $0x69c] sm:$0xf]
        %v1021 = vld [vmem:[%s596 + $0x6a0] sm:$0xf]
        %v1022 = vld [vmem:[%s596 + $0x6a4] sm:$0xf]
        %v1023 = vld [vmem:[%s596 + $0x6a8] sm:$0xf]
        %v1024 = vld [vmem:[%s596 + $0x6ac] sm:$0xf]
        %v1025 = vld [vmem:[%s596 + $0x6b0] sm:$0xf]
        %v1026 = vld [vmem:[%s596 + $0x6b4] sm:$0xf]
        %v1027 = vld [vmem:[%s596 + $0x6b8] sm:$0xf]
        %v1028 = vld [vmem:[%s596 + $0x6bc] sm:$0xf]
        %v1029 = vld [vmem:[%s596 + $0x6c0] sm:$0xf]
        %v1030 = vld [vmem:[%s596 + $0x6c4] sm:$0xf]
        %v1031 = vld [vmem:[%s596 + $0x6c8] sm:$0xf]
        %v1032 = vld [vmem:[%s596 + $0x6cc] sm:$0xf]
        %v1033 = vld [vmem:[%s596 + $0x6d0] sm:$0xf]
        %v1034 = vld [vmem:[%s596 + $0x6d4] sm:$0xf]
        %v1035 = vld [vmem:[%s596 + $0x6d8] sm:$0xf]
        %v1036 = vld [vmem:[%s596 + $0x6dc] sm:$0xf]
        %v1037 = vld [vmem:[%s596 + $0x6e0] sm:$0xf]
        %v1038 = vld [vmem:[%s596 + $0x6e4] sm:$0xf]
        %v1039 = vld [vmem:[%s596 + $0x6e8] sm:$0xf]
        %v1040 = vld [vmem:[%s596 + $0x6ec] sm:$0xf]
        %v1041 = vld [vmem:[%s596 + $0x6f0] sm:$0xf]
        %v1042 = vld [vmem:[%s596 + $0x6f4] sm:$0xf]
        %v1043 = vld [vmem:[%s596 + $0x6f8] sm:$0xf]
        %v1044 = vld [vmem:[%s596 + $0x6fc] sm:$0xf]
        %v1045 = vld [vmem:[%s596 + $0x700] sm:$0xf]
        %v1046 = vld [vmem:[%s596 + $0x704] sm:$0xf]
        %v1047 = vld [vmem:[%s596 + $0x708] sm:$0xf]
        %v1048 = vld [vmem:[%s596 + $0x70c] sm:$0xf]
        %v1049 = vld [vmem:[%s596 + $0x710] sm:$0xf]
        %v1050 = vld [vmem:[%s596 + $0x714] sm:$0xf]
        %v1051 = vld [vmem:[%s596 + $0x718] sm:$0xf]
        %v1052 = vld [vmem:[%s596 + $0x71c] sm:$0xf]
        %v1053 = vld [vmem:[%s596 + $0x720] sm:$0xf]
        %v1054 = vld [vmem:[%s596 + $0x724] sm:$0xf]
        %v1055 = vld [vmem:[%s596 + $0x728] sm:$0xf]
        %v1056 = vld [vmem:[%s596 + $0x72c] sm:$0xf]
        %v1057 = vld [vmem:[%s596 + $0x730] sm:$0xf]
        %v1058 = vld [vmem:[%s596 + $0x734] sm:$0xf]
        %v1059 = vld [vmem:[%s596 + $0x738] sm:$0xf]
        %v1060 = vld [vmem:[%s596 + $0x73c] sm:$0xf]
        %v1061 = vld [vmem:[%s596 + $0x740] sm:$0xf]
        %v1062 = vld [vmem:[%s596 + $0x744] sm:$0xf]
        %v1063 = vld [vmem:[%s596 + $0x748] sm:$0xf]
        %v1064 = vld [vmem:[%s596 + $0x74c] sm:$0xf]
        %v1065 = vld [vmem:[%s596 + $0x750] sm:$0xf]
        %v1066 = vld [vmem:[%s596 + $0x754] sm:$0xf]
        %v1067 = vld [vmem:[%s596 + $0x758] sm:$0xf]
        %v1068 = vld [vmem:[%s596 + $0x75c] sm:$0xf]
        %v1069 = vld [vmem:[%s596 + $0x760] sm:$0xf]
        %v1070 = vld [vmem:[%s596 + $0x764] sm:$0xf]
        %v1071 = vld [vmem:[%s596 + $0x768] sm:$0xf]
        %v1072 = vld [vmem:[%s596 + $0x76c] sm:$0xf]
        %v1073 = vld [vmem:[%s596 + $0x770] sm:$0xf]
        %v1074 = vld [vmem:[%s596 + $0x774] sm:$0xf]
        %v1075 = vld [vmem:[%s596 + $0x778] sm:$0xf]
        %v1076 = vld [vmem:[%s596 + $0x77c] sm:$0xf]
        %v1077 = vld [vmem:[%s596 + $0x780] sm:$0xf]
        %v1078 = vld [vmem:[%s596 + $0x784] sm:$0xf]
        %v1079 = vld [vmem:[%s596 + $0x788] sm:$0xf]
        %v1080 = vld [vmem:[%s596 + $0x78c] sm:$0xf]
        %v1081 = vld [vmem:[%s596 + $0x790] sm:$0xf]
        %v1082 = vld [vmem:[%s596 + $0x794] sm:$0xf]
        %v1083 = vld [vmem:[%s596 + $0x798] sm:$0xf]
        %v1084 = vld [vmem:[%s596 + $0x79c] sm:$0xf]
        %v1085 = vld [vmem:[%s596 + $0x7a0] sm:$0xf]
        %v1086 = vld [vmem:[%s596 + $0x7a4] sm:$0xf]
        %v1087 = vld [vmem:[%s596 + $0x7a8] sm:$0xf]
        %v1088 = vld [vmem:[%s596 + $0x7ac] sm:$0xf]
        %v1089 = vld [vmem:[%s596 + $0x7b0] sm:$0xf]
        %v1090 = vld [vmem:[%s596 + $0x7b4] sm:$0xf]
        %v1091 = vld [vmem:[%s596 + $0x7b8] sm:$0xf]
        %v1092 = vld [vmem:[%s596 + $0x7bc] sm:$0xf]
        %v1093 = vld [vmem:[%s596 + $0x7c0] sm:$0xf]
        %v1094 = vld [vmem:[%s596 + $0x7c4] sm:$0xf]
        %v1095 = vld [vmem:[%s596 + $0x7c8] sm:$0xf]
        %v1096 = vld [vmem:[%s596 + $0x7cc] sm:$0xf]
        %v1097 = vld [vmem:[%s596 + $0x7d0] sm:$0xf]
        %v1098 = vld [vmem:[%s596 + $0x7d4] sm:$0xf]
        %v1099 = vld [vmem:[%s596 + $0x7d8] sm:$0xf]
        %v1100 = vld [vmem:[%s596 + $0x7dc] sm:$0xf]
        %v1101 = vld [vmem:[%s596 + $0x7e0] sm:$0xf]
        %v1102 = vld [vmem:[%s596 + $0x7e4] sm:$0xf]
        %v1103 = vld [vmem:[%s596 + $0x7e8] sm:$0xf]
        %v1104 = vld [vmem:[%s596 + $0x7ec] sm:$0xf]
        %v1105 = vld [vmem:[%s596 + $0x7f0] sm:$0xf]
        %v1106 = vld [vmem:[%s596 + $0x7f4] sm:$0xf]
        %v1107 = vld [vmem:[%s596 + $0x7f8] sm:$0xf]
        %v1108 = vld [vmem:[%s596 + $0x7fc] sm:$0xf]
        %v1109 = vld [vmem:[%s596 + $0x800] sm:$0xf]
        %v1110 = vld [vmem:[%s596 + $0x804] sm:$0xf]
        %v1111 = vld [vmem:[%s596 + $0x808] sm:$0xf]
        %v1112 = vld [vmem:[%s596 + $0x80c] sm:$0xf]
        %v1113 = vld [vmem:[%s596 + $0x810] sm:$0xf]
        %v1114 = vld [vmem:[%s596 + $0x814] sm:$0xf]
        %v1115 = vld [vmem:[%s596 + $0x818] sm:$0xf]
        %v1116 = vld [vmem:[%s596 + $0x81c] sm:$0xf]
        %v1117 = vld [vmem:[%s596 + $0x820] sm:$0xf]
        %v1118 = vld [vmem:[%s596 + $0x824] sm:$0xf]
        %v1119 = vld [vmem:[%s596 + $0x828] sm:$0xf]
        %v1120 = vld [vmem:[%s596 + $0x82c] sm:$0xf]
        %v1121 = vld [vmem:[%s596 + $0x830] sm:$0xf]
        %v1122 = vld [vmem:[%s596 + $0x834] sm:$0xf]
        %v1123 = vld [vmem:[%s596 + $0x838] sm:$0xf]
        %v1124 = vld [vmem:[%s596 + $0x83c] sm:$0xf]
        %v1125 = vld [vmem:[%s596 + $0x840] sm:$0xf]
        %v1126 = vld [vmem:[%s596 + $0x844] sm:$0xf]
        %v1127 = vld [vmem:[%s596 + $0x848] sm:$0xf]
        %v1128 = vld [vmem:[%s596 + $0x84c] sm:$0xf]
        %v1129 = vld [vmem:[%s596 + $0x850] sm:$0xf]
        %v1130 = vld [vmem:[%s596 + $0x854] sm:$0xf]
        %v1131 = vld [vmem:[%s596 + $0x858] sm:$0xf]
        %v1132 = vld [vmem:[%s596 + $0x85c] sm:$0xf]
        %v1133 = vld [vmem:[%s596 + $0x860] sm:$0xf]
        %v1134 = vld [vmem:[%s596 + $0x864] sm:$0xf]
        %v1135 = vld [vmem:[%s596 + $0x868] sm:$0xf]
        %v1136 = vld [vmem:[%s596 + $0x86c] sm:$0xf]
        %v1137 = vld [vmem:[%s596 + $0x870] sm:$0xf]
        %v1138 = vld [vmem:[%s596 + $0x874] sm:$0xf]
        %v1139 = vld [vmem:[%s596 + $0x878] sm:$0xf]
        %v1140 = vld [vmem:[%s596 + $0x87c] sm:$0xf]
        %v1141 = vld [vmem:[%s596 + $0x880] sm:$0xf]
        %v1142 = vld [vmem:[%s596 + $0x884] sm:$0xf]
        %v1143 = vld [vmem:[%s596 + $0x888] sm:$0xf]
        %v1144 = vld [vmem:[%s596 + $0x88c] sm:$0xf]
        %v1145 = vld [vmem:[%s596 + $0x890] sm:$0xf]
        %v1146 = vld [vmem:[%s596 + $0x894] sm:$0xf]
        %v1147 = vld [vmem:[%s596 + $0x898] sm:$0xf]
        %v1148 = vld [vmem:[%s596 + $0x89c] sm:$0xf]
        %v1149 = vld [vmem:[%s596 + $0x8a0] sm:$0xf]
        %v1150 = vld [vmem:[%s596 + $0x8a4] sm:$0xf]
        %v1151 = vld [vmem:[%s596 + $0x8a8] sm:$0xf]
        %v1152 = vld [vmem:[%s596 + $0x8ac] sm:$0xf]
        %v1153 = vld [vmem:[%s596 + $0x8b0] sm:$0xf]
        %v1154 = vld [vmem:[%s596 + $0x8b4] sm:$0xf]
        %v1155 = vld [vmem:[%s596 + $0x8b8] sm:$0xf]
        %v1156 = vld [vmem:[%s596 + $0x8bc] sm:$0xf]
        %v1157 = vld [vmem:[%s596 + $0x8c0] sm:$0xf]
        %v1158 = vld [vmem:[%s596 + $0x8c4] sm:$0xf]
        %v1159 = vld [vmem:[%s596 + $0x8c8] sm:$0xf]
        %v1160 = vld [vmem:[%s596 + $0x8cc] sm:$0xf]
        %v1161 = vld [vmem:[%s596 + $0x8d0] sm:$0xf]
        %v1162 = vld [vmem:[%s596 + $0x8d4] sm:$0xf]
        %v1163 = vld [vmem:[%s596 + $0x8d8] sm:$0xf]
        %v1164 = vld [vmem:[%s596 + $0x8dc] sm:$0xf]
        %v1165 = vld [vmem:[%s596 + $0x8e0] sm:$0xf]
        %v1166 = vld [vmem:[%s596 + $0x8e4] sm:$0xf]
        %v1167 = vld [vmem:[%s596 + $0x8e8] sm:$0xf]
        %v1168 = vld [vmem:[%s596 + $0x8ec] sm:$0xf]
        %v1169 = vld [vmem:[%s596 + $0x8f0] sm:$0xf]
        %v1170 = vld [vmem:[%s596 + $0x8f4] sm:$0xf]
        %v1171 = vld [vmem:[%s596 + $0x8f8] sm:$0xf]
        %v1172 = vld [vmem:[%s596 + $0x8fc] sm:$0xf]
        %v1173 = vld [vmem:[%s596 + $0x900] sm:$0xf]
        %v1174 = vld [vmem:[%s596 + $0x904] sm:$0xf]
        %v1175 = vld [vmem:[%s596 + $0x908] sm:$0xf]
        %v1176 = vld [vmem:[%s596 + $0x90c] sm:$0xf]
        %v1177 = vld [vmem:[%s596 + $0x910] sm:$0xf]
        %v1178 = vld [vmem:[%s596 + $0x914] sm:$0xf]
        %v1179 = vld [vmem:[%s596 + $0x918] sm:$0xf]
        %v1180 = vld [vmem:[%s596 + $0x91c] sm:$0xf]
        %v1181 = vld [vmem:[%s596 + $0x920] sm:$0xf]
        %v1182 = vld [vmem:[%s596 + $0x924] sm:$0xf]
        %v1183 = vld [vmem:[%s596 + $0x928] sm:$0xf]
        %v1184 = vld [vmem:[%s596 + $0x92c] sm:$0xf]
        %v1185 = vld [vmem:[%s596 + $0x930] sm:$0xf]
        %v1186 = vld [vmem:[%s596 + $0x934] sm:$0xf]
        %v1187 = vld [vmem:[%s596 + $0x938] sm:$0xf]
        %v1188 = vld [vmem:[%s596 + $0x93c] sm:$0xf]
        %v1189 = vld [vmem:[%s596 + $0x940] sm:$0xf]
        %v1190 = vld [vmem:[%s596 + $0x944] sm:$0xf]
        %v1191 = vld [vmem:[%s596 + $0x948] sm:$0xf]
        %v1192 = vld [vmem:[%s596 + $0x94c] sm:$0xf]
        %v1193 = vld [vmem:[%s596 + $0x950] sm:$0xf]
        %v1194 = vld [vmem:[%s596 + $0x954] sm:$0xf]
        %v1195 = vld [vmem:[%s596 + $0x958] sm:$0xf]
        %v1196 = vld [vmem:[%s596 + $0x95c] sm:$0xf]
        %v1197 = vld [vmem:[%s596 + $0x960] sm:$0xf]
        %v1198 = vld [vmem:[%s596 + $0x964] sm:$0xf]
        %v1199 = vld [vmem:[%s596 + $0x968] sm:$0xf]
        %v1200 = vld [vmem:[%s596 + $0x96c] sm:$0xf]
        %v1201 = vld [vmem:[%s596 + $0x970] sm:$0xf]
        %v1202 = vld [vmem:[%s596 + $0x974] sm:$0xf]
        %v1203 = vld [vmem:[%s596 + $0x978] sm:$0xf]
        %v1204 = vld [vmem:[%s596 + $0x97c] sm:$0xf]
        %v1205 = vld [vmem:[%s596 + $0x980] sm:$0xf]
        %v1206 = vld [vmem:[%s596 + $0x984] sm:$0xf]
        %v1207 = vld [vmem:[%s596 + $0x988] sm:$0xf]
        %v1208 = vld [vmem:[%s596 + $0x98c] sm:$0xf]
        %v1209 = vld [vmem:[%s596 + $0x990] sm:$0xf]
        %v1210 = vld [vmem:[%s596 + $0x994] sm:$0xf]
        %v1211 = vld [vmem:[%s596 + $0x998] sm:$0xf]
        %v1212 = vld [vmem:[%s596 + $0x99c] sm:$0xf]
        %v1213 = vld [vmem:[%s596 + $0x9a0] sm:$0xf]
        %v1214 = vld [vmem:[%s596 + $0x9a4] sm:$0xf]
        %v1215 = vld [vmem:[%s596 + $0x9a8] sm:$0xf]
        %v1216 = vld [vmem:[%s596 + $0x9ac] sm:$0xf]
        %v1217 = vld [vmem:[%s596 + $0x9b0] sm:$0xf]
        %v1218 = vld [vmem:[%s596 + $0x9b4] sm:$0xf]
        %v1219 = vld [vmem:[%s596 + $0x9b8] sm:$0xf]
        %v1220 = vld [vmem:[%s596 + $0x9bc] sm:$0xf]
        %v1221 = vld [vmem:[%s596 + $0x9c0] sm:$0xf]
        %v1222 = vld [vmem:[%s596 + $0x9c4] sm:$0xf]
        %v1223 = vld [vmem:[%s596 + $0x9c8] sm:$0xf]
        %v1224 = vld [vmem:[%s596 + $0x9cc] sm:$0xf]
        %v1225 = vld [vmem:[%s596 + $0x9d0] sm:$0xf]
        %v1226 = vld [vmem:[%s596 + $0x9d4] sm:$0xf]
        %v1227 = vld [vmem:[%s596 + $0x9d8] sm:$0xf]
        %v1228 = vld [vmem:[%s596 + $0x9dc] sm:$0xf]
        %v1229 = vld [vmem:[%s596 + $0x9e0] sm:$0xf]
        %v1230 = vld [vmem:[%s596 + $0x9e4] sm:$0xf]
        %v1231 = vld [vmem:[%s596 + $0x9e8] sm:$0xf]
        %v1232 = vld [vmem:[%s596 + $0x9ec] sm:$0xf]
        %v1233 = vld [vmem:[%s596 + $0x9f0] sm:$0xf]
        %v1234 = vld [vmem:[%s596 + $0x9f4] sm:$0xf]
        %v1235 = vld [vmem:[%s596 + $0x9f8] sm:$0xf]
        %v1236 = vld [vmem:[%s596 + $0x9fc] sm:$0xf]
        %v1237 = vld [vmem:[%s596 + $0xa00] sm:$0xf]
        %v1238 = vld [vmem:[%s596 + $0xa04] sm:$0xf]
        %v1239 = vld [vmem:[%s596 + $0xa08] sm:$0xf]
        %v1240 = vld [vmem:[%s596 + $0xa0c] sm:$0xf]
        %v1241 = vld [vmem:[%s596 + $0xa10] sm:$0xf]
        %v1242 = vld [vmem:[%s596 + $0xa14] sm:$0xf]
        %v1243 = vld [vmem:[%s596 + $0xa18] sm:$0xf]
        %v1244 = vld [vmem:[%s596 + $0xa1c] sm:$0xf]
        %v1245 = vld [vmem:[%s596 + $0xa20] sm:$0xf]
        %v1246 = vld [vmem:[%s596 + $0xa24] sm:$0xf]
        %v1247 = vld [vmem:[%s596 + $0xa28] sm:$0xf]
        %v1248 = vld [vmem:[%s596 + $0xa2c] sm:$0xf]
        %v1249 = vld [vmem:[%s596 + $0xa30] sm:$0xf]
        %v1250 = vld [vmem:[%s596 + $0xa34] sm:$0xf]
        %v1251 = vld [vmem:[%s596 + $0xa38] sm:$0xf]
        %v1252 = vld [vmem:[%s596 + $0xa3c] sm:$0xf]
        %v1253 = vld [vmem:[%s596 + $0xa40] sm:$0xf]
        %v1254 = vld [vmem:[%s596 + $0xa44] sm:$0xf]
        %v1255 = vld [vmem:[%s596 + $0xa48] sm:$0xf]
        %v1256 = vld [vmem:[%s596 + $0xa4c] sm:$0xf]
        %v1257 = vld [vmem:[%s596 + $0xa50] sm:$0xf]
        %v1258 = vld [vmem:[%s596 + $0xa54] sm:$0xf]
        %v1259 = vld [vmem:[%s596 + $0xa58] sm:$0xf]
        %v1260 = vld [vmem:[%s596 + $0xa5c] sm:$0xf]
        %v1261 = vld [vmem:[%s596 + $0xa60] sm:$0xf]
        %v1262 = vld [vmem:[%s596 + $0xa64] sm:$0xf]
        %v1263 = vld [vmem:[%s596 + $0xa68] sm:$0xf]
        %v1264 = vld [vmem:[%s596 + $0xa6c] sm:$0xf]
        %v1265 = vld [vmem:[%s596 + $0xa70] sm:$0xf]
        %v1266 = vld [vmem:[%s596 + $0xa74] sm:$0xf]
        %v1267 = vld [vmem:[%s596 + $0xa78] sm:$0xf]
        %v1268 = vld [vmem:[%s596 + $0xa7c] sm:$0xf]
        %v1269 = vld [vmem:[%s596 + $0xa80] sm:$0xf]
        %v1270 = vld [vmem:[%s596 + $0xa84] sm:$0xf]
        %v1271 = vld [vmem:[%s596 + $0xa88] sm:$0xf]
        %v1272 = vld [vmem:[%s596 + $0xa8c] sm:$0xf]
        %v1273 = vld [vmem:[%s596 + $0xa90] sm:$0xf]
        %v1274 = vld [vmem:[%s596 + $0xa94] sm:$0xf]
        %v1275 = vld [vmem:[%s596 + $0xa98] sm:$0xf]
        %v1276 = vld [vmem:[%s596 + $0xa9c] sm:$0xf]
        %v1277 = vld [vmem:[%s596 + $0xaa0] sm:$0xf]
        %v1278 = vld [vmem:[%s596 + $0xaa4] sm:$0xf]
        %v1279 = vld [vmem:[%s596 + $0xaa8] sm:$0xf]
        %v1280 = vld [vmem:[%s596 + $0xaac] sm:$0xf]
        %v1281 = vld [vmem:[%s596 + $0xab0] sm:$0xf]
        %v1282 = vld [vmem:[%s596 + $0xab4] sm:$0xf]
        %v1283 = vld [vmem:[%s596 + $0xab8] sm:$0xf]
        %v1284 = vld [vmem:[%s596 + $0xabc] sm:$0xf]
        %v1285 = vld [vmem:[%s596 + $0xac0] sm:$0xf]
        %v1286 = vld [vmem:[%s596 + $0xac4] sm:$0xf]
        %v1287 = vld [vmem:[%s596 + $0xac8] sm:$0xf]
        %v1288 = vld [vmem:[%s596 + $0xacc] sm:$0xf]
        %v1289 = vld [vmem:[%s596 + $0xad0] sm:$0xf]
        %v1290 = vld [vmem:[%s596 + $0xad4] sm:$0xf]
        %v1291 = vld [vmem:[%s596 + $0xad8] sm:$0xf]
        %v1292 = vld [vmem:[%s596 + $0xadc] sm:$0xf]
        %v1293 = vld [vmem:[%s596 + $0xae0] sm:$0xf]
        %v1294 = vld [vmem:[%s596 + $0xae4] sm:$0xf]
        %v1295 = vld [vmem:[%s596 + $0xae8] sm:$0xf]
        %v1296 = vld [vmem:[%s596 + $0xaec] sm:$0xf]
        %v1297 = vld [vmem:[%s596 + $0xaf0] sm:$0xf]
        %v1298 = vld [vmem:[%s596 + $0xaf4] sm:$0xf]
        %v1299 = vld [vmem:[%s596 + $0xaf8] sm:$0xf]
        %v1300 = vld [vmem:[%s596 + $0xafc] sm:$0xf]
        %v1301 = vld [vmem:[%s596 + $0xb00] sm:$0xf]
        %v1302 = vld [vmem:[%s596 + $0xb04] sm:$0xf]
        %v1303 = vld [vmem:[%s596 + $0xb08] sm:$0xf]
        %v1304 = vld [vmem:[%s596 + $0xb0c] sm:$0xf]
        %v1305 = vld [vmem:[%s596 + $0xb10] sm:$0xf]
        %v1306 = vld [vmem:[%s596 + $0xb14] sm:$0xf]
        %v1307 = vld [vmem:[%s596 + $0xb18] sm:$0xf]
        %v1308 = vld [vmem:[%s596 + $0xb1c] sm:$0xf]
        %v1309 = vld [vmem:[%s596 + $0xb20] sm:$0xf]
        %v1310 = vld [vmem:[%s596 + $0xb24] sm:$0xf]
        %v1311 = vld [vmem:[%s596 + $0xb28] sm:$0xf]
        %v1312 = vld [vmem:[%s596 + $0xb2c] sm:$0xf]
        %v1313 = vld [vmem:[%s596 + $0xb30] sm:$0xf]
        %v1314 = vld [vmem:[%s596 + $0xb34] sm:$0xf]
        %v1315 = vld [vmem:[%s596 + $0xb38] sm:$0xf]
        %v1316 = vld [vmem:[%s596 + $0xb3c] sm:$0xf]
        %v1317 = vld [vmem:[%s596 + $0xb40] sm:$0xf]
        %v1318 = vld [vmem:[%s596 + $0xb44] sm:$0xf]
        %v1319 = vld [vmem:[%s596 + $0xb48] sm:$0xf]
        %v1320 = vld [vmem:[%s596 + $0xb4c] sm:$0xf]
        %v1321 = vld [vmem:[%s596 + $0xb50] sm:$0xf]
        %v1322 = vld [vmem:[%s596 + $0xb54] sm:$0xf]
        %v1323 = vld [vmem:[%s596 + $0xb58] sm:$0xf]
        %v1324 = vld [vmem:[%s596 + $0xb5c] sm:$0xf]
        %v1325 = vld [vmem:[%s596 + $0xb60] sm:$0xf]
        %v1326 = vld [vmem:[%s596 + $0xb64] sm:$0xf]
        %v1327 = vld [vmem:[%s596 + $0xb68] sm:$0xf]
        %v1328 = vld [vmem:[%s596 + $0xb6c] sm:$0xf]
        %v1329 = vld [vmem:[%s596 + $0xb70] sm:$0xf]
        %v1330 = vld [vmem:[%s596 + $0xb74] sm:$0xf]
        %v1331 = vld [vmem:[%s596 + $0xb78] sm:$0xf]
        %v1332 = vld [vmem:[%s596 + $0xb7c] sm:$0xf]
        %v1333 = vld [vmem:[%s596 + $0xb80] sm:$0xf]
        %v1334 = vld [vmem:[%s596 + $0xb84] sm:$0xf]
        %v1335 = vld [vmem:[%s596 + $0xb88] sm:$0xf]
        %v1336 = vld [vmem:[%s596 + $0xb8c] sm:$0xf]
        %v1337 = vld [vmem:[%s596 + $0xb90] sm:$0xf]
        %v1338 = vld [vmem:[%s596 + $0xb94] sm:$0xf]
        %v1339 = vld [vmem:[%s596 + $0xb98] sm:$0xf]
        %v1340 = vld [vmem:[%s596 + $0xb9c] sm:$0xf]
        %v1341 = vld [vmem:[%s596 + $0xba0] sm:$0xf]
        %v1342 = vld [vmem:[%s596 + $0xba4] sm:$0xf]
        %v1343 = vld [vmem:[%s596 + $0xba8] sm:$0xf]
        %v1344 = vld [vmem:[%s596 + $0xbac] sm:$0xf]
        %v1345 = vld [vmem:[%s596 + $0xbb0] sm:$0xf]
        %v1346 = vld [vmem:[%s596 + $0xbb4] sm:$0xf]
        %v1347 = vld [vmem:[%s596 + $0xbb8] sm:$0xf]
        %v1348 = vld [vmem:[%s596 + $0xbbc] sm:$0xf]
        %v1349 = vld [vmem:[%s596 + $0xbc0] sm:$0xf]
        %v1350 = vld [vmem:[%s596 + $0xbc4] sm:$0xf]
        %v1351 = vld [vmem:[%s596 + $0xbc8] sm:$0xf]
        %v1352 = vld [vmem:[%s596 + $0xbcc] sm:$0xf]
        %v1353 = vld [vmem:[%s596 + $0xbd0] sm:$0xf]
        %v1354 = vld [vmem:[%s596 + $0xbd4] sm:$0xf]
        %v1355 = vld [vmem:[%s596 + $0xbd8] sm:$0xf]
        %v1356 = vld [vmem:[%s596 + $0xbdc] sm:$0xf]
        %v1357 = vld [vmem:[%s596 + $0xbe0] sm:$0xf]
        %v1358 = vld [vmem:[%s596 + $0xbe4] sm:$0xf]
        %v1359 = vld [vmem:[%s596 + $0xbe8] sm:$0xf]
        %v1360 = vld [vmem:[%s596 + $0xbec] sm:$0xf]
        %v1361 = vld [vmem:[%s596 + $0xbf0] sm:$0xf]
        %v1362 = vld [vmem:[%s596 + $0xbf4] sm:$0xf]
        %v1363 = vld [vmem:[%s596 + $0xbf8] sm:$0xf]
        %v1364 = vld [vmem:[%s596 + $0xbfc] sm:$0xf]
        %v1365 = vld [vmem:[%s596 + $0xc00] sm:$0xf]
        %v1366 = vld [vmem:[%s596 + $0xc04] sm:$0xf]
        %v1367 = vld [vmem:[%s596 + $0xc08] sm:$0xf]
        %v1368 = vld [vmem:[%s596 + $0xc0c] sm:$0xf]
        %v1369 = vld [vmem:[%s596 + $0xc10] sm:$0xf]
        %v1370 = vld [vmem:[%s596 + $0xc14] sm:$0xf]
        %v1371 = vld [vmem:[%s596 + $0xc18] sm:$0xf]
        %v1372 = vld [vmem:[%s596 + $0xc1c] sm:$0xf]
        %v1373 = vld [vmem:[%s596 + $0xc20] sm:$0xf]
        %v1374 = vld [vmem:[%s596 + $0xc24] sm:$0xf]
        %v1375 = vld [vmem:[%s596 + $0xc28] sm:$0xf]
        %v1376 = vld [vmem:[%s596 + $0xc2c] sm:$0xf]
        %v1377 = vld [vmem:[%s596 + $0xc30] sm:$0xf]
        %v1378 = vld [vmem:[%s596 + $0xc34] sm:$0xf]
        %v1379 = vld [vmem:[%s596 + $0xc38] sm:$0xf]
        %v1380 = vld [vmem:[%s596 + $0xc3c] sm:$0xf]
        %v1381 = vld [vmem:[#allocation2] sm:$0xff]
        %v1382 = vld [vmem:[#allocation2 + $0x8] sm:$0xff]
        %v2167 = vunpack.c.l.b16 %v597
        %v2168 = vunpack.c.l.b16 %v598
        %v2169 = vunpack.c.l.b16 %v599
        %v2170 = vunpack.c.l.b16 %v600
        %v2171 = vunpack.c.l.b16 %v601
        %v2172 = vunpack.c.l.b16 %v602
        %v2173 = vunpack.c.l.b16 %v603
        %v2174 = vunpack.c.l.b16 %v604
        %v2175 = vunpack.c.l.b16 %v605
        %v2176 = vunpack.c.l.b16 %v606
        %v2177 = vunpack.c.l.b16 %v607
        %v2178 = vunpack.c.l.b16 %v608
        %v2179 = vunpack.c.l.b16 %v609
        %v2180 = vunpack.c.l.b16 %v610
        %v2181 = vunpack.c.l.b16 %v611
        %v2182 = vunpack.c.l.b16 %v612
        %v2183 = vunpack.c.l.b16 %v613
        %v2184 = vunpack.c.l.b16 %v614
        %v2185 = vunpack.c.l.b16 %v615
        %v2186 = vunpack.c.l.b16 %v616
        %v2187 = vunpack.c.l.b16 %v617
        %v2188 = vunpack.c.l.b16 %v618
        %v2189 = vunpack.c.l.b16 %v619
        %v2190 = vunpack.c.l.b16 %v620
        %v2191 = vunpack.c.l.b16 %v621
        %v2192 = vunpack.c.l.b16 %v622
        %v2193 = vunpack.c.l.b16 %v623
        %v2194 = vunpack.c.l.b16 %v624
        %v2195 = vunpack.c.l.b16 %v625
        %v2196 = vunpack.c.l.b16 %v626
        %v2197 = vunpack.c.l.b16 %v627
        %v2198 = vunpack.c.l.b16 %v628
        %v2199 = vunpack.c.l.b16 %v629
        %v2200 = vunpack.c.l.b16 %v630
        %v2201 = vunpack.c.l.b16 %v631
        %v2202 = vunpack.c.l.b16 %v632
        %v2203 = vunpack.c.l.b16 %v633
        %v2204 = vunpack.c.l.b16 %v634
        %v2205 = vunpack.c.l.b16 %v635
        %v2206 = vunpack.c.l.b16 %v636
        %v2207 = vunpack.c.l.b16 %v637
        %v2208 = vunpack.c.l.b16 %v638
        %v2209 = vunpack.c.l.b16 %v639
        %v2210 = vunpack.c.l.b16 %v640
        %v2211 = vunpack.c.l.b16 %v641
        %v2212 = vunpack.c.l.b16 %v642
        %v2213 = vunpack.c.l.b16 %v643
        %v2214 = vunpack.c.l.b16 %v644
        %v2215 = vunpack.c.l.b16 %v645
        %v2216 = vunpack.c.l.b16 %v646
        %v2217 = vunpack.c.l.b16 %v647
        %v2218 = vunpack.c.l.b16 %v648
        %v2219 = vunpack.c.l.b16 %v649
        %v2220 = vunpack.c.l.b16 %v650
        %v2221 = vunpack.c.l.b16 %v651
        %v2222 = vunpack.c.l.b16 %v652
        %v2223 = vunpack.c.l.b16 %v653
        %v2224 = vunpack.c.l.b16 %v654
        %v2225 = vunpack.c.l.b16 %v655
        %v2226 = vunpack.c.l.b16 %v656
        %v2227 = vunpack.c.l.b16 %v657
        %v2228 = vunpack.c.l.b16 %v658
        %v2229 = vunpack.c.l.b16 %v659
        %v2230 = vunpack.c.l.b16 %v660
        %v2231 = vunpack.c.l.b16 %v661
        %v2232 = vunpack.c.l.b16 %v662
        %v2233 = vunpack.c.l.b16 %v663
        %v2234 = vunpack.c.l.b16 %v664
        %v2235 = vunpack.c.l.b16 %v665
        %v2236 = vunpack.c.l.b16 %v666
        %v2237 = vunpack.c.l.b16 %v667
        %v2238 = vunpack.c.l.b16 %v668
        %v2239 = vunpack.c.l.b16 %v669
        %v2240 = vunpack.c.l.b16 %v670
        %v2241 = vunpack.c.l.b16 %v671
        %v2242 = vunpack.c.l.b16 %v672
        %v2243 = vunpack.c.l.b16 %v673
        %v2244 = vunpack.c.l.b16 %v674
        %v2245 = vunpack.c.l.b16 %v675
        %v2246 = vunpack.c.l.b16 %v676
        %v2247 = vunpack.c.l.b16 %v677
        %v2248 = vunpack.c.l.b16 %v678
        %v2249 = vunpack.c.l.b16 %v679
        %v2250 = vunpack.c.l.b16 %v680
        %v2251 = vunpack.c.l.b16 %v681
        %v2252 = vunpack.c.l.b16 %v682
        %v2253 = vunpack.c.l.b16 %v683
        %v2254 = vunpack.c.l.b16 %v684
        %v2255 = vunpack.c.l.b16 %v685
        %v2256 = vunpack.c.l.b16 %v686
        %v2257 = vunpack.c.l.b16 %v687
        %v2258 = vunpack.c.l.b16 %v688
        %v2259 = vunpack.c.l.b16 %v689
        %v2260 = vunpack.c.l.b16 %v690
        %v2261 = vunpack.c.l.b16 %v691
        %v2262 = vunpack.c.l.b16 %v692
        %v2263 = vunpack.c.l.b16 %v693
        %v2264 = vunpack.c.l.b16 %v694
        %v2265 = vunpack.c.l.b16 %v695
        %v2266 = vunpack.c.l.b16 %v696
        %v2267 = vunpack.c.l.b16 %v697
        %v2268 = vunpack.c.l.b16 %v698
        %v2269 = vunpack.c.l.b16 %v699
        %v2270 = vunpack.c.l.b16 %v700
        %v2271 = vunpack.c.l.b16 %v701
        %v2272 = vunpack.c.l.b16 %v702
        %v2273 = vunpack.c.l.b16 %v703
        %v2274 = vunpack.c.l.b16 %v704
        %v2275 = vunpack.c.l.b16 %v705
        %v2276 = vunpack.c.l.b16 %v706
        %v2277 = vunpack.c.l.b16 %v707
        %v2278 = vunpack.c.l.b16 %v708
        %v2279 = vunpack.c.l.b16 %v709
        %v2280 = vunpack.c.l.b16 %v710
        %v2281 = vunpack.c.l.b16 %v711
        %v2282 = vunpack.c.l.b16 %v712
        %v2283 = vunpack.c.l.b16 %v713
        %v2284 = vunpack.c.l.b16 %v714
        %v2285 = vunpack.c.l.b16 %v715
        %v2286 = vunpack.c.l.b16 %v716
        %v2287 = vunpack.c.l.b16 %v717
        %v2288 = vunpack.c.l.b16 %v718
        %v2289 = vunpack.c.l.b16 %v719
        %v2290 = vunpack.c.l.b16 %v720
        %v2291 = vunpack.c.l.b16 %v721
        %v2292 = vunpack.c.l.b16 %v722
        %v2293 = vunpack.c.l.b16 %v723
        %v2294 = vunpack.c.l.b16 %v724
        %v2295 = vunpack.c.l.b16 %v725
        %v2296 = vunpack.c.l.b16 %v726
        %v2297 = vunpack.c.l.b16 %v727
        %v2298 = vunpack.c.l.b16 %v728
        %v2299 = vunpack.c.l.b16 %v729
        %v2300 = vunpack.c.l.b16 %v730
        %v2301 = vunpack.c.l.b16 %v731
        %v2302 = vunpack.c.l.b16 %v732
        %v2303 = vunpack.c.l.b16 %v733
        %v2304 = vunpack.c.l.b16 %v734
        %v2305 = vunpack.c.l.b16 %v735
        %v2306 = vunpack.c.l.b16 %v736
        %v2307 = vunpack.c.l.b16 %v737
        %v2308 = vunpack.c.l.b16 %v738
        %v2309 = vunpack.c.l.b16 %v739
        %v2310 = vunpack.c.l.b16 %v740
        %v2311 = vunpack.c.l.b16 %v741
        %v2312 = vunpack.c.l.b16 %v742
        %v2313 = vunpack.c.l.b16 %v743
        %v2314 = vunpack.c.l.b16 %v744
        %v2315 = vunpack.c.l.b16 %v745
        %v2316 = vunpack.c.l.b16 %v746
        %v2317 = vunpack.c.l.b16 %v747
        %v2318 = vunpack.c.l.b16 %v748
        %v2319 = vunpack.c.l.b16 %v749
        %v2320 = vunpack.c.l.b16 %v750
        %v2321 = vunpack.c.l.b16 %v751
        %v2322 = vunpack.c.l.b16 %v752
        %v2323 = vunpack.c.l.b16 %v753
        %v2324 = vunpack.c.l.b16 %v754
        %v2325 = vunpack.c.l.b16 %v755
        %v2326 = vunpack.c.l.b16 %v756
        %v2327 = vunpack.c.l.b16 %v757
        %v2328 = vunpack.c.l.b16 %v758
        %v2329 = vunpack.c.l.b16 %v759
        %v2330 = vunpack.c.l.b16 %v760
        %v2331 = vunpack.c.l.b16 %v761
        %v2332 = vunpack.c.l.b16 %v762
        %v2333 = vunpack.c.l.b16 %v763
        %v2334 = vunpack.c.l.b16 %v764
        %v2335 = vunpack.c.l.b16 %v765
        %v2336 = vunpack.c.l.b16 %v766
        %v2337 = vunpack.c.l.b16 %v767
        %v2338 = vunpack.c.l.b16 %v768
        %v2339 = vunpack.c.l.b16 %v769
        %v2340 = vunpack.c.l.b16 %v770
        %v2341 = vunpack.c.l.b16 %v771
        %v2342 = vunpack.c.l.b16 %v772
        %v2343 = vunpack.c.l.b16 %v773
        %v2344 = vunpack.c.l.b16 %v774
        %v2345 = vunpack.c.l.b16 %v775
        %v2346 = vunpack.c.l.b16 %v776
        %v2347 = vunpack.c.l.b16 %v777
        %v2348 = vunpack.c.l.b16 %v778
        %v2349 = vunpack.c.l.b16 %v779
        %v2350 = vunpack.c.l.b16 %v780
        %v2351 = vunpack.c.l.b16 %v781
        %v2352 = vunpack.c.l.b16 %v782
        %v2353 = vunpack.c.l.b16 %v783
        %v2354 = vunpack.c.l.b16 %v784
        %v2355 = vunpack.c.l.b16 %v785
        %v2356 = vunpack.c.l.b16 %v786
        %v2357 = vunpack.c.l.b16 %v787
        %v2358 = vunpack.c.l.b16 %v788
        %v2359 = vunpack.c.l.b16 %v789
        %v2360 = vunpack.c.l.b16 %v790
        %v2361 = vunpack.c.l.b16 %v791
        %v2362 = vunpack.c.l.b16 %v792
        %v2363 = vunpack.c.l.b16 %v793
        %v2364 = vunpack.c.l.b16 %v794
        %v2365 = vunpack.c.l.b16 %v795
        %v2366 = vunpack.c.l.b16 %v796
        %v2367 = vunpack.c.l.b16 %v797
        %v2368 = vunpack.c.l.b16 %v798
        %v2369 = vunpack.c.l.b16 %v799
        %v2370 = vunpack.c.l.b16 %v800
        %v2371 = vunpack.c.l.b16 %v801
        %v2372 = vunpack.c.l.b16 %v802
        %v2373 = vunpack.c.l.b16 %v803
        %v2374 = vunpack.c.l.b16 %v804
        %v2375 = vunpack.c.l.b16 %v805
        %v2376 = vunpack.c.l.b16 %v806
        %v2377 = vunpack.c.l.b16 %v807
        %v2378 = vunpack.c.l.b16 %v808
        %v2379 = vunpack.c.l.b16 %v809
        %v2380 = vunpack.c.l.b16 %v810
        %v2381 = vunpack.c.l.b16 %v811
        %v2382 = vunpack.c.l.b16 %v812
        %v2383 = vunpack.c.l.b16 %v813
        %v2384 = vunpack.c.l.b16 %v814
        %v2385 = vunpack.c.l.b16 %v815
        %v2386 = vunpack.c.l.b16 %v816
        %v2387 = vunpack.c.l.b16 %v817
        %v2388 = vunpack.c.l.b16 %v818
        %v2389 = vunpack.c.l.b16 %v819
        %v2390 = vunpack.c.l.b16 %v820
        %v2391 = vunpack.c.l.b16 %v821
        %v2392 = vunpack.c.l.b16 %v822
        %v2393 = vunpack.c.l.b16 %v823
        %v2394 = vunpack.c.l.b16 %v824
        %v2395 = vunpack.c.l.b16 %v825
        %v2396 = vunpack.c.l.b16 %v826
        %v2397 = vunpack.c.l.b16 %v827
        %v2398 = vunpack.c.l.b16 %v828
        %v2399 = vunpack.c.l.b16 %v829
        %v2400 = vunpack.c.l.b16 %v830
        %v2401 = vunpack.c.l.b16 %v831
        %v2402 = vunpack.c.l.b16 %v832
        %v2403 = vunpack.c.l.b16 %v833
        %v2404 = vunpack.c.l.b16 %v834
        %v2405 = vunpack.c.l.b16 %v835
        %v2406 = vunpack.c.l.b16 %v836
        %v2407 = vunpack.c.l.b16 %v837
        %v2408 = vunpack.c.l.b16 %v838
        %v2409 = vunpack.c.l.b16 %v839
        %v2410 = vunpack.c.l.b16 %v840
        %v2411 = vunpack.c.l.b16 %v841
        %v2412 = vunpack.c.l.b16 %v842
        %v2413 = vunpack.c.l.b16 %v843
        %v2414 = vunpack.c.l.b16 %v844
        %v2415 = vunpack.c.l.b16 %v845
        %v2416 = vunpack.c.l.b16 %v846
        %v2417 = vunpack.c.l.b16 %v847
        %v2418 = vunpack.c.l.b16 %v848
        %v2419 = vunpack.c.l.b16 %v849
        %v2420 = vunpack.c.l.b16 %v850
        %v2421 = vunpack.c.l.b16 %v851
        %v2422 = vunpack.c.l.b16 %v852
        %v2423 = vunpack.c.l.b16 %v853
        %v2424 = vunpack.c.l.b16 %v854
        %v2425 = vunpack.c.l.b16 %v855
        %v2426 = vunpack.c.l.b16 %v856
        %v2427 = vunpack.c.l.b16 %v857
        %v2428 = vunpack.c.l.b16 %v858
        %v2429 = vunpack.c.l.b16 %v859
        %v2430 = vunpack.c.l.b16 %v860
        %v2431 = vunpack.c.l.b16 %v861
        %v2432 = vunpack.c.l.b16 %v862
        %v2433 = vunpack.c.l.b16 %v863
        %v2434 = vunpack.c.l.b16 %v864
        %v2435 = vunpack.c.l.b16 %v865
        %v2436 = vunpack.c.l.b16 %v866
        %v2437 = vunpack.c.l.b16 %v867
        %v2438 = vunpack.c.l.b16 %v868
        %v2439 = vunpack.c.l.b16 %v869
        %v2440 = vunpack.c.l.b16 %v870
        %v2441 = vunpack.c.l.b16 %v871
        %v2442 = vunpack.c.l.b16 %v872
        %v2443 = vunpack.c.l.b16 %v873
        %v2444 = vunpack.c.l.b16 %v874
        %v2445 = vunpack.c.l.b16 %v875
        %v2446 = vunpack.c.l.b16 %v876
        %v2447 = vunpack.c.l.b16 %v877
        %v2448 = vunpack.c.l.b16 %v878
        %v2449 = vunpack.c.l.b16 %v879
        %v2450 = vunpack.c.l.b16 %v880
        %v2451 = vunpack.c.l.b16 %v881
        %v2452 = vunpack.c.l.b16 %v882
        %v2453 = vunpack.c.l.b16 %v883
        %v2454 = vunpack.c.l.b16 %v884
        %v2455 = vunpack.c.l.b16 %v885
        %v2456 = vunpack.c.l.b16 %v886
        %v2457 = vunpack.c.l.b16 %v887
        %v2458 = vunpack.c.l.b16 %v888
        %v2459 = vunpack.c.l.b16 %v889
        %v2460 = vunpack.c.l.b16 %v890
        %v2461 = vunpack.c.l.b16 %v891
        %v2462 = vunpack.c.l.b16 %v892
        %v2463 = vunpack.c.l.b16 %v893
        %v2464 = vunpack.c.l.b16 %v894
        %v2465 = vunpack.c.l.b16 %v895
        %v2466 = vunpack.c.l.b16 %v896
        %v2467 = vunpack.c.l.b16 %v897
        %v2468 = vunpack.c.l.b16 %v898
        %v2469 = vunpack.c.l.b16 %v899
        %v2470 = vunpack.c.l.b16 %v900
        %v2471 = vunpack.c.l.b16 %v901
        %v2472 = vunpack.c.l.b16 %v902
        %v2473 = vunpack.c.l.b16 %v903
        %v2474 = vunpack.c.l.b16 %v904
        %v2475 = vunpack.c.l.b16 %v905
        %v2476 = vunpack.c.l.b16 %v906
        %v2477 = vunpack.c.l.b16 %v907
        %v2478 = vunpack.c.l.b16 %v908
        %v2479 = vunpack.c.l.b16 %v909
        %v2480 = vunpack.c.l.b16 %v910
        %v2481 = vunpack.c.l.b16 %v911
        %v2482 = vunpack.c.l.b16 %v912
        %v2483 = vunpack.c.l.b16 %v913
        %v2484 = vunpack.c.l.b16 %v914
        %v2485 = vunpack.c.l.b16 %v915
        %v2486 = vunpack.c.l.b16 %v916
        %v2487 = vunpack.c.l.b16 %v917
        %v2488 = vunpack.c.l.b16 %v918
        %v2489 = vunpack.c.l.b16 %v919
        %v2490 = vunpack.c.l.b16 %v920
        %v2491 = vunpack.c.l.b16 %v921
        %v2492 = vunpack.c.l.b16 %v922
        %v2493 = vunpack.c.l.b16 %v923
        %v2494 = vunpack.c.l.b16 %v924
        %v2495 = vunpack.c.l.b16 %v925
        %v2496 = vunpack.c.l.b16 %v926
        %v2497 = vunpack.c.l.b16 %v927
        %v2498 = vunpack.c.l.b16 %v928
        %v2499 = vunpack.c.l.b16 %v929
        %v2500 = vunpack.c.l.b16 %v930
        %v2501 = vunpack.c.l.b16 %v931
        %v2502 = vunpack.c.l.b16 %v932
        %v2503 = vunpack.c.l.b16 %v933
        %v2504 = vunpack.c.l.b16 %v934
        %v2505 = vunpack.c.l.b16 %v935
        %v2506 = vunpack.c.l.b16 %v936
        %v2507 = vunpack.c.l.b16 %v937
        %v2508 = vunpack.c.l.b16 %v938
        %v2509 = vunpack.c.l.b16 %v939
        %v2510 = vunpack.c.l.b16 %v940
        %v2511 = vunpack.c.l.b16 %v941
        %v2512 = vunpack.c.l.b16 %v942
        %v2513 = vunpack.c.l.b16 %v943
        %v2514 = vunpack.c.l.b16 %v944
        %v2515 = vunpack.c.l.b16 %v945
        %v2516 = vunpack.c.l.b16 %v946
        %v2517 = vunpack.c.l.b16 %v947
        %v2518 = vunpack.c.l.b16 %v948
        %v2519 = vunpack.c.l.b16 %v949
        %v2520 = vunpack.c.l.b16 %v950
        %v2521 = vunpack.c.l.b16 %v951
        %v2522 = vunpack.c.l.b16 %v952
        %v2523 = vunpack.c.l.b16 %v953
        %v2524 = vunpack.c.l.b16 %v954
        %v2525 = vunpack.c.l.b16 %v955
        %v2526 = vunpack.c.l.b16 %v956
        %v2527 = vunpack.c.l.b16 %v957
        %v2528 = vunpack.c.l.b16 %v958
        %v2529 = vunpack.c.l.b16 %v959
        %v2530 = vunpack.c.l.b16 %v960
        %v2531 = vunpack.c.l.b16 %v961
        %v2532 = vunpack.c.l.b16 %v962
        %v2533 = vunpack.c.l.b16 %v963
        %v2534 = vunpack.c.l.b16 %v964
        %v2535 = vunpack.c.l.b16 %v965
        %v2536 = vunpack.c.l.b16 %v966
        %v2537 = vunpack.c.l.b16 %v967
        %v2538 = vunpack.c.l.b16 %v968
        %v2539 = vunpack.c.l.b16 %v969
        %v2540 = vunpack.c.l.b16 %v970
        %v2541 = vunpack.c.l.b16 %v971
        %v2542 = vunpack.c.l.b16 %v972
        %v2543 = vunpack.c.l.b16 %v973
        %v2544 = vunpack.c.l.b16 %v974
        %v2545 = vunpack.c.l.b16 %v975
        %v2546 = vunpack.c.l.b16 %v976
        %v2547 = vunpack.c.l.b16 %v977
        %v2548 = vunpack.c.l.b16 %v978
        %v2549 = vunpack.c.l.b16 %v979
        %v2550 = vunpack.c.l.b16 %v980
        %v2551 = vunpack.c.l.b16 %v981
        %v2552 = vunpack.c.l.b16 %v982
        %v2553 = vunpack.c.l.b16 %v983
        %v2554 = vunpack.c.l.b16 %v984
        %v2555 = vunpack.c.l.b16 %v985
        %v2556 = vunpack.c.l.b16 %v986
        %v2557 = vunpack.c.l.b16 %v987
        %v2558 = vunpack.c.l.b16 %v988
        %v2559 = vunpack.c.l.b16 %v989
        %v2560 = vunpack.c.l.b16 %v990
        %v2561 = vunpack.c.l.b16 %v991
        %v2562 = vunpack.c.l.b16 %v992
        %v2563 = vunpack.c.l.b16 %v993
        %v2564 = vunpack.c.l.b16 %v994
        %v2565 = vunpack.c.l.b16 %v995
        %v2566 = vunpack.c.l.b16 %v996
        %v2567 = vunpack.c.l.b16 %v997
        %v2568 = vunpack.c.l.b16 %v998
        %v2569 = vunpack.c.l.b16 %v999
        %v2570 = vunpack.c.l.b16 %v1000
        %v2571 = vunpack.c.l.b16 %v1001
        %v2572 = vunpack.c.l.b16 %v1002
        %v2573 = vunpack.c.l.b16 %v1003
        %v2574 = vunpack.c.l.b16 %v1004
        %v2575 = vunpack.c.l.b16 %v1005
        %v2576 = vunpack.c.l.b16 %v1006
        %v2577 = vunpack.c.l.b16 %v1007
        %v2578 = vunpack.c.l.b16 %v1008
        %v2579 = vunpack.c.l.b16 %v1009
        %v2580 = vunpack.c.l.b16 %v1010
        %v2581 = vunpack.c.l.b16 %v1011
        %v2582 = vunpack.c.l.b16 %v1012
        %v2583 = vunpack.c.l.b16 %v1013
        %v2584 = vunpack.c.l.b16 %v1014
        %v2585 = vunpack.c.l.b16 %v1015
        %v2586 = vunpack.c.l.b16 %v1016
        %v2587 = vunpack.c.l.b16 %v1017
        %v2588 = vunpack.c.l.b16 %v1018
        %v2589 = vunpack.c.l.b16 %v1019
        %v2590 = vunpack.c.l.b16 %v1020
        %v2591 = vunpack.c.l.b16 %v1021
        %v2592 = vunpack.c.l.b16 %v1022
        %v2593 = vunpack.c.l.b16 %v1023
        %v2594 = vunpack.c.l.b16 %v1024
        %v2595 = vunpack.c.l.b16 %v1025
        %v2596 = vunpack.c.l.b16 %v1026
        %v2597 = vunpack.c.l.b16 %v1027
        %v2598 = vunpack.c.l.b16 %v1028
        %v2599 = vunpack.c.l.b16 %v1029
        %v2600 = vunpack.c.l.b16 %v1030
        %v2601 = vunpack.c.l.b16 %v1031
        %v2602 = vunpack.c.l.b16 %v1032
        %v2603 = vunpack.c.l.b16 %v1033
        %v2604 = vunpack.c.l.b16 %v1034
        %v2605 = vunpack.c.l.b16 %v1035
        %v2606 = vunpack.c.l.b16 %v1036
        %v2607 = vunpack.c.l.b16 %v1037
        %v2608 = vunpack.c.l.b16 %v1038
        %v2609 = vunpack.c.l.b16 %v1039
        %v2610 = vunpack.c.l.b16 %v1040
        %v2611 = vunpack.c.l.b16 %v1041
        %v2612 = vunpack.c.l.b16 %v1042
        %v2613 = vunpack.c.l.b16 %v1043
        %v2614 = vunpack.c.l.b16 %v1044
        %v2615 = vunpack.c.l.b16 %v1045
        %v2616 = vunpack.c.l.b16 %v1046
        %v2617 = vunpack.c.l.b16 %v1047
        %v2618 = vunpack.c.l.b16 %v1048
        %v2619 = vunpack.c.l.b16 %v1049
        %v2620 = vunpack.c.l.b16 %v1050
        %v2621 = vunpack.c.l.b16 %v1051
        %v2622 = vunpack.c.l.b16 %v1052
        %v2623 = vunpack.c.l.b16 %v1053
        %v2624 = vunpack.c.l.b16 %v1054
        %v2625 = vunpack.c.l.b16 %v1055
        %v2626 = vunpack.c.l.b16 %v1056
        %v2627 = vunpack.c.l.b16 %v1057
        %v2628 = vunpack.c.l.b16 %v1058
        %v2629 = vunpack.c.l.b16 %v1059
        %v2630 = vunpack.c.l.b16 %v1060
        %v2631 = vunpack.c.l.b16 %v1061
        %v2632 = vunpack.c.l.b16 %v1062
        %v2633 = vunpack.c.l.b16 %v1063
        %v2634 = vunpack.c.l.b16 %v1064
        %v2635 = vunpack.c.l.b16 %v1065
        %v2636 = vunpack.c.l.b16 %v1066
        %v2637 = vunpack.c.l.b16 %v1067
        %v2638 = vunpack.c.l.b16 %v1068
        %v2639 = vunpack.c.l.b16 %v1069
        %v2640 = vunpack.c.l.b16 %v1070
        %v2641 = vunpack.c.l.b16 %v1071
        %v2642 = vunpack.c.l.b16 %v1072
        %v2643 = vunpack.c.l.b16 %v1073
        %v2644 = vunpack.c.l.b16 %v1074
        %v2645 = vunpack.c.l.b16 %v1075
        %v2646 = vunpack.c.l.b16 %v1076
        %v2647 = vunpack.c.l.b16 %v1077
        %v2648 = vunpack.c.l.b16 %v1078
        %v2649 = vunpack.c.l.b16 %v1079
        %v2650 = vunpack.c.l.b16 %v1080
        %v2651 = vunpack.c.l.b16 %v1081
        %v2652 = vunpack.c.l.b16 %v1082
        %v2653 = vunpack.c.l.b16 %v1083
        %v2654 = vunpack.c.l.b16 %v1084
        %v2655 = vunpack.c.l.b16 %v1085
        %v2656 = vunpack.c.l.b16 %v1086
        %v2657 = vunpack.c.l.b16 %v1087
        %v2658 = vunpack.c.l.b16 %v1088
        %v2659 = vunpack.c.l.b16 %v1089
        %v2660 = vunpack.c.l.b16 %v1090
        %v2661 = vunpack.c.l.b16 %v1091
        %v2662 = vunpack.c.l.b16 %v1092
        %v2663 = vunpack.c.l.b16 %v1093
        %v2664 = vunpack.c.l.b16 %v1094
        %v2665 = vunpack.c.l.b16 %v1095
        %v2666 = vunpack.c.l.b16 %v1096
        %v2667 = vunpack.c.l.b16 %v1097
        %v2668 = vunpack.c.l.b16 %v1098
        %v2669 = vunpack.c.l.b16 %v1099
        %v2670 = vunpack.c.l.b16 %v1100
        %v2671 = vunpack.c.l.b16 %v1101
        %v2672 = vunpack.c.l.b16 %v1102
        %v2673 = vunpack.c.l.b16 %v1103
        %v2674 = vunpack.c.l.b16 %v1104
        %v2675 = vunpack.c.l.b16 %v1105
        %v2676 = vunpack.c.l.b16 %v1106
        %v2677 = vunpack.c.l.b16 %v1107
        %v2678 = vunpack.c.l.b16 %v1108
        %v2679 = vunpack.c.l.b16 %v1109
        %v2680 = vunpack.c.l.b16 %v1110
        %v2681 = vunpack.c.l.b16 %v1111
        %v2682 = vunpack.c.l.b16 %v1112
        %v2683 = vunpack.c.l.b16 %v1113
        %v2684 = vunpack.c.l.b16 %v1114
        %v2685 = vunpack.c.l.b16 %v1115
        %v2686 = vunpack.c.l.b16 %v1116
        %v2687 = vunpack.c.l.b16 %v1117
        %v2688 = vunpack.c.l.b16 %v1118
        %v2689 = vunpack.c.l.b16 %v1119
        %v2690 = vunpack.c.l.b16 %v1120
        %v2691 = vunpack.c.l.b16 %v1121
        %v2692 = vunpack.c.l.b16 %v1122
        %v2693 = vunpack.c.l.b16 %v1123
        %v2694 = vunpack.c.l.b16 %v1124
        %v2695 = vunpack.c.l.b16 %v1125
        %v2696 = vunpack.c.l.b16 %v1126
        %v2697 = vunpack.c.l.b16 %v1127
        %v2698 = vunpack.c.l.b16 %v1128
        %v2699 = vunpack.c.l.b16 %v1129
        %v2700 = vunpack.c.l.b16 %v1130
        %v2701 = vunpack.c.l.b16 %v1131
        %v2702 = vunpack.c.l.b16 %v1132
        %v2703 = vunpack.c.l.b16 %v1133
        %v2704 = vunpack.c.l.b16 %v1134
        %v2705 = vunpack.c.l.b16 %v1135
        %v2706 = vunpack.c.l.b16 %v1136
        %v2707 = vunpack.c.l.b16 %v1137
        %v2708 = vunpack.c.l.b16 %v1138
        %v2709 = vunpack.c.l.b16 %v1139
        %v2710 = vunpack.c.l.b16 %v1140
        %v2711 = vunpack.c.l.b16 %v1141
        %v2712 = vunpack.c.l.b16 %v1142
        %v2713 = vunpack.c.l.b16 %v1143
        %v2714 = vunpack.c.l.b16 %v1144
        %v2715 = vunpack.c.l.b16 %v1145
        %v2716 = vunpack.c.l.b16 %v1146
        %v2717 = vunpack.c.l.b16 %v1147
        %v2718 = vunpack.c.l.b16 %v1148
        %v2719 = vunpack.c.l.b16 %v1149
        %v2720 = vunpack.c.l.b16 %v1150
        %v2721 = vunpack.c.l.b16 %v1151
        %v2722 = vunpack.c.l.b16 %v1152
        %v2723 = vunpack.c.l.b16 %v1153
        %v2724 = vunpack.c.l.b16 %v1154
        %v2725 = vunpack.c.l.b16 %v1155
        %v2726 = vunpack.c.l.b16 %v1156
        %v2727 = vunpack.c.l.b16 %v1157
        %v2728 = vunpack.c.l.b16 %v1158
        %v2729 = vunpack.c.l.b16 %v1159
        %v2730 = vunpack.c.l.b16 %v1160
        %v2731 = vunpack.c.l.b16 %v1161
        %v2732 = vunpack.c.l.b16 %v1162
        %v2733 = vunpack.c.l.b16 %v1163
        %v2734 = vunpack.c.l.b16 %v1164
        %v2735 = vunpack.c.l.b16 %v1165
        %v2736 = vunpack.c.l.b16 %v1166
        %v2737 = vunpack.c.l.b16 %v1167
        %v2738 = vunpack.c.l.b16 %v1168
        %v2739 = vunpack.c.l.b16 %v1169
        %v2740 = vunpack.c.l.b16 %v1170
        %v2741 = vunpack.c.l.b16 %v1171
        %v2742 = vunpack.c.l.b16 %v1172
        %v2743 = vunpack.c.l.b16 %v1173
        %v2744 = vunpack.c.l.b16 %v1174
        %v2745 = vunpack.c.l.b16 %v1175
        %v2746 = vunpack.c.l.b16 %v1176
        %v2747 = vunpack.c.l.b16 %v1177
        %v2748 = vunpack.c.l.b16 %v1178
        %v2749 = vunpack.c.l.b16 %v1179
        %v2750 = vunpack.c.l.b16 %v1180
        %v2751 = vunpack.c.l.b16 %v1181
        %v2752 = vunpack.c.l.b16 %v1182
        %v2753 = vunpack.c.l.b16 %v1183
        %v2754 = vunpack.c.l.b16 %v1184
        %v2755 = vunpack.c.l.b16 %v1185
        %v2756 = vunpack.c.l.b16 %v1186
        %v2757 = vunpack.c.l.b16 %v1187
        %v2758 = vunpack.c.l.b16 %v1188
        %v2759 = vunpack.c.l.b16 %v1189
        %v2760 = vunpack.c.l.b16 %v1190
        %v2761 = vunpack.c.l.b16 %v1191
        %v2762 = vunpack.c.l.b16 %v1192
        %v2763 = vunpack.c.l.b16 %v1193
        %v2764 = vunpack.c.l.b16 %v1194
        %v2765 = vunpack.c.l.b16 %v1195
        %v2766 = vunpack.c.l.b16 %v1196
        %v2767 = vunpack.c.l.b16 %v1197
        %v2768 = vunpack.c.l.b16 %v1198
        %v2769 = vunpack.c.l.b16 %v1199
        %v2770 = vunpack.c.l.b16 %v1200
        %v2771 = vunpack.c.l.b16 %v1201
        %v2772 = vunpack.c.l.b16 %v1202
        %v2773 = vunpack.c.l.b16 %v1203
        %v2774 = vunpack.c.l.b16 %v1204
        %v2775 = vunpack.c.l.b16 %v1205
        %v2776 = vunpack.c.l.b16 %v1206
        %v2777 = vunpack.c.l.b16 %v1207
        %v2778 = vunpack.c.l.b16 %v1208
        %v2779 = vunpack.c.l.b16 %v1209
        %v2780 = vunpack.c.l.b16 %v1210
        %v2781 = vunpack.c.l.b16 %v1211
        %v2782 = vunpack.c.l.b16 %v1212
        %v2783 = vunpack.c.l.b16 %v1213
        %v2784 = vunpack.c.l.b16 %v1214
        %v2785 = vunpack.c.l.b16 %v1215
        %v2786 = vunpack.c.l.b16 %v1216
        %v2787 = vunpack.c.l.b16 %v1217
        %v2788 = vunpack.c.l.b16 %v1218
        %v2789 = vunpack.c.l.b16 %v1219
        %v2790 = vunpack.c.l.b16 %v1220
        %v2791 = vunpack.c.l.b16 %v1221
        %v2792 = vunpack.c.l.b16 %v1222
        %v2793 = vunpack.c.l.b16 %v1223
        %v2794 = vunpack.c.l.b16 %v1224
        %v2795 = vunpack.c.l.b16 %v1225
        %v2796 = vunpack.c.l.b16 %v1226
        %v2797 = vunpack.c.l.b16 %v1227
        %v2798 = vunpack.c.l.b16 %v1228
        %v2799 = vunpack.c.l.b16 %v1229
        %v2800 = vunpack.c.l.b16 %v1230
        %v2801 = vunpack.c.l.b16 %v1231
        %v2802 = vunpack.c.l.b16 %v1232
        %v2803 = vunpack.c.l.b16 %v1233
        %v2804 = vunpack.c.l.b16 %v1234
        %v2805 = vunpack.c.l.b16 %v1235
        %v2806 = vunpack.c.l.b16 %v1236
        %v2807 = vunpack.c.l.b16 %v1237
        %v2808 = vunpack.c.l.b16 %v1238
        %v2809 = vunpack.c.l.b16 %v1239
        %v2810 = vunpack.c.l.b16 %v1240
        %v2811 = vunpack.c.l.b16 %v1241
        %v2812 = vunpack.c.l.b16 %v1242
        %v2813 = vunpack.c.l.b16 %v1243
        %v2814 = vunpack.c.l.b16 %v1244
        %v2815 = vunpack.c.l.b16 %v1245
        %v2816 = vunpack.c.l.b16 %v1246
        %v2817 = vunpack.c.l.b16 %v1247
        %v2818 = vunpack.c.l.b16 %v1248
        %v2819 = vunpack.c.l.b16 %v1249
        %v2820 = vunpack.c.l.b16 %v1250
        %v2821 = vunpack.c.l.b16 %v1251
        %v2822 = vunpack.c.l.b16 %v1252
        %v2823 = vunpack.c.l.b16 %v1253
        %v2824 = vunpack.c.l.b16 %v1254
        %v2825 = vunpack.c.l.b16 %v1255
        %v2826 = vunpack.c.l.b16 %v1256
        %v2827 = vunpack.c.l.b16 %v1257
        %v2828 = vunpack.c.l.b16 %v1258
        %v2829 = vunpack.c.l.b16 %v1259
        %v2830 = vunpack.c.l.b16 %v1260
        %v2831 = vunpack.c.l.b16 %v1261
        %v2832 = vunpack.c.l.b16 %v1262
        %v2833 = vunpack.c.l.b16 %v1263
        %v2834 = vunpack.c.l.b16 %v1264
        %v2835 = vunpack.c.l.b16 %v1265
        %v2836 = vunpack.c.l.b16 %v1266
        %v2837 = vunpack.c.l.b16 %v1267
        %v2838 = vunpack.c.l.b16 %v1268
        %v2839 = vunpack.c.l.b16 %v1269
        %v2840 = vunpack.c.l.b16 %v1270
        %v2841 = vunpack.c.l.b16 %v1271
        %v2842 = vunpack.c.l.b16 %v1272
        %v2843 = vunpack.c.l.b16 %v1273
        %v2844 = vunpack.c.l.b16 %v1274
        %v2845 = vunpack.c.l.b16 %v1275
        %v2846 = vunpack.c.l.b16 %v1276
        %v2847 = vunpack.c.l.b16 %v1277
        %v2848 = vunpack.c.l.b16 %v1278
        %v2849 = vunpack.c.l.b16 %v1279
        %v2850 = vunpack.c.l.b16 %v1280
        %v2851 = vunpack.c.l.b16 %v1281
        %v2852 = vunpack.c.l.b16 %v1282
        %v2853 = vunpack.c.l.b16 %v1283
        %v2854 = vunpack.c.l.b16 %v1284
        %v2855 = vunpack.c.l.b16 %v1285
        %v2856 = vunpack.c.l.b16 %v1286
        %v2857 = vunpack.c.l.b16 %v1287
        %v2858 = vunpack.c.l.b16 %v1288
        %v2859 = vunpack.c.l.b16 %v1289
        %v2860 = vunpack.c.l.b16 %v1290
        %v2861 = vunpack.c.l.b16 %v1291
        %v2862 = vunpack.c.l.b16 %v1292
        %v2863 = vunpack.c.l.b16 %v1293
        %v2864 = vunpack.c.l.b16 %v1294
        %v2865 = vunpack.c.l.b16 %v1295
        %v2866 = vunpack.c.l.b16 %v1296
        %v2867 = vunpack.c.l.b16 %v1297
        %v2868 = vunpack.c.l.b16 %v1298
        %v2869 = vunpack.c.l.b16 %v1299
        %v2870 = vunpack.c.l.b16 %v1300
        %v2871 = vunpack.c.l.b16 %v1301
        %v2872 = vunpack.c.l.b16 %v1302
        %v2873 = vunpack.c.l.b16 %v1303
        %v2874 = vunpack.c.l.b16 %v1304
        %v2875 = vunpack.c.l.b16 %v1305
        %v2876 = vunpack.c.l.b16 %v1306
        %v2877 = vunpack.c.l.b16 %v1307
        %v2878 = vunpack.c.l.b16 %v1308
        %v2879 = vunpack.c.l.b16 %v1309
        %v2880 = vunpack.c.l.b16 %v1310
        %v2881 = vunpack.c.l.b16 %v1311
        %v2882 = vunpack.c.l.b16 %v1312
        %v2883 = vunpack.c.l.b16 %v1313
        %v2884 = vunpack.c.l.b16 %v1314
        %v2885 = vunpack.c.l.b16 %v1315
        %v2886 = vunpack.c.l.b16 %v1316
        %v2887 = vunpack.c.l.b16 %v1317
        %v2888 = vunpack.c.l.b16 %v1318
        %v2889 = vunpack.c.l.b16 %v1319
        %v2890 = vunpack.c.l.b16 %v1320
        %v2891 = vunpack.c.l.b16 %v1321
        %v2892 = vunpack.c.l.b16 %v1322
        %v2893 = vunpack.c.l.b16 %v1323
        %v2894 = vunpack.c.l.b16 %v1324
        %v2895 = vunpack.c.l.b16 %v1325
        %v2896 = vunpack.c.l.b16 %v1326
        %v2897 = vunpack.c.l.b16 %v1327
        %v2898 = vunpack.c.l.b16 %v1328
        %v2899 = vunpack.c.l.b16 %v1329
        %v2900 = vunpack.c.l.b16 %v1330
        %v2901 = vunpack.c.l.b16 %v1331
        %v2902 = vunpack.c.l.b16 %v1332
        %v2903 = vunpack.c.l.b16 %v1333
        %v2904 = vunpack.c.l.b16 %v1334
        %v2905 = vunpack.c.l.b16 %v1335
        %v2906 = vunpack.c.l.b16 %v1336
        %v2907 = vunpack.c.l.b16 %v1337
        %v2908 = vunpack.c.l.b16 %v1338
        %v2909 = vunpack.c.l.b16 %v1339
        %v2910 = vunpack.c.l.b16 %v1340
        %v2911 = vunpack.c.l.b16 %v1341
        %v2912 = vunpack.c.l.b16 %v1342
        %v2913 = vunpack.c.l.b16 %v1343
        %v2914 = vunpack.c.l.b16 %v1344
        %v2915 = vunpack.c.l.b16 %v1345
        %v2916 = vunpack.c.l.b16 %v1346
        %v2917 = vunpack.c.l.b16 %v1347
        %v2918 = vunpack.c.l.b16 %v1348
        %v2919 = vunpack.c.l.b16 %v1349
        %v2920 = vunpack.c.l.b16 %v1350
        %v2921 = vunpack.c.l.b16 %v1351
        %v2922 = vunpack.c.l.b16 %v1352
        %v2923 = vunpack.c.l.b16 %v1353
        %v2924 = vunpack.c.l.b16 %v1354
        %v2925 = vunpack.c.l.b16 %v1355
        %v2926 = vunpack.c.l.b16 %v1356
        %v2927 = vunpack.c.l.b16 %v1357
        %v2928 = vunpack.c.l.b16 %v1358
        %v2929 = vunpack.c.l.b16 %v1359
        %v2930 = vunpack.c.l.b16 %v1360
        %v2931 = vunpack.c.l.b16 %v1361
        %v2932 = vunpack.c.l.b16 %v1362
        %v2933 = vunpack.c.l.b16 %v1363
        %v2934 = vunpack.c.l.b16 %v1364
        %v2935 = vunpack.c.l.b16 %v1365
        %v2936 = vunpack.c.l.b16 %v1366
        %v2937 = vunpack.c.l.b16 %v1367
        %v2938 = vunpack.c.l.b16 %v1368
        %v2939 = vunpack.c.l.b16 %v1369
        %v2940 = vunpack.c.l.b16 %v1370
        %v2941 = vunpack.c.l.b16 %v1371
        %v2942 = vunpack.c.l.b16 %v1372
        %v2943 = vunpack.c.l.b16 %v1373
        %v2944 = vunpack.c.l.b16 %v1374
        %v2945 = vunpack.c.l.b16 %v1375
        %v2946 = vunpack.c.l.b16 %v1376
        %v2947 = vunpack.c.l.b16 %v1377
        %v2948 = vunpack.c.l.b16 %v1378
        %v2949 = vunpack.c.l.b16 %v1379
        %v2950 = vunpack.c.l.b16 %v1380
        %v2951 = vpack.c.b16 %v2168, %v2167
        %v2952 = vpack.c.b16 %v2170, %v2169
        %v2953 = vpack.c.b16 %v2172, %v2171
        %v2954 = vpack.c.b16 %v2174, %v2173
        %v2955 = vpack.c.b16 %v2176, %v2175
        %v2956 = vpack.c.b16 %v2178, %v2177
        %v2957 = vpack.c.b16 %v2180, %v2179
        %v2958 = vpack.c.b16 %v2182, %v2181
        %v2959 = vpack.c.b16 %v2184, %v2183
        %v2960 = vpack.c.b16 %v2186, %v2185
        %v2961 = vpack.c.b16 %v2188, %v2187
        %v2962 = vpack.c.b16 %v2190, %v2189
        %v2963 = vpack.c.b16 %v2192, %v2191
        %v2964 = vpack.c.b16 %v2194, %v2193
        %v2965 = vpack.c.b16 %v2196, %v2195
        %v2966 = vpack.c.b16 %v2198, %v2197
        %v2967 = vpack.c.b16 %v2200, %v2199
        %v2968 = vpack.c.b16 %v2202, %v2201
        %v2969 = vpack.c.b16 %v2204, %v2203
        %v2970 = vpack.c.b16 %v2206, %v2205
        %v2971 = vpack.c.b16 %v2208, %v2207
        %v2972 = vpack.c.b16 %v2210, %v2209
        %v2973 = vpack.c.b16 %v2212, %v2211
        %v2974 = vpack.c.b16 %v2214, %v2213
        %v2975 = vpack.c.b16 %v2216, %v2215
        %v2976 = vpack.c.b16 %v2218, %v2217
        %v2977 = vpack.c.b16 %v2220, %v2219
        %v2978 = vpack.c.b16 %v2222, %v2221
        %v2979 = vpack.c.b16 %v2224, %v2223
        %v2980 = vpack.c.b16 %v2226, %v2225
        %v2981 = vpack.c.b16 %v2228, %v2227
        %v2982 = vpack.c.b16 %v2230, %v2229
        %v2983 = vpack.c.b16 %v2232, %v2231
        %v2984 = vpack.c.b16 %v2234, %v2233
        %v2985 = vpack.c.b16 %v2236, %v2235
        %v2986 = vpack.c.b16 %v2238, %v2237
        %v2987 = vpack.c.b16 %v2240, %v2239
        %v2988 = vpack.c.b16 %v2242, %v2241
        %v2989 = vpack.c.b16 %v2244, %v2243
        %v2990 = vpack.c.b16 %v2246, %v2245
        %v2991 = vpack.c.b16 %v2248, %v2247
        %v2992 = vpack.c.b16 %v2250, %v2249
        %v2993 = vpack.c.b16 %v2252, %v2251
        %v2994 = vpack.c.b16 %v2254, %v2253
        %v2995 = vpack.c.b16 %v2256, %v2255
        %v2996 = vpack.c.b16 %v2258, %v2257
        %v2997 = vpack.c.b16 %v2260, %v2259
        %v2998 = vpack.c.b16 %v2262, %v2261
        %v2999 = vpack.c.b16 %v2264, %v2263
        %v3000 = vpack.c.b16 %v2266, %v2265
        %v3001 = vpack.c.b16 %v2268, %v2267
        %v3002 = vpack.c.b16 %v2270, %v2269
        %v3003 = vpack.c.b16 %v2272, %v2271
        %v3004 = vpack.c.b16 %v2274, %v2273
        %v3005 = vpack.c.b16 %v2276, %v2275
        %v3006 = vpack.c.b16 %v2278, %v2277
        %v3007 = vpack.c.b16 %v2280, %v2279
        %v3008 = vpack.c.b16 %v2282, %v2281
        %v3009 = vpack.c.b16 %v2284, %v2283
        %v3010 = vpack.c.b16 %v2286, %v2285
        %v3011 = vpack.c.b16 %v2288, %v2287
        %v3012 = vpack.c.b16 %v2290, %v2289
        %v3013 = vpack.c.b16 %v2292, %v2291
        %v3014 = vpack.c.b16 %v2294, %v2293
        %v3015 = vpack.c.b16 %v2296, %v2295
        %v3016 = vpack.c.b16 %v2298, %v2297
        %v3017 = vpack.c.b16 %v2300, %v2299
        %v3018 = vpack.c.b16 %v2302, %v2301
        %v3019 = vpack.c.b16 %v2304, %v2303
        %v3020 = vpack.c.b16 %v2306, %v2305
        %v3021 = vpack.c.b16 %v2308, %v2307
        %v3022 = vpack.c.b16 %v2310, %v2309
        %v3023 = vpack.c.b16 %v2312, %v2311
        %v3024 = vpack.c.b16 %v2314, %v2313
        %v3025 = vpack.c.b16 %v2316, %v2315
        %v3026 = vpack.c.b16 %v2318, %v2317
        %v3027 = vpack.c.b16 %v2320, %v2319
        %v3028 = vpack.c.b16 %v2322, %v2321
        %v3029 = vpack.c.b16 %v2324, %v2323
        %v3030 = vpack.c.b16 %v2326, %v2325
        %v3031 = vpack.c.b16 %v2328, %v2327
        %v3032 = vpack.c.b16 %v2330, %v2329
        %v3033 = vpack.c.b16 %v2332, %v2331
        %v3034 = vpack.c.b16 %v2334, %v2333
        %v3035 = vpack.c.b16 %v2336, %v2335
        %v3036 = vpack.c.b16 %v2338, %v2337
        %v3037 = vpack.c.b16 %v2340, %v2339
        %v3038 = vpack.c.b16 %v2342, %v2341
        %v3039 = vpack.c.b16 %v2344, %v2343
        %v3040 = vpack.c.b16 %v2346, %v2345
        %v3041 = vpack.c.b16 %v2348, %v2347
        %v3042 = vpack.c.b16 %v2350, %v2349
        %v3043 = vpack.c.b16 %v2352, %v2351
        %v3044 = vpack.c.b16 %v2354, %v2353
        %v3045 = vpack.c.b16 %v2356, %v2355
        %v3046 = vpack.c.b16 %v2358, %v2357
        %v3047 = vpack.c.b16 %v2360, %v2359
        %v3048 = vpack.c.b16 %v2362, %v2361
        %v3049 = vpack.c.b16 %v2364, %v2363
        %v3050 = vpack.c.b16 %v2366, %v2365
        %v3051 = vpack.c.b16 %v2368, %v2367
        %v3052 = vpack.c.b16 %v2370, %v2369
        %v3053 = vpack.c.b16 %v2372, %v2371
        %v3054 = vpack.c.b16 %v2374, %v2373
        %v3055 = vpack.c.b16 %v2376, %v2375
        %v3056 = vpack.c.b16 %v2378, %v2377
        %v3057 = vpack.c.b16 %v2380, %v2379
        %v3058 = vpack.c.b16 %v2382, %v2381
        %v3059 = vpack.c.b16 %v2384, %v2383
        %v3060 = vpack.c.b16 %v2386, %v2385
        %v3061 = vpack.c.b16 %v2388, %v2387
        %v3062 = vpack.c.b16 %v2390, %v2389
        %v3063 = vpack.c.b16 %v2392, %v2391
        %v3064 = vpack.c.b16 %v2394, %v2393
        %v3065 = vpack.c.b16 %v2396, %v2395
        %v3066 = vpack.c.b16 %v2398, %v2397
        %v3067 = vpack.c.b16 %v2400, %v2399
        %v3068 = vpack.c.b16 %v2402, %v2401
        %v3069 = vpack.c.b16 %v2404, %v2403
        %v3070 = vpack.c.b16 %v2406, %v2405
        %v3071 = vpack.c.b16 %v2408, %v2407
        %v3072 = vpack.c.b16 %v2410, %v2409
        %v3073 = vpack.c.b16 %v2412, %v2411
        %v3074 = vpack.c.b16 %v2414, %v2413
        %v3075 = vpack.c.b16 %v2416, %v2415
        %v3076 = vpack.c.b16 %v2418, %v2417
        %v3077 = vpack.c.b16 %v2420, %v2419
        %v3078 = vpack.c.b16 %v2422, %v2421
        %v3079 = vpack.c.b16 %v2424, %v2423
        %v3080 = vpack.c.b16 %v2426, %v2425
        %v3081 = vpack.c.b16 %v2428, %v2427
        %v3082 = vpack.c.b16 %v2430, %v2429
        %v3083 = vpack.c.b16 %v2432, %v2431
        %v3084 = vpack.c.b16 %v2434, %v2433
        %v3085 = vpack.c.b16 %v2436, %v2435
        %v3086 = vpack.c.b16 %v2438, %v2437
        %v3087 = vpack.c.b16 %v2440, %v2439
        %v3088 = vpack.c.b16 %v2442, %v2441
        %v3089 = vpack.c.b16 %v2444, %v2443
        %v3090 = vpack.c.b16 %v2446, %v2445
        %v3091 = vpack.c.b16 %v2448, %v2447
        %v3092 = vpack.c.b16 %v2450, %v2449
        %v3093 = vpack.c.b16 %v2452, %v2451
        %v3094 = vpack.c.b16 %v2454, %v2453
        %v3095 = vpack.c.b16 %v2456, %v2455
        %v3096 = vpack.c.b16 %v2458, %v2457
        %v3097 = vpack.c.b16 %v2460, %v2459
        %v3098 = vpack.c.b16 %v2462, %v2461
        %v3099 = vpack.c.b16 %v2464, %v2463
        %v3100 = vpack.c.b16 %v2466, %v2465
        %v3101 = vpack.c.b16 %v2468, %v2467
        %v3102 = vpack.c.b16 %v2470, %v2469
        %v3103 = vpack.c.b16 %v2472, %v2471
        %v3104 = vpack.c.b16 %v2474, %v2473
        %v3105 = vpack.c.b16 %v2476, %v2475
        %v3106 = vpack.c.b16 %v2478, %v2477
        %v3107 = vpack.c.b16 %v2480, %v2479
        %v3108 = vpack.c.b16 %v2482, %v2481
        %v3109 = vpack.c.b16 %v2484, %v2483
        %v3110 = vpack.c.b16 %v2486, %v2485
        %v3111 = vpack.c.b16 %v2488, %v2487
        %v3112 = vpack.c.b16 %v2490, %v2489
        %v3113 = vpack.c.b16 %v2492, %v2491
        %v3114 = vpack.c.b16 %v2494, %v2493
        %v3115 = vpack.c.b16 %v2496, %v2495
        %v3116 = vpack.c.b16 %v2498, %v2497
        %v3117 = vpack.c.b16 %v2500, %v2499
        %v3118 = vpack.c.b16 %v2502, %v2501
        %v3119 = vpack.c.b16 %v2504, %v2503
        %v3120 = vpack.c.b16 %v2506, %v2505
        %v3121 = vpack.c.b16 %v2508, %v2507
        %v3122 = vpack.c.b16 %v2510, %v2509
        %v3123 = vpack.c.b16 %v2512, %v2511
        %v3124 = vpack.c.b16 %v2514, %v2513
        %v3125 = vpack.c.b16 %v2516, %v2515
        %v3126 = vpack.c.b16 %v2518, %v2517
        %v3127 = vpack.c.b16 %v2520, %v2519
        %v3128 = vpack.c.b16 %v2522, %v2521
        %v3129 = vpack.c.b16 %v2524, %v2523
        %v3130 = vpack.c.b16 %v2526, %v2525
        %v3131 = vpack.c.b16 %v2528, %v2527
        %v3132 = vpack.c.b16 %v2530, %v2529
        %v3133 = vpack.c.b16 %v2532, %v2531
        %v3134 = vpack.c.b16 %v2534, %v2533
        %v3135 = vpack.c.b16 %v2536, %v2535
        %v3136 = vpack.c.b16 %v2538, %v2537
        %v3137 = vpack.c.b16 %v2540, %v2539
        %v3138 = vpack.c.b16 %v2542, %v2541
        %v3139 = vpack.c.b16 %v2544, %v2543
        %v3140 = vpack.c.b16 %v2546, %v2545
        %v3141 = vpack.c.b16 %v2548, %v2547
        %v3142 = vpack.c.b16 %v2550, %v2549
        %v3143 = vpack.c.b16 %v2552, %v2551
        %v3144 = vpack.c.b16 %v2554, %v2553
        %v3145 = vpack.c.b16 %v2556, %v2555
        %v3146 = vpack.c.b16 %v2558, %v2557
        %v3147 = vpack.c.b16 %v2560, %v2559
        %v3148 = vpack.c.b16 %v2562, %v2561
        %v3149 = vpack.c.b16 %v2564, %v2563
        %v3150 = vpack.c.b16 %v2566, %v2565
        %v3151 = vpack.c.b16 %v2568, %v2567
        %v3152 = vpack.c.b16 %v2570, %v2569
        %v3153 = vpack.c.b16 %v2572, %v2571
        %v3154 = vpack.c.b16 %v2574, %v2573
        %v3155 = vpack.c.b16 %v2576, %v2575
        %v3156 = vpack.c.b16 %v2578, %v2577
        %v3157 = vpack.c.b16 %v2580, %v2579
        %v3158 = vpack.c.b16 %v2582, %v2581
        %v3159 = vpack.c.b16 %v2584, %v2583
        %v3160 = vpack.c.b16 %v2586, %v2585
        %v3161 = vpack.c.b16 %v2588, %v2587
        %v3162 = vpack.c.b16 %v2590, %v2589
        %v3163 = vpack.c.b16 %v2592, %v2591
        %v3164 = vpack.c.b16 %v2594, %v2593
        %v3165 = vpack.c.b16 %v2596, %v2595
        %v3166 = vpack.c.b16 %v2598, %v2597
        %v3167 = vpack.c.b16 %v2600, %v2599
        %v3168 = vpack.c.b16 %v2602, %v2601
        %v3169 = vpack.c.b16 %v2604, %v2603
        %v3170 = vpack.c.b16 %v2606, %v2605
        %v3171 = vpack.c.b16 %v2608, %v2607
        %v3172 = vpack.c.b16 %v2610, %v2609
        %v3173 = vpack.c.b16 %v2612, %v2611
        %v3174 = vpack.c.b16 %v2614, %v2613
        %v3175 = vpack.c.b16 %v2616, %v2615
        %v3176 = vpack.c.b16 %v2618, %v2617
        %v3177 = vpack.c.b16 %v2620, %v2619
        %v3178 = vpack.c.b16 %v2622, %v2621
        %v3179 = vpack.c.b16 %v2624, %v2623
        %v3180 = vpack.c.b16 %v2626, %v2625
        %v3181 = vpack.c.b16 %v2628, %v2627
        %v3182 = vpack.c.b16 %v2630, %v2629
        %v3183 = vpack.c.b16 %v2632, %v2631
        %v3184 = vpack.c.b16 %v2634, %v2633
        %v3185 = vpack.c.b16 %v2636, %v2635
        %v3186 = vpack.c.b16 %v2638, %v2637
        %v3187 = vpack.c.b16 %v2640, %v2639
        %v3188 = vpack.c.b16 %v2642, %v2641
        %v3189 = vpack.c.b16 %v2644, %v2643
        %v3190 = vpack.c.b16 %v2646, %v2645
        %v3191 = vpack.c.b16 %v2648, %v2647
        %v3192 = vpack.c.b16 %v2650, %v2649
        %v3193 = vpack.c.b16 %v2652, %v2651
        %v3194 = vpack.c.b16 %v2654, %v2653
        %v3195 = vpack.c.b16 %v2656, %v2655
        %v3196 = vpack.c.b16 %v2658, %v2657
        %v3197 = vpack.c.b16 %v2660, %v2659
        %v3198 = vpack.c.b16 %v2662, %v2661
        %v3199 = vpack.c.b16 %v2664, %v2663
        %v3200 = vpack.c.b16 %v2666, %v2665
        %v3201 = vpack.c.b16 %v2668, %v2667
        %v3202 = vpack.c.b16 %v2670, %v2669
        %v3203 = vpack.c.b16 %v2672, %v2671
        %v3204 = vpack.c.b16 %v2674, %v2673
        %v3205 = vpack.c.b16 %v2676, %v2675
        %v3206 = vpack.c.b16 %v2678, %v2677
        %v3207 = vpack.c.b16 %v2680, %v2679
        %v3208 = vpack.c.b16 %v2682, %v2681
        %v3209 = vpack.c.b16 %v2684, %v2683
        %v3210 = vpack.c.b16 %v2686, %v2685
        %v3211 = vpack.c.b16 %v2688, %v2687
        %v3212 = vpack.c.b16 %v2690, %v2689
        %v3213 = vpack.c.b16 %v2692, %v2691
        %v3214 = vpack.c.b16 %v2694, %v2693
        %v3215 = vpack.c.b16 %v2696, %v2695
        %v3216 = vpack.c.b16 %v2698, %v2697
        %v3217 = vpack.c.b16 %v2700, %v2699
        %v3218 = vpack.c.b16 %v2702, %v2701
        %v3219 = vpack.c.b16 %v2704, %v2703
        %v3220 = vpack.c.b16 %v2706, %v2705
        %v3221 = vpack.c.b16 %v2708, %v2707
        %v3222 = vpack.c.b16 %v2710, %v2709
        %v3223 = vpack.c.b16 %v2712, %v2711
        %v3224 = vpack.c.b16 %v2714, %v2713
        %v3225 = vpack.c.b16 %v2716, %v2715
        %v3226 = vpack.c.b16 %v2718, %v2717
        %v3227 = vpack.c.b16 %v2720, %v2719
        %v3228 = vpack.c.b16 %v2722, %v2721
        %v3229 = vpack.c.b16 %v2724, %v2723
        %v3230 = vpack.c.b16 %v2726, %v2725
        %v3231 = vpack.c.b16 %v2728, %v2727
        %v3232 = vpack.c.b16 %v2730, %v2729
        %v3233 = vpack.c.b16 %v2732, %v2731
        %v3234 = vpack.c.b16 %v2734, %v2733
        %v3235 = vpack.c.b16 %v2736, %v2735
        %v3236 = vpack.c.b16 %v2738, %v2737
        %v3237 = vpack.c.b16 %v2740, %v2739
        %v3238 = vpack.c.b16 %v2742, %v2741
        %v3239 = vpack.c.b16 %v2744, %v2743
        %v3240 = vpack.c.b16 %v2746, %v2745
        %v3241 = vpack.c.b16 %v2748, %v2747
        %v3242 = vpack.c.b16 %v2750, %v2749
        %v3243 = vpack.c.b16 %v2752, %v2751
        %v3244 = vpack.c.b16 %v2754, %v2753
        %v3245 = vpack.c.b16 %v2756, %v2755
        %v3246 = vpack.c.b16 %v2758, %v2757
        %v3247 = vpack.c.b16 %v2760, %v2759
        %v3248 = vpack.c.b16 %v2762, %v2761
        %v3249 = vpack.c.b16 %v2764, %v2763
        %v3250 = vpack.c.b16 %v2766, %v2765
        %v3251 = vpack.c.b16 %v2768, %v2767
        %v3252 = vpack.c.b16 %v2770, %v2769
        %v3253 = vpack.c.b16 %v2772, %v2771
        %v3254 = vpack.c.b16 %v2774, %v2773
        %v3255 = vpack.c.b16 %v2776, %v2775
        %v3256 = vpack.c.b16 %v2778, %v2777
        %v3257 = vpack.c.b16 %v2780, %v2779
        %v3258 = vpack.c.b16 %v2782, %v2781
        %v3259 = vpack.c.b16 %v2784, %v2783
        %v3260 = vpack.c.b16 %v2786, %v2785
        %v3261 = vpack.c.b16 %v2788, %v2787
        %v3262 = vpack.c.b16 %v2790, %v2789
        %v3263 = vpack.c.b16 %v2792, %v2791
        %v3264 = vpack.c.b16 %v2794, %v2793
        %v3265 = vpack.c.b16 %v2796, %v2795
        %v3266 = vpack.c.b16 %v2798, %v2797
        %v3267 = vpack.c.b16 %v2800, %v2799
        %v3268 = vpack.c.b16 %v2802, %v2801
        %v3269 = vpack.c.b16 %v2804, %v2803
        %v3270 = vpack.c.b16 %v2806, %v2805
        %v3271 = vpack.c.b16 %v2808, %v2807
        %v3272 = vpack.c.b16 %v2810, %v2809
        %v3273 = vpack.c.b16 %v2812, %v2811
        %v3274 = vpack.c.b16 %v2814, %v2813
        %v3275 = vpack.c.b16 %v2816, %v2815
        %v3276 = vpack.c.b16 %v2818, %v2817
        %v3277 = vpack.c.b16 %v2820, %v2819
        %v3278 = vpack.c.b16 %v2822, %v2821
        %v3279 = vpack.c.b16 %v2824, %v2823
        %v3280 = vpack.c.b16 %v2826, %v2825
        %v3281 = vpack.c.b16 %v2828, %v2827
        %v3282 = vpack.c.b16 %v2830, %v2829
        %v3283 = vpack.c.b16 %v2832, %v2831
        %v3284 = vpack.c.b16 %v2834, %v2833
        %v3285 = vpack.c.b16 %v2836, %v2835
        %v3286 = vpack.c.b16 %v2838, %v2837
        %v3287 = vpack.c.b16 %v2840, %v2839
        %v3288 = vpack.c.b16 %v2842, %v2841
        %v3289 = vpack.c.b16 %v2844, %v2843
        %v3290 = vpack.c.b16 %v2846, %v2845
        %v3291 = vpack.c.b16 %v2848, %v2847
        %v3292 = vpack.c.b16 %v2850, %v2849
        %v3293 = vpack.c.b16 %v2852, %v2851
        %v3294 = vpack.c.b16 %v2854, %v2853
        %v3295 = vpack.c.b16 %v2856, %v2855
        %v3296 = vpack.c.b16 %v2858, %v2857
        %v3297 = vpack.c.b16 %v2860, %v2859
        %v3298 = vpack.c.b16 %v2862, %v2861
        %v3299 = vpack.c.b16 %v2864, %v2863
        %v3300 = vpack.c.b16 %v2866, %v2865
        %v3301 = vpack.c.b16 %v2868, %v2867
        %v3302 = vpack.c.b16 %v2870, %v2869
        %v3303 = vpack.c.b16 %v2872, %v2871
        %v3304 = vpack.c.b16 %v2874, %v2873
        %v3305 = vpack.c.b16 %v2876, %v2875
        %v3306 = vpack.c.b16 %v2878, %v2877
        %v3307 = vpack.c.b16 %v2880, %v2879
        %v3308 = vpack.c.b16 %v2882, %v2881
        %v3309 = vpack.c.b16 %v2884, %v2883
        %v3310 = vpack.c.b16 %v2886, %v2885
        %v3311 = vpack.c.b16 %v2888, %v2887
        %v3312 = vpack.c.b16 %v2890, %v2889
        %v3313 = vpack.c.b16 %v2892, %v2891
        %v3314 = vpack.c.b16 %v2894, %v2893
        %v3315 = vpack.c.b16 %v2896, %v2895
        %v3316 = vpack.c.b16 %v2898, %v2897
        %v3317 = vpack.c.b16 %v2900, %v2899
        %v3318 = vpack.c.b16 %v2902, %v2901
        %v3319 = vpack.c.b16 %v2904, %v2903
        %v3320 = vpack.c.b16 %v2906, %v2905
        %v3321 = vpack.c.b16 %v2908, %v2907
        %v3322 = vpack.c.b16 %v2910, %v2909
        %v3323 = vpack.c.b16 %v2912, %v2911
        %v3324 = vpack.c.b16 %v2914, %v2913
        %v3325 = vpack.c.b16 %v2916, %v2915
        %v3326 = vpack.c.b16 %v2918, %v2917
        %v3327 = vpack.c.b16 %v2920, %v2919
        %v3328 = vpack.c.b16 %v2922, %v2921
        %v3329 = vpack.c.b16 %v2924, %v2923
        %v3330 = vpack.c.b16 %v2926, %v2925
        %v3331 = vpack.c.b16 %v2928, %v2927
        %v3332 = vpack.c.b16 %v2930, %v2929
        %v3333 = vpack.c.b16 %v2932, %v2931
        %v3334 = vpack.c.b16 %v2934, %v2933
        %v3335 = vpack.c.b16 %v2936, %v2935
        %v3336 = vpack.c.b16 %v2938, %v2937
        %v3337 = vpack.c.b16 %v2940, %v2939
        %v3338 = vpack.c.b16 %v2942, %v2941
        %v3339 = vpack.c.b16 %v2944, %v2943
        %v3340 = vpack.c.b16 %v2946, %v2945
        %v3341 = vpack.c.b16 %v2948, %v2947
        %v3342 = vpack.c.b16 %v2950, %v2949
        %3735 = vmatprep.subr.bf16.mxu0 0
        %3736 = vmatpush1.bf16.msra.mxu0 %v2951
        %3737 = vmatprep.subr.bf16.mxu0 0
        %3738 = vmatpush1.bf16.msra.mxu0 %v2952
        %3739 = vmatprep.subr.bf16.mxu0 0
        %3740 = vmatpush1.bf16.msra.mxu0 %v2953
        %3741 = vmatprep.subr.bf16.mxu0 0
        %3742 = vmatpush1.bf16.msra.mxu0 %v2954
        %3743 = vmatprep.subr.bf16.mxu0 0
        %3744 = vmatpush1.bf16.msra.mxu0 %v2955
        %3745 = vmatprep.subr.bf16.mxu0 0
        %3746 = vmatpush1.bf16.msra.mxu0 %v2956
        %3747 = vmatprep.subr.bf16.mxu0 0
        %3748 = vmatpush1.bf16.msra.mxu0 %v2957
        %3749 = vmatprep.subr.bf16.mxu0 0
        %3750 = vmatpush1.bf16.msra.mxu0 %v2958
        %3751 = vmatprep.subr.bf16.mxu0 0
        %3752 = vmatpush1.bf16.msra.mxu0 %v2959
        %3753 = vmatprep.subr.bf16.mxu0 0
        %3754 = vmatpush1.bf16.msra.mxu0 %v2960
        %3755 = vmatprep.subr.bf16.mxu0 0
        %3756 = vmatpush1.bf16.msra.mxu0 %v2961
        %3757 = vmatprep.subr.bf16.mxu0 0
        %3758 = vmatpush1.bf16.msra.mxu0 %v2962
        %3759 = vmatprep.subr.bf16.mxu0 0
        %3760 = vmatpush1.bf16.msra.mxu0 %v2963
        %3761 = vmatprep.subr.bf16.mxu0 0
        %3762 = vmatpush1.bf16.msra.mxu0 %v2964
        %3763 = vmatprep.subr.bf16.mxu0 0
        %3764 = vmatpush1.bf16.msra.mxu0 %v2965
        %3765 = vmatprep.subr.bf16.mxu0 0
        %3766 = vmatpush1.bf16.msra.mxu0 %v2966
        %3767 = vmatprep.mubr.bf16.mxu0 %v544
        %3768 = vmatmul.mubr.bf16.gmra.mrb[0].mxu0 %v543
        %v3769 = vpop.f32.mrb[0].mxu0
        %v3770 = vadd.f32 0.0, %v3769
        %v3771 = vpop.f32.mrb[0].mxu0
        %v3772 = vpop.f32.mrb[0].mxu0
        %v3773 = vadd.f32 0.0, %v3772
        %v3774 = vpop.f32.mrb[0].mxu0
        %3775 = vdwg.mxu0
        %3776 = vmatprep.subr.bf16.mxu0 0
        %3777 = vmatpush1.bf16.msra.mxu0 %v2967
        %3778 = vmatprep.subr.bf16.mxu0 0
        %3779 = vmatpush1.bf16.msra.mxu0 %v2968
        %3780 = vmatprep.subr.bf16.mxu0 0
        %3781 = vmatpush1.bf16.msra.mxu0 %v2969
        %3782 = vmatprep.subr.bf16.mxu0 0
        %3783 = vmatpush1.bf16.msra.mxu0 %v2970
        %3784 = vmatprep.subr.bf16.mxu0 0
        %3785 = vmatpush1.bf16.msra.mxu0 %v2971
        %3786 = vmatprep.subr.bf16.mxu0 0
        %3787 = vmatpush1.bf16.msra.mxu0 %v2972
        %3788 = vmatprep.subr.bf16.mxu0 0
        %3789 = vmatpush1.bf16.msra.mxu0 %v2973
        %3790 = vmatprep.subr.bf16.mxu0 0
        %3791 = vmatpush1.bf16.msra.mxu0 %v2974
        %3792 = vmatprep.subr.bf16.mxu0 0
        %3793 = vmatpush1.bf16.msra.mxu0 %v2975
        %3794 = vmatprep.subr.bf16.mxu0 0
        %3795 = vmatpush1.bf16.msra.mxu0 %v2976
        %3796 = vmatprep.subr.bf16.mxu0 0
        %3797 = vmatpush1.bf16.msra.mxu0 %v2977
        %3798 = vmatprep.subr.bf16.mxu0 0
        %3799 = vmatpush1.bf16.msra.mxu0 %v2978
        %3800 = vmatprep.subr.bf16.mxu0 0
        %3801 = vmatpush1.bf16.msra.mxu0 %v2979
        %3802 = vmatprep.subr.bf16.mxu0 0
        %3803 = vmatpush1.bf16.msra.mxu0 %v2980
        %3804 = vmatprep.subr.bf16.mxu0 0
        %3805 = vmatpush1.bf16.msra.mxu0 %v2981
        %3806 = vmatprep.subr.bf16.mxu0 0
        %3807 = vmatpush1.bf16.msra.mxu0 %v2982
        %3808 = vmatprep.mubr.bf16.mxu0 %v546
        %3809 = vmatmul.mubr.bf16.gmra.mrb[0].mxu0 %v545
        %v3810 = vpop.f32.mrb[0].mxu0
        %v3811 = vadd.f32 %v3770, %v3810
        %v3812 = vpop.f32.mrb[0].mxu0
        %v3813 = vpop.f32.mrb[0].mxu0
        %v3814 = vadd.f32 %v3773, %v3813
        %v3815 = vpop.f32.mrb[0].mxu0
        %3816 = vdwg.mxu0
        %3817 = vmatprep.subr.bf16.mxu0 0
        %3818 = vmatpush1.bf16.msra.mxu0 %v2983
        %3819 = vmatprep.subr.bf16.mxu0 0
        %3820 = vmatpush1.bf16.msra.mxu0 %v2984
        %3821 = vmatprep.subr.bf16.mxu0 0
        %3822 = vmatpush1.bf16.msra.mxu0 %v2985
        %3823 = vmatprep.subr.bf16.mxu0 0
        %3824 = vmatpush1.bf16.msra.mxu0 %v2986
        %3825 = vmatprep.subr.bf16.mxu0 0
        %3826 = vmatpush1.bf16.msra.mxu0 %v2987
        %3827 = vmatprep.subr.bf16.mxu0 0
        %3828 = vmatpush1.bf16.msra.mxu0 %v2988
        %3829 = vmatprep.subr.bf16.mxu0 0
        %3830 = vmatpush1.bf16.msra.mxu0 %v2989
        %3831 = vmatprep.subr.bf16.mxu0 0
        %3832 = vmatpush1.bf16.msra.mxu0 %v2990
        %3833 = vmatprep.subr.bf16.mxu0 0
        %3834 = vmatpush1.bf16.msra.mxu0 %v2991
        %3835 = vmatprep.subr.bf16.mxu0 0
        %3836 = vmatpush1.bf16.msra.mxu0 %v2992
        %3837 = vmatprep.subr.bf16.mxu0 0
        %3838 = vmatpush1.bf16.msra.mxu0 %v2993
        %3839 = vmatprep.subr.bf16.mxu0 0
        %3840 = vmatpush1.bf16.msra.mxu0 %v2994
        %3841 = vmatprep.subr.bf16.mxu0 0
        %3842 = vmatpush1.bf16.msra.mxu0 %v2995
        %3843 = vmatprep.subr.bf16.mxu0 0
        %3844 = vmatpush1.bf16.msra.mxu0 %v2996
        %3845 = vmatprep.subr.bf16.mxu0 0
        %3846 = vmatpush1.bf16.msra.mxu0 %v2997
        %3847 = vmatprep.subr.bf16.mxu0 0
        %3848 = vmatpush1.bf16.msra.mxu0 %v2998
        %3849 = vmatprep.mubr.bf16.mxu0 %v548
        %3850 = vmatmul.mubr.bf16.gmra.mrb[0].mxu0 %v547
        %v3851 = vpop.f32.mrb[0].mxu0
        %v3852 = vadd.f32 %v3811, %v3851
        %v3853 = vpop.f32.mrb[0].mxu0
        %v3854 = vpop.f32.mrb[0].mxu0
        %v3855 = vadd.f32 %v3814, %v3854
        %v3856 = vpop.f32.mrb[0].mxu0
        %3857 = vdwg.mxu0
        %3858 = vmatprep.subr.bf16.mxu0 0
        %3859 = vmatpush1.bf16.msra.mxu0 %v2999
        %3860 = vmatprep.subr.bf16.mxu0 0
        %3861 = vmatpush1.bf16.msra.mxu0 %v3000
        %3862 = vmatprep.subr.bf16.mxu0 0
        %3863 = vmatpush1.bf16.msra.mxu0 %v3001
        %3864 = vmatprep.subr.bf16.mxu0 0
        %3865 = vmatpush1.bf16.msra.mxu0 %v3002
        %3866 = vmatprep.subr.bf16.mxu0 0
        %3867 = vmatpush1.bf16.msra.mxu0 %v3003
        %3868 = vmatprep.subr.bf16.mxu0 0
        %3869 = vmatpush1.bf16.msra.mxu0 %v3004
        %3870 = vmatprep.subr.bf16.mxu0 0
        %3871 = vmatpush1.bf16.msra.mxu0 %v3005
        %3872 = vmatprep.subr.bf16.mxu0 0
        %3873 = vmatpush1.bf16.msra.mxu0 %v3006
        %3874 = vmatprep.subr.bf16.mxu0 0
        %3875 = vmatpush1.bf16.msra.mxu0 %v3007
        %3876 = vmatprep.subr.bf16.mxu0 0
        %3877 = vmatpush1.bf16.msra.mxu0 %v3008
        %3878 = vmatprep.subr.bf16.mxu0 0
        %3879 = vmatpush1.bf16.msra.mxu0 %v3009
        %3880 = vmatprep.subr.bf16.mxu0 0
        %3881 = vmatpush1.bf16.msra.mxu0 %v3010
        %3882 = vmatprep.subr.bf16.mxu0 0
        %3883 = vmatpush1.bf16.msra.mxu0 %v3011
        %3884 = vmatprep.subr.bf16.mxu0 0
        %3885 = vmatpush1.bf16.msra.mxu0 %v3012
        %3886 = vmatprep.subr.bf16.mxu0 0
        %3887 = vmatpush1.bf16.msra.mxu0 %v3013
        %3888 = vmatprep.subr.bf16.mxu0 0
        %3889 = vmatpush1.bf16.msra.mxu0 %v3014
        %3890 = vmatprep.mubr.bf16.mxu0 %v550
        %3891 = vmatmul.mubr.bf16.gmra.mrb[0].mxu0 %v549
        %v3892 = vpop.f32.mrb[0].mxu0
        %v3893 = vadd.f32 %v3852, %v3892
        %v3894 = vpop.f32.mrb[0].mxu0
        %v3895 = vpop.f32.mrb[0].mxu0
        %v3896 = vadd.f32 %v3855, %v3895
        %v3897 = vpop.f32.mrb[0].mxu0
        %3898 = vdwg.mxu0
        %3899 = vmatprep.subr.bf16.mxu0 0
        %3900 = vmatpush1.bf16.msra.mxu0 %v3015
        %3901 = vmatprep.subr.bf16.mxu0 0
        %3902 = vmatpush1.bf16.msra.mxu0 %v3016
        %3903 = vmatprep.subr.bf16.mxu0 0
        %3904 = vmatpush1.bf16.msra.mxu0 %v3017
        %3905 = vmatprep.subr.bf16.mxu0 0
        %3906 = vmatpush1.bf16.msra.mxu0 %v3018
        %3907 = vmatprep.subr.bf16.mxu0 0
        %3908 = vmatpush1.bf16.msra.mxu0 %v3019
        %3909 = vmatprep.subr.bf16.mxu0 0
        %3910 = vmatpush1.bf16.msra.mxu0 %v3020
        %3911 = vmatprep.subr.bf16.mxu0 0
        %3912 = vmatpush1.bf16.msra.mxu0 %v3021
        %3913 = vmatprep.subr.bf16.mxu0 0
        %3914 = vmatpush1.bf16.msra.mxu0 %v3022
        %3915 = vmatprep.subr.bf16.mxu0 0
        %3916 = vmatpush1.bf16.msra.mxu0 %v3023
        %3917 = vmatprep.subr.bf16.mxu0 0
        %3918 = vmatpush1.bf16.msra.mxu0 %v3024
        %3919 = vmatprep.subr.bf16.mxu0 0
        %3920 = vmatpush1.bf16.msra.mxu0 %v3025
        %3921 = vmatprep.subr.bf16.mxu0 0
        %3922 = vmatpush1.bf16.msra.mxu0 %v3026
        %3923 = vmatprep.subr.bf16.mxu0 0
        %3924 = vmatpush1.bf16.msra.mxu0 %v3027
        %3925 = vmatprep.subr.bf16.mxu0 0
        %3926 = vmatpush1.bf16.msra.mxu0 %v3028
        %3927 = vmatprep.subr.bf16.mxu0 0
        %3928 = vmatpush1.bf16.msra.mxu0 %v3029
        %3929 = vmatprep.subr.bf16.mxu0 0
        %3930 = vmatpush1.bf16.msra.mxu0 %v3030
        %3931 = vmatprep.mubr.bf16.mxu0 %v552
        %3932 = vmatmul.mubr.bf16.gmra.mrb[0].mxu0 %v551
        %v3933 = vpop.f32.mrb[0].mxu0
        %v3934 = vadd.f32 %v3893, %v3933
        %v3935 = vpop.f32.mrb[0].mxu0
        %v3936 = vpop.f32.mrb[0].mxu0
        %v3937 = vadd.f32 %v3896, %v3936
        %v3938 = vpop.f32.mrb[0].mxu0
        %3939 = vdwg.mxu0
        %3940 = vmatprep.subr.bf16.mxu0 0
        %3941 = vmatpush1.bf16.msra.mxu0 %v3031
        %3942 = vmatprep.subr.bf16.mxu0 0
        %3943 = vmatpush1.bf16.msra.mxu0 %v3032
        %3944 = vmatprep.subr.bf16.mxu0 0
        %3945 = vmatpush1.bf16.msra.mxu0 %v3033
        %3946 = vmatprep.subr.bf16.mxu0 0
        %3947 = vmatpush1.bf16.msra.mxu0 %v3034
        %3948 = vmatprep.subr.bf16.mxu0 0
        %3949 = vmatpush1.bf16.msra.mxu0 %v3035
        %3950 = vmatprep.subr.bf16.mxu0 0
        %3951 = vmatpush1.bf16.msra.mxu0 %v3036
        %3952 = vmatprep.subr.bf16.mxu0 0
        %3953 = vmatpush1.bf16.msra.mxu0 %v3037
        %3954 = vmatprep.subr.bf16.mxu0 0
        %3955 = vmatpush1.bf16.msra.mxu0 %v3038
        %3956 = vmatprep.subr.bf16.mxu0 0
        %3957 = vmatpush1.bf16.msra.mxu0 %v3039
        %3958 = vmatprep.subr.bf16.mxu0 0
        %3959 = vmatpush1.bf16.msra.mxu0 %v3040
        %3960 = vmatprep.subr.bf16.mxu0 0
        %3961 = vmatpush1.bf16.msra.mxu0 %v3041
        %3962 = vmatprep.subr.bf16.mxu0 0
        %3963 = vmatpush1.bf16.msra.mxu0 %v3042
        %3964 = vmatprep.subr.bf16.mxu0 0
        %3965 = vmatpush1.bf16.msra.mxu0 %v3043
        %3966 = vmatprep.subr.bf16.mxu0 0
        %3967 = vmatpush1.bf16.msra.mxu0 %v3044
        %3968 = vmatprep.subr.bf16.mxu0 0
        %3969 = vmatpush1.bf16.msra.mxu0 %v3045
        %3970 = vmatprep.subr.bf16.mxu0 0
        %3971 = vmatpush1.bf16.msra.mxu0 %v3046
        %3972 = vmatprep.mubr.bf16.mxu0 %v554
        %3973 = vmatmul.mubr.bf16.gmra.mrb[0].mxu0 %v553
        %v3974 = vpop.f32.mrb[0].mxu0
        %v3975 = vadd.f32 %v3934, %v3974
        %v3976 = vpop.f32.mrb[0].mxu0
        %v3977 = vpop.f32.mrb[0].mxu0
        %v3978 = vadd.f32 %v3937, %v3977
        %v3979 = vpop.f32.mrb[0].mxu0
        %3980 = vdwg.mxu0
        %3981 = vmatprep.subr.bf16.mxu0 0
        %3982 = vmatpush1.bf16.msra.mxu0 %v3047
        %3983 = vmatprep.subr.bf16.mxu0 0
        %3984 = vmatpush1.bf16.msra.mxu0 %v3048
        %3985 = vmatprep.subr.bf16.mxu0 0
        %3986 = vmatpush1.bf16.msra.mxu0 %v3049
        %3987 = vmatprep.subr.bf16.mxu0 0
        %3988 = vmatpush1.bf16.msra.mxu0 %v3050
        %3989 = vmatprep.subr.bf16.mxu0 0
        %3990 = vmatpush1.bf16.msra.mxu0 %v3051
        %3991 = vmatprep.subr.bf16.mxu0 0
        %3992 = vmatpush1.bf16.msra.mxu0 %v3052
        %3993 = vmatprep.subr.bf16.mxu0 0
        %3994 = vmatpush1.bf16.msra.mxu0 %v3053
        %3995 = vmatprep.subr.bf16.mxu0 0
        %3996 = vmatpush1.bf16.msra.mxu0 %v3054
        %3997 = vmatprep.subr.bf16.mxu0 0
        %3998 = vmatpush1.bf16.msra.mxu0 %v3055
        %3999 = vmatprep.subr.bf16.mxu0 0
        %4000 = vmatpush1.bf16.msra.mxu0 %v3056
        %4001 = vmatprep.subr.bf16.mxu0 0
        %4002 = vmatpush1.bf16.msra.mxu0 %v3057
        %4003 = vmatprep.subr.bf16.mxu0 0
        %4004 = vmatpush1.bf16.msra.mxu0 %v3058
        %4005 = vmatprep.subr.bf16.mxu0 0
        %4006 = vmatpush1.bf16.msra.mxu0 %v3059
        %4007 = vmatprep.subr.bf16.mxu0 0
        %4008 = vmatpush1.bf16.msra.mxu0 %v3060
        %4009 = vmatprep.subr.bf16.mxu0 0
        %4010 = vmatpush1.bf16.msra.mxu0 %v3061
        %4011 = vmatprep.subr.bf16.mxu0 0
        %4012 = vmatpush1.bf16.msra.mxu0 %v3062
        %4013 = vmatprep.mubr.bf16.mxu0 %v556
        %4014 = vmatmul.mubr.bf16.gmra.mrb[0].mxu0 %v555
        %v4015 = vpop.f32.mrb[0].mxu0
        %v4016 = vadd.f32 %v3975, %v4015
        %v4017 = vpop.f32.mrb[0].mxu0
        %v4018 = vpop.f32.mrb[0].mxu0
        %v4019 = vadd.f32 %v3978, %v4018
        %v4020 = vpop.f32.mrb[0].mxu0
        %4021 = vdwg.mxu0
        %4022 = vmatprep.subr.bf16.mxu0 0
        %4023 = vmatpush1.bf16.msra.mxu0 %v3063
        %4024 = vmatprep.subr.bf16.mxu0 0
        %4025 = vmatpush1.bf16.msra.mxu0 %v3064
        %4026 = vmatprep.subr.bf16.mxu0 0
        %4027 = vmatpush1.bf16.msra.mxu0 %v3065
        %4028 = vmatprep.subr.bf16.mxu0 0
        %4029 = vmatpush1.bf16.msra.mxu0 %v3066
        %4030 = vmatprep.subr.bf16.mxu0 0
        %4031 = vmatpush1.bf16.msra.mxu0 %v3067
        %4032 = vmatprep.subr.bf16.mxu0 0
        %4033 = vmatpush1.bf16.msra.mxu0 %v3068
        %4034 = vmatprep.subr.bf16.mxu0 0
        %4035 = vmatpush1.bf16.msra.mxu0 %v3069
        %4036 = vmatprep.subr.bf16.mxu0 0
        %4037 = vmatpush1.bf16.msra.mxu0 %v3070
        %4038 = vmatprep.subr.bf16.mxu0 0
        %4039 = vmatpush1.bf16.msra.mxu0 %v3071
        %4040 = vmatprep.subr.bf16.mxu0 0
        %4041 = vmatpush1.bf16.msra.mxu0 %v3072
        %4042 = vmatprep.subr.bf16.mxu0 0
        %4043 = vmatpush1.bf16.msra.mxu0 %v3073
        %4044 = vmatprep.subr.bf16.mxu0 0
        %4045 = vmatpush1.bf16.msra.mxu0 %v3074
        %4046 = vmatprep.subr.bf16.mxu0 0
        %4047 = vmatpush1.bf16.msra.mxu0 %v3075
        %4048 = vmatprep.subr.bf16.mxu0 0
        %4049 = vmatpush1.bf16.msra.mxu0 %v3076
        %4050 = vmatprep.subr.bf16.mxu0 0
        %4051 = vmatpush1.bf16.msra.mxu0 %v3077
        %4052 = vmatprep.subr.bf16.mxu0 0
        %4053 = vmatpush1.bf16.msra.mxu0 %v3078
        %4054 = vmatprep.mubr.bf16.mxu0 %v558
        %4055 = vmatmul.mubr.bf16.gmra.mrb[0].mxu0 %v557
        %v4056 = vpop.f32.mrb[0].mxu0
        %v4057 = vadd.f32 %v4016, %v4056
        %v4058 = vpop.f32.mrb[0].mxu0
        %v4059 = vpop.f32.mrb[0].mxu0
        %v4060 = vadd.f32 %v4019, %v4059
        %v4061 = vpop.f32.mrb[0].mxu0
        %4062 = vdwg.mxu0
        %4063 = vmatprep.subr.bf16.mxu0 0
        %4064 = vmatpush1.bf16.msra.mxu0 %v3079
        %4065 = vmatprep.subr.bf16.mxu0 0
        %4066 = vmatpush1.bf16.msra.mxu0 %v3080
        %4067 = vmatprep.subr.bf16.mxu0 0
        %4068 = vmatpush1.bf16.msra.mxu0 %v3081
        %4069 = vmatprep.subr.bf16.mxu0 0
        %4070 = vmatpush1.bf16.msra.mxu0 %v3082
        %4071 = vmatprep.subr.bf16.mxu0 0
        %4072 = vmatpush1.bf16.msra.mxu0 %v3083
        %4073 = vmatprep.subr.bf16.mxu0 0
        %4074 = vmatpush1.bf16.msra.mxu0 %v3084
        %4075 = vmatprep.subr.bf16.mxu0 0
        %4076 = vmatpush1.bf16.msra.mxu0 %v3085
        %4077 = vmatprep.subr.bf16.mxu0 0
        %4078 = vmatpush1.bf16.msra.mxu0 %v3086
        %4079 = vmatprep.subr.bf16.mxu0 0
        %4080 = vmatpush1.bf16.msra.mxu0 %v3087
        %4081 = vmatprep.subr.bf16.mxu0 0
        %4082 = vmatpush1.bf16.msra.mxu0 %v3088
        %4083 = vmatprep.subr.bf16.mxu0 0
        %4084 = vmatpush1.bf16.msra.mxu0 %v3089
        %4085 = vmatprep.subr.bf16.mxu0 0
        %4086 = vmatpush1.bf16.msra.mxu0 %v3090
        %4087 = vmatprep.subr.bf16.mxu0 0
        %4088 = vmatpush1.bf16.msra.mxu0 %v3091
        %4089 = vmatprep.subr.bf16.mxu0 0
        %4090 = vmatpush1.bf16.msra.mxu0 %v3092
        %4091 = vmatprep.subr.bf16.mxu0 0
        %4092 = vmatpush1.bf16.msra.mxu0 %v3093
        %4093 = vmatprep.subr.bf16.mxu0 0
        %4094 = vmatpush1.bf16.msra.mxu0 %v3094
        %4095 = vmatprep.mubr.bf16.mxu0 %v560
        %4096 = vmatmul.mubr.bf16.gmra.mrb[0].mxu0 %v559
        %v4097 = vpop.f32.mrb[0].mxu0
        %v4098 = vadd.f32 %v4057, %v4097
        %v4099 = vpop.f32.mrb[0].mxu0
        %v4100 = vpop.f32.mrb[0].mxu0
        %v4101 = vadd.f32 %v4060, %v4100
        %v4102 = vpop.f32.mrb[0].mxu0
        %4103 = vdwg.mxu0
        %4104 = vmatprep.subr.bf16.mxu0 0
        %4105 = vmatpush1.bf16.msra.mxu0 %v3095
        %4106 = vmatprep.subr.bf16.mxu0 0
        %4107 = vmatpush1.bf16.msra.mxu0 %v3096
        %4108 = vmatprep.subr.bf16.mxu0 0
        %4109 = vmatpush1.bf16.msra.mxu0 %v3097
        %4110 = vmatprep.subr.bf16.mxu0 0
        %4111 = vmatpush1.bf16.msra.mxu0 %v3098
        %4112 = vmatprep.subr.bf16.mxu0 0
        %4113 = vmatpush1.bf16.msra.mxu0 %v3099
        %4114 = vmatprep.subr.bf16.mxu0 0
        %4115 = vmatpush1.bf16.msra.mxu0 %v3100
        %4116 = vmatprep.subr.bf16.mxu0 0
        %4117 = vmatpush1.bf16.msra.mxu0 %v3101
        %4118 = vmatprep.subr.bf16.mxu0 0
        %4119 = vmatpush1.bf16.msra.mxu0 %v3102
        %4120 = vmatprep.subr.bf16.mxu0 0
        %4121 = vmatpush1.bf16.msra.mxu0 %v3103
        %4122 = vmatprep.subr.bf16.mxu0 0
        %4123 = vmatpush1.bf16.msra.mxu0 %v3104
        %4124 = vmatprep.subr.bf16.mxu0 0
        %4125 = vmatpush1.bf16.msra.mxu0 %v3105
        %4126 = vmatprep.subr.bf16.mxu0 0
        %4127 = vmatpush1.bf16.msra.mxu0 %v3106
        %4128 = vmatprep.subr.bf16.mxu0 0
        %4129 = vmatpush1.bf16.msra.mxu0 %v3107
        %4130 = vmatprep.subr.bf16.mxu0 0
        %4131 = vmatpush1.bf16.msra.mxu0 %v3108
        %4132 = vmatprep.subr.bf16.mxu0 0
        %4133 = vmatpush1.bf16.msra.mxu0 %v3109
        %4134 = vmatprep.subr.bf16.mxu0 0
        %4135 = vmatpush1.bf16.msra.mxu0 %v3110
        %4136 = vmatprep.mubr.bf16.mxu0 %v562
        %4137 = vmatmul.mubr.bf16.gmra.mrb[0].mxu0 %v561
        %v4138 = vpop.f32.mrb[0].mxu0
        %v4139 = vadd.f32 %v4098, %v4138
        %v4140 = vpop.f32.mrb[0].mxu0
        %v4141 = vpop.f32.mrb[0].mxu0
        %v4142 = vadd.f32 %v4101, %v4141
        %v4143 = vpop.f32.mrb[0].mxu0
        %4144 = vdwg.mxu0
        %4145 = vmatprep.subr.bf16.mxu0 0
        %4146 = vmatpush1.bf16.msra.mxu0 %v3111
        %4147 = vmatprep.subr.bf16.mxu0 0
        %4148 = vmatpush1.bf16.msra.mxu0 %v3112
        %4149 = vmatprep.subr.bf16.mxu0 0
        %4150 = vmatpush1.bf16.msra.mxu0 %v3113
        %4151 = vmatprep.subr.bf16.mxu0 0
        %4152 = vmatpush1.bf16.msra.mxu0 %v3114
        %4153 = vmatprep.subr.bf16.mxu0 0
        %4154 = vmatpush1.bf16.msra.mxu0 %v3115
        %4155 = vmatprep.subr.bf16.mxu0 0
        %4156 = vmatpush1.bf16.msra.mxu0 %v3116
        %4157 = vmatprep.subr.bf16.mxu0 0
        %4158 = vmatpush1.bf16.msra.mxu0 %v3117
        %4159 = vmatprep.subr.bf16.mxu0 0
        %4160 = vmatpush1.bf16.msra.mxu0 %v3118
        %4161 = vmatprep.subr.bf16.mxu0 0
        %4162 = vmatpush1.bf16.msra.mxu0 %v3119
        %4163 = vmatprep.subr.bf16.mxu0 0
        %4164 = vmatpush1.bf16.msra.mxu0 %v3120
        %4165 = vmatprep.subr.bf16.mxu0 0
        %4166 = vmatpush1.bf16.msra.mxu0 %v3121
        %4167 = vmatprep.subr.bf16.mxu0 0
        %4168 = vmatpush1.bf16.msra.mxu0 %v3122
        %4169 = vmatprep.subr.bf16.mxu0 0
        %4170 = vmatpush1.bf16.msra.mxu0 %v3123
        %4171 = vmatprep.subr.bf16.mxu0 0
        %4172 = vmatpush1.bf16.msra.mxu0 %v3124
        %4173 = vmatprep.subr.bf16.mxu0 0
        %4174 = vmatpush1.bf16.msra.mxu0 %v3125
        %4175 = vmatprep.subr.bf16.mxu0 0
        %4176 = vmatpush1.bf16.msra.mxu0 %v3126
        %4177 = vmatprep.mubr.bf16.mxu0 %v564
        %4178 = vmatmul.mubr.bf16.gmra.mrb[0].mxu0 %v563
        %v4179 = vpop.f32.mrb[0].mxu0
        %v4180 = vadd.f32 %v4139, %v4179
        %v4181 = vpop.f32.mrb[0].mxu0
        %v4182 = vpop.f32.mrb[0].mxu0
        %v4183 = vadd.f32 %v4142, %v4182
        %v4184 = vpop.f32.mrb[0].mxu0
        %4185 = vdwg.mxu0
        %4186 = vmatprep.subr.bf16.mxu0 0
        %4187 = vmatpush1.bf16.msra.mxu0 %v3127
        %4188 = vmatprep.subr.bf16.mxu0 0
        %4189 = vmatpush1.bf16.msra.mxu0 %v3128
        %4190 = vmatprep.subr.bf16.mxu0 0
        %4191 = vmatpush1.bf16.msra.mxu0 %v3129
        %4192 = vmatprep.subr.bf16.mxu0 0
        %4193 = vmatpush1.bf16.msra.mxu0 %v3130
        %4194 = vmatprep.subr.bf16.mxu0 0
        %4195 = vmatpush1.bf16.msra.mxu0 %v3131
        %4196 = vmatprep.subr.bf16.mxu0 0
        %4197 = vmatpush1.bf16.msra.mxu0 %v3132
        %4198 = vmatprep.subr.bf16.mxu0 0
        %4199 = vmatpush1.bf16.msra.mxu0 %v3133
        %4200 = vmatprep.subr.bf16.mxu0 0
        %4201 = vmatpush1.bf16.msra.mxu0 %v3134
        %4202 = vmatprep.subr.bf16.mxu0 0
        %4203 = vmatpush1.bf16.msra.mxu0 %v3135
        %4204 = vmatprep.subr.bf16.mxu0 0
        %4205 = vmatpush1.bf16.msra.mxu0 %v3136
        %4206 = vmatprep.subr.bf16.mxu0 0
        %4207 = vmatpush1.bf16.msra.mxu0 %v3137
        %4208 = vmatprep.subr.bf16.mxu0 0
        %4209 = vmatpush1.bf16.msra.mxu0 %v3138
        %4210 = vmatprep.subr.bf16.mxu0 0
        %4211 = vmatpush1.bf16.msra.mxu0 %v3139
        %4212 = vmatprep.subr.bf16.mxu0 0
        %4213 = vmatpush1.bf16.msra.mxu0 %v3140
        %4214 = vmatprep.subr.bf16.mxu0 0
        %4215 = vmatpush1.bf16.msra.mxu0 %v3141
        %4216 = vmatprep.subr.bf16.mxu0 0
        %4217 = vmatpush1.bf16.msra.mxu0 %v3142
        %4218 = vmatprep.mubr.bf16.mxu0 %v566
        %4219 = vmatmul.mubr.bf16.gmra.mrb[0].mxu0 %v565
        %v4220 = vpop.f32.mrb[0].mxu0
        %v4221 = vadd.f32 %v4180, %v4220
        %v4222 = vpop.f32.mrb[0].mxu0
        %v4223 = vpop.f32.mrb[0].mxu0
        %v4224 = vadd.f32 %v4183, %v4223
        %v4225 = vpop.f32.mrb[0].mxu0
        %4226 = vdwg.mxu0
        %4227 = vmatprep.subr.bf16.mxu0 0
        %4228 = vmatpush1.bf16.msra.mxu0 %v3143
        %4229 = vmatprep.subr.bf16.mxu0 0
        %4230 = vmatpush1.bf16.msra.mxu0 %v3144
        %4231 = vmatprep.subr.bf16.mxu0 0
        %4232 = vmatpush1.bf16.msra.mxu0 %v3145
        %4233 = vmatprep.subr.bf16.mxu0 0
        %4234 = vmatpush1.bf16.msra.mxu0 %v3146
        %4235 = vmatprep.subr.bf16.mxu0 0
        %4236 = vmatpush1.bf16.msra.mxu0 %v3147
        %4237 = vmatprep.subr.bf16.mxu0 0
        %4238 = vmatpush1.bf16.msra.mxu0 %v3148
        %4239 = vmatprep.subr.bf16.mxu0 0
        %4240 = vmatpush1.bf16.msra.mxu0 %v3149
        %4241 = vmatprep.subr.bf16.mxu0 0
        %4242 = vmatpush1.bf16.msra.mxu0 %v3150
        %4243 = vmatprep.subr.bf16.mxu0 0
        %4244 = vmatpush1.bf16.msra.mxu0 %v3151
        %4245 = vmatprep.subr.bf16.mxu0 0
        %4246 = vmatpush1.bf16.msra.mxu0 %v3152
        %4247 = vmatprep.subr.bf16.mxu0 0
        %4248 = vmatpush1.bf16.msra.mxu0 %v3153
        %4249 = vmatprep.subr.bf16.mxu0 0
        %4250 = vmatpush1.bf16.msra.mxu0 %v3154
        %4251 = vmatprep.subr.bf16.mxu0 0
        %4252 = vmatpush1.bf16.msra.mxu0 %v3155
        %4253 = vmatprep.subr.bf16.mxu0 0
        %4254 = vmatpush1.bf16.msra.mxu0 %v3156
        %4255 = vmatprep.subr.bf16.mxu0 0
        %4256 = vmatpush1.bf16.msra.mxu0 %v3157
        %4257 = vmatprep.subr.bf16.mxu0 0
        %4258 = vmatpush1.bf16.msra.mxu0 %v3158
        %4259 = vmatprep.mubr.bf16.mxu0 %v568
        %4260 = vmatmul.mubr.bf16.gmra.mrb[0].mxu0 %v567
        %v4261 = vpop.f32.mrb[0].mxu0
        %v4262 = vadd.f32 %v4221, %v4261
        %v4263 = vpop.f32.mrb[0].mxu0
        %v4264 = vpop.f32.mrb[0].mxu0
        %v4265 = vadd.f32 %v4224, %v4264
        %v4266 = vpop.f32.mrb[0].mxu0
        %4267 = vdwg.mxu0
        %4268 = vmatprep.subr.bf16.mxu0 0
        %4269 = vmatpush1.bf16.msra.mxu0 %v3159
        %4270 = vmatprep.subr.bf16.mxu0 0
        %4271 = vmatpush1.bf16.msra.mxu0 %v3160
        %4272 = vmatprep.subr.bf16.mxu0 0
        %4273 = vmatpush1.bf16.msra.mxu0 %v3161
        %4274 = vmatprep.subr.bf16.mxu0 0
        %4275 = vmatpush1.bf16.msra.mxu0 %v3162
        %4276 = vmatprep.subr.bf16.mxu0 0
        %4277 = vmatpush1.bf16.msra.mxu0 %v3163
        %4278 = vmatprep.subr.bf16.mxu0 0
        %4279 = vmatpush1.bf16.msra.mxu0 %v3164
        %4280 = vmatprep.subr.bf16.mxu0 0
        %4281 = vmatpush1.bf16.msra.mxu0 %v3165
        %4282 = vmatprep.subr.bf16.mxu0 0
        %4283 = vmatpush1.bf16.msra.mxu0 %v3166
        %4284 = vmatprep.subr.bf16.mxu0 0
        %4285 = vmatpush1.bf16.msra.mxu0 %v3167
        %4286 = vmatprep.subr.bf16.mxu0 0
        %4287 = vmatpush1.bf16.msra.mxu0 %v3168
        %4288 = vmatprep.subr.bf16.mxu0 0
        %4289 = vmatpush1.bf16.msra.mxu0 %v3169
        %4290 = vmatprep.subr.bf16.mxu0 0
        %4291 = vmatpush1.bf16.msra.mxu0 %v3170
        %4292 = vmatprep.subr.bf16.mxu0 0
        %4293 = vmatpush1.bf16.msra.mxu0 %v3171
        %4294 = vmatprep.subr.bf16.mxu0 0
        %4295 = vmatpush1.bf16.msra.mxu0 %v3172
        %4296 = vmatprep.subr.bf16.mxu0 0
        %4297 = vmatpush1.bf16.msra.mxu0 %v3173
        %4298 = vmatprep.subr.bf16.mxu0 0
        %4299 = vmatpush1.bf16.msra.mxu0 %v3174
        %4300 = vmatprep.mubr.bf16.mxu0 %v570
        %4301 = vmatmul.mubr.bf16.gmra.mrb[0].mxu0 %v569
        %v4302 = vpop.f32.mrb[0].mxu0
        %v4303 = vadd.f32 %v4262, %v4302
        %v4304 = vpop.f32.mrb[0].mxu0
        %v4305 = vpop.f32.mrb[0].mxu0
        %v4306 = vadd.f32 %v4265, %v4305
        %v4307 = vpop.f32.mrb[0].mxu0
        %4308 = vdwg.mxu0
        %4309 = vmatprep.subr.bf16.mxu0 0
        %4310 = vmatpush1.bf16.msra.mxu0 %v3175
        %4311 = vmatprep.subr.bf16.mxu0 0
        %4312 = vmatpush1.bf16.msra.mxu0 %v3176
        %4313 = vmatprep.subr.bf16.mxu0 0
        %4314 = vmatpush1.bf16.msra.mxu0 %v3177
        %4315 = vmatprep.subr.bf16.mxu0 0
        %4316 = vmatpush1.bf16.msra.mxu0 %v3178
        %4317 = vmatprep.subr.bf16.mxu0 0
        %4318 = vmatpush1.bf16.msra.mxu0 %v3179
        %4319 = vmatprep.subr.bf16.mxu0 0
        %4320 = vmatpush1.bf16.msra.mxu0 %v3180
        %4321 = vmatprep.subr.bf16.mxu0 0
        %4322 = vmatpush1.bf16.msra.mxu0 %v3181
        %4323 = vmatprep.subr.bf16.mxu0 0
        %4324 = vmatpush1.bf16.msra.mxu0 %v3182
        %4325 = vmatprep.subr.bf16.mxu0 0
        %4326 = vmatpush1.bf16.msra.mxu0 %v3183
        %4327 = vmatprep.subr.bf16.mxu0 0
        %4328 = vmatpush1.bf16.msra.mxu0 %v3184
        %4329 = vmatprep.subr.bf16.mxu0 0
        %4330 = vmatpush1.bf16.msra.mxu0 %v3185
        %4331 = vmatprep.subr.bf16.mxu0 0
        %4332 = vmatpush1.bf16.msra.mxu0 %v3186
        %4333 = vmatprep.subr.bf16.mxu0 0
        %4334 = vmatpush1.bf16.msra.mxu0 %v3187
        %4335 = vmatprep.subr.bf16.mxu0 0
        %4336 = vmatpush1.bf16.msra.mxu0 %v3188
        %4337 = vmatprep.subr.bf16.mxu0 0
        %4338 = vmatpush1.bf16.msra.mxu0 %v3189
        %4339 = vmatprep.subr.bf16.mxu0 0
        %4340 = vmatpush1.bf16.msra.mxu0 %v3190
        %4341 = vmatprep.mubr.bf16.mxu0 %v572
        %4342 = vmatmul.mubr.bf16.gmra.mrb[0].mxu0 %v571
        %v4343 = vpop.f32.mrb[0].mxu0
        %v4344 = vadd.f32 %v4303, %v4343
        %v4345 = vpop.f32.mrb[0].mxu0
        %v4346 = vpop.f32.mrb[0].mxu0
        %v4347 = vadd.f32 %v4306, %v4346
        %v4348 = vpop.f32.mrb[0].mxu0
        %4349 = vdwg.mxu0
        %4350 = vmatprep.subr.bf16.mxu0 0
        %4351 = vmatpush1.bf16.msra.mxu0 %v3191
        %4352 = vmatprep.subr.bf16.mxu0 0
        %4353 = vmatpush1.bf16.msra.mxu0 %v3192
        %4354 = vmatprep.subr.bf16.mxu0 0
        %4355 = vmatpush1.bf16.msra.mxu0 %v3193
        %4356 = vmatprep.subr.bf16.mxu0 0
        %4357 = vmatpush1.bf16.msra.mxu0 %v3194
        %4358 = vmatprep.subr.bf16.mxu0 0
        %4359 = vmatpush1.bf16.msra.mxu0 %v3195
        %4360 = vmatprep.subr.bf16.mxu0 0
        %4361 = vmatpush1.bf16.msra.mxu0 %v3196
        %4362 = vmatprep.subr.bf16.mxu0 0
        %4363 = vmatpush1.bf16.msra.mxu0 %v3197
        %4364 = vmatprep.subr.bf16.mxu0 0
        %4365 = vmatpush1.bf16.msra.mxu0 %v3198
        %4366 = vmatprep.subr.bf16.mxu0 0
        %4367 = vmatpush1.bf16.msra.mxu0 %v3199
        %4368 = vmatprep.subr.bf16.mxu0 0
        %4369 = vmatpush1.bf16.msra.mxu0 %v3200
        %4370 = vmatprep.subr.bf16.mxu0 0
        %4371 = vmatpush1.bf16.msra.mxu0 %v3201
        %4372 = vmatprep.subr.bf16.mxu0 0
        %4373 = vmatpush1.bf16.msra.mxu0 %v3202
        %4374 = vmatprep.subr.bf16.mxu0 0
        %4375 = vmatpush1.bf16.msra.mxu0 %v3203
        %4376 = vmatprep.subr.bf16.mxu0 0
        %4377 = vmatpush1.bf16.msra.mxu0 %v3204
        %4378 = vmatprep.subr.bf16.mxu0 0
        %4379 = vmatpush1.bf16.msra.mxu0 %v3205
        %4380 = vmatprep.subr.bf16.mxu0 0
        %4381 = vmatpush1.bf16.msra.mxu0 %v3206
        %4382 = vmatprep.mubr.bf16.mxu0 %v574
        %4383 = vmatmul.mubr.bf16.gmra.mrb[0].mxu0 %v573
        %v4384 = vpop.f32.mrb[0].mxu0
        %v4385 = vadd.f32 %v4344, %v4384
        %v4386 = vpop.f32.mrb[0].mxu0
        %v4387 = vpop.f32.mrb[0].mxu0
        %v4388 = vadd.f32 %v4347, %v4387
        %v4389 = vpop.f32.mrb[0].mxu0
        %4390 = vdwg.mxu0
        %4391 = vmatprep.subr.bf16.mxu0 0
        %4392 = vmatpush1.bf16.msra.mxu0 %v3207
        %4393 = vmatprep.subr.bf16.mxu0 0
        %4394 = vmatpush1.bf16.msra.mxu0 %v3208
        %4395 = vmatprep.subr.bf16.mxu0 0
        %4396 = vmatpush1.bf16.msra.mxu0 %v3209
        %4397 = vmatprep.subr.bf16.mxu0 0
        %4398 = vmatpush1.bf16.msra.mxu0 %v3210
        %4399 = vmatprep.subr.bf16.mxu0 0
        %4400 = vmatpush1.bf16.msra.mxu0 %v3211
        %4401 = vmatprep.subr.bf16.mxu0 0
        %4402 = vmatpush1.bf16.msra.mxu0 %v3212
        %4403 = vmatprep.subr.bf16.mxu0 0
        %4404 = vmatpush1.bf16.msra.mxu0 %v3213
        %4405 = vmatprep.subr.bf16.mxu0 0
        %4406 = vmatpush1.bf16.msra.mxu0 %v3214
        %4407 = vmatprep.subr.bf16.mxu0 0
        %4408 = vmatpush1.bf16.msra.mxu0 %v3215
        %4409 = vmatprep.subr.bf16.mxu0 0
        %4410 = vmatpush1.bf16.msra.mxu0 %v3216
        %4411 = vmatprep.subr.bf16.mxu0 0
        %4412 = vmatpush1.bf16.msra.mxu0 %v3217
        %4413 = vmatprep.subr.bf16.mxu0 0
        %4414 = vmatpush1.bf16.msra.mxu0 %v3218
        %4415 = vmatprep.subr.bf16.mxu0 0
        %4416 = vmatpush1.bf16.msra.mxu0 %v3219
        %4417 = vmatprep.subr.bf16.mxu0 0
        %4418 = vmatpush1.bf16.msra.mxu0 %v3220
        %4419 = vmatprep.subr.bf16.mxu0 0
        %4420 = vmatpush1.bf16.msra.mxu0 %v3221
        %4421 = vmatprep.subr.bf16.mxu0 0
        %4422 = vmatpush1.bf16.msra.mxu0 %v3222
        %4423 = vmatprep.mubr.bf16.mxu0 %v576
        %4424 = vmatmul.mubr.bf16.gmra.mrb[0].mxu0 %v575
        %v4425 = vpop.f32.mrb[0].mxu0
        %v4426 = vadd.f32 %v4385, %v4425
        %v4427 = vpop.f32.mrb[0].mxu0
        %v4428 = vpop.f32.mrb[0].mxu0
        %v4429 = vadd.f32 %v4388, %v4428
        %v4430 = vpop.f32.mrb[0].mxu0
        %4431 = vdwg.mxu0
        %4432 = vmatprep.subr.bf16.mxu0 0
        %4433 = vmatpush1.bf16.msra.mxu0 %v3223
        %4434 = vmatprep.subr.bf16.mxu0 0
        %4435 = vmatpush1.bf16.msra.mxu0 %v3224
        %4436 = vmatprep.subr.bf16.mxu0 0
        %4437 = vmatpush1.bf16.msra.mxu0 %v3225
        %4438 = vmatprep.subr.bf16.mxu0 0
        %4439 = vmatpush1.bf16.msra.mxu0 %v3226
        %4440 = vmatprep.subr.bf16.mxu0 0
        %4441 = vmatpush1.bf16.msra.mxu0 %v3227
        %4442 = vmatprep.subr.bf16.mxu0 0
        %4443 = vmatpush1.bf16.msra.mxu0 %v3228
        %4444 = vmatprep.subr.bf16.mxu0 0
        %4445 = vmatpush1.bf16.msra.mxu0 %v3229
        %4446 = vmatprep.subr.bf16.mxu0 0
        %4447 = vmatpush1.bf16.msra.mxu0 %v3230
        %4448 = vmatprep.subr.bf16.mxu0 0
        %4449 = vmatpush1.bf16.msra.mxu0 %v3231
        %4450 = vmatprep.subr.bf16.mxu0 0
        %4451 = vmatpush1.bf16.msra.mxu0 %v3232
        %4452 = vmatprep.subr.bf16.mxu0 0
        %4453 = vmatpush1.bf16.msra.mxu0 %v3233
        %4454 = vmatprep.subr.bf16.mxu0 0
        %4455 = vmatpush1.bf16.msra.mxu0 %v3234
        %4456 = vmatprep.subr.bf16.mxu0 0
        %4457 = vmatpush1.bf16.msra.mxu0 %v3235
        %4458 = vmatprep.subr.bf16.mxu0 0
        %4459 = vmatpush1.bf16.msra.mxu0 %v3236
        %4460 = vmatprep.subr.bf16.mxu0 0
        %4461 = vmatpush1.bf16.msra.mxu0 %v3237
        %4462 = vmatprep.subr.bf16.mxu0 0
        %4463 = vmatpush1.bf16.msra.mxu0 %v3238
        %4464 = vmatprep.mubr.bf16.mxu0 %v578
        %4465 = vmatmul.mubr.bf16.gmra.mrb[0].mxu0 %v577
        %v4466 = vpop.f32.mrb[0].mxu0
        %v4467 = vadd.f32 %v4426, %v4466
        %v4468 = vpop.f32.mrb[0].mxu0
        %v4469 = vpop.f32.mrb[0].mxu0
        %v4470 = vadd.f32 %v4429, %v4469
        %v4471 = vpop.f32.mrb[0].mxu0
        %4472 = vdwg.mxu0
        %4473 = vmatprep.subr.bf16.mxu0 0
        %4474 = vmatpush1.bf16.msra.mxu0 %v3239
        %4475 = vmatprep.subr.bf16.mxu0 0
        %4476 = vmatpush1.bf16.msra.mxu0 %v3240
        %4477 = vmatprep.subr.bf16.mxu0 0
        %4478 = vmatpush1.bf16.msra.mxu0 %v3241
        %4479 = vmatprep.subr.bf16.mxu0 0
        %4480 = vmatpush1.bf16.msra.mxu0 %v3242
        %4481 = vmatprep.subr.bf16.mxu0 0
        %4482 = vmatpush1.bf16.msra.mxu0 %v3243
        %4483 = vmatprep.subr.bf16.mxu0 0
        %4484 = vmatpush1.bf16.msra.mxu0 %v3244
        %4485 = vmatprep.subr.bf16.mxu0 0
        %4486 = vmatpush1.bf16.msra.mxu0 %v3245
        %4487 = vmatprep.subr.bf16.mxu0 0
        %4488 = vmatpush1.bf16.msra.mxu0 %v3246
        %4489 = vmatprep.subr.bf16.mxu0 0
        %4490 = vmatpush1.bf16.msra.mxu0 %v3247
        %4491 = vmatprep.subr.bf16.mxu0 0
        %4492 = vmatpush1.bf16.msra.mxu0 %v3248
        %4493 = vmatprep.subr.bf16.mxu0 0
        %4494 = vmatpush1.bf16.msra.mxu0 %v3249
        %4495 = vmatprep.subr.bf16.mxu0 0
        %4496 = vmatpush1.bf16.msra.mxu0 %v3250
        %4497 = vmatprep.subr.bf16.mxu0 0
        %4498 = vmatpush1.bf16.msra.mxu0 %v3251
        %4499 = vmatprep.subr.bf16.mxu0 0
        %4500 = vmatpush1.bf16.msra.mxu0 %v3252
        %4501 = vmatprep.subr.bf16.mxu0 0
        %4502 = vmatpush1.bf16.msra.mxu0 %v3253
        %4503 = vmatprep.subr.bf16.mxu0 0
        %4504 = vmatpush1.bf16.msra.mxu0 %v3254
        %4505 = vmatprep.mubr.bf16.mxu0 %v580
        %4506 = vmatmul.mubr.bf16.gmra.mrb[0].mxu0 %v579
        %v4507 = vpop.f32.mrb[0].mxu0
        %v4508 = vadd.f32 %v4467, %v4507
        %v4509 = vpop.f32.mrb[0].mxu0
        %v4510 = vpop.f32.mrb[0].mxu0
        %v4511 = vadd.f32 %v4470, %v4510
        %v4512 = vpop.f32.mrb[0].mxu0
        %4513 = vdwg.mxu0
        %4514 = vmatprep.subr.bf16.mxu0 0
        %4515 = vmatpush1.bf16.msra.mxu0 %v3255
        %4516 = vmatprep.subr.bf16.mxu0 0
        %4517 = vmatpush1.bf16.msra.mxu0 %v3256
        %4518 = vmatprep.subr.bf16.mxu0 0
        %4519 = vmatpush1.bf16.msra.mxu0 %v3257
        %4520 = vmatprep.subr.bf16.mxu0 0
        %4521 = vmatpush1.bf16.msra.mxu0 %v3258
        %4522 = vmatprep.subr.bf16.mxu0 0
        %4523 = vmatpush1.bf16.msra.mxu0 %v3259
        %4524 = vmatprep.subr.bf16.mxu0 0
        %4525 = vmatpush1.bf16.msra.mxu0 %v3260
        %4526 = vmatprep.subr.bf16.mxu0 0
        %4527 = vmatpush1.bf16.msra.mxu0 %v3261
        %4528 = vmatprep.subr.bf16.mxu0 0
        %4529 = vmatpush1.bf16.msra.mxu0 %v3262
        %4530 = vmatprep.subr.bf16.mxu0 0
        %4531 = vmatpush1.bf16.msra.mxu0 %v3263
        %4532 = vmatprep.subr.bf16.mxu0 0
        %4533 = vmatpush1.bf16.msra.mxu0 %v3264
        %4534 = vmatprep.subr.bf16.mxu0 0
        %4535 = vmatpush1.bf16.msra.mxu0 %v3265
        %4536 = vmatprep.subr.bf16.mxu0 0
        %4537 = vmatpush1.bf16.msra.mxu0 %v3266
        %4538 = vmatprep.subr.bf16.mxu0 0
        %4539 = vmatpush1.bf16.msra.mxu0 %v3267
        %4540 = vmatprep.subr.bf16.mxu0 0
        %4541 = vmatpush1.bf16.msra.mxu0 %v3268
        %4542 = vmatprep.subr.bf16.mxu0 0
        %4543 = vmatpush1.bf16.msra.mxu0 %v3269
        %4544 = vmatprep.subr.bf16.mxu0 0
        %4545 = vmatpush1.bf16.msra.mxu0 %v3270
        %4546 = vmatprep.mubr.bf16.mxu0 %v582
        %4547 = vmatmul.mubr.bf16.gmra.mrb[0].mxu0 %v581
        %v4548 = vpop.f32.mrb[0].mxu0
        %v4549 = vadd.f32 %v4508, %v4548
        %v4550 = vpop.f32.mrb[0].mxu0
        %v4551 = vpop.f32.mrb[0].mxu0
        %v4552 = vadd.f32 %v4511, %v4551
        %v4553 = vpop.f32.mrb[0].mxu0
        %4554 = vdwg.mxu0
        %4555 = vmatprep.subr.bf16.mxu0 0
        %4556 = vmatpush1.bf16.msra.mxu0 %v3271
        %4557 = vmatprep.subr.bf16.mxu0 0
        %4558 = vmatpush1.bf16.msra.mxu0 %v3272
        %4559 = vmatprep.subr.bf16.mxu0 0
        %4560 = vmatpush1.bf16.msra.mxu0 %v3273
        %4561 = vmatprep.subr.bf16.mxu0 0
        %4562 = vmatpush1.bf16.msra.mxu0 %v3274
        %4563 = vmatprep.subr.bf16.mxu0 0
        %4564 = vmatpush1.bf16.msra.mxu0 %v3275
        %4565 = vmatprep.subr.bf16.mxu0 0
        %4566 = vmatpush1.bf16.msra.mxu0 %v3276
        %4567 = vmatprep.subr.bf16.mxu0 0
        %4568 = vmatpush1.bf16.msra.mxu0 %v3277
        %4569 = vmatprep.subr.bf16.mxu0 0
        %4570 = vmatpush1.bf16.msra.mxu0 %v3278
        %4571 = vmatprep.subr.bf16.mxu0 0
        %4572 = vmatpush1.bf16.msra.mxu0 %v3279
        %4573 = vmatprep.subr.bf16.mxu0 0
        %4574 = vmatpush1.bf16.msra.mxu0 %v3280
        %4575 = vmatprep.subr.bf16.mxu0 0
        %4576 = vmatpush1.bf16.msra.mxu0 %v3281
        %4577 = vmatprep.subr.bf16.mxu0 0
        %4578 = vmatpush1.bf16.msra.mxu0 %v3282
        %4579 = vmatprep.subr.bf16.mxu0 0
        %4580 = vmatpush1.bf16.msra.mxu0 %v3283
        %4581 = vmatprep.subr.bf16.mxu0 0
        %4582 = vmatpush1.bf16.msra.mxu0 %v3284
        %4583 = vmatprep.subr.bf16.mxu0 0
        %4584 = vmatpush1.bf16.msra.mxu0 %v3285
        %4585 = vmatprep.subr.bf16.mxu0 0
        %4586 = vmatpush1.bf16.msra.mxu0 %v3286
        %4587 = vmatprep.mubr.bf16.mxu0 %v584
        %4588 = vmatmul.mubr.bf16.gmra.mrb[0].mxu0 %v583
        %v4589 = vpop.f32.mrb[0].mxu0
        %v4590 = vadd.f32 %v4549, %v4589
        %v4591 = vpop.f32.mrb[0].mxu0
        %v4592 = vpop.f32.mrb[0].mxu0
        %v4593 = vadd.f32 %v4552, %v4592
        %v4594 = vpop.f32.mrb[0].mxu0
        %4595 = vdwg.mxu0
        %4596 = vmatprep.subr.bf16.mxu0 0
        %4597 = vmatpush1.bf16.msra.mxu0 %v3287
        %4598 = vmatprep.subr.bf16.mxu0 0
        %4599 = vmatpush1.bf16.msra.mxu0 %v3288
        %4600 = vmatprep.subr.bf16.mxu0 0
        %4601 = vmatpush1.bf16.msra.mxu0 %v3289
        %4602 = vmatprep.subr.bf16.mxu0 0
        %4603 = vmatpush1.bf16.msra.mxu0 %v3290
        %4604 = vmatprep.subr.bf16.mxu0 0
        %4605 = vmatpush1.bf16.msra.mxu0 %v3291
        %4606 = vmatprep.subr.bf16.mxu0 0
        %4607 = vmatpush1.bf16.msra.mxu0 %v3292
        %4608 = vmatprep.subr.bf16.mxu0 0
        %4609 = vmatpush1.bf16.msra.mxu0 %v3293
        %4610 = vmatprep.subr.bf16.mxu0 0
        %4611 = vmatpush1.bf16.msra.mxu0 %v3294
        %4612 = vmatprep.subr.bf16.mxu0 0
        %4613 = vmatpush1.bf16.msra.mxu0 %v3295
        %4614 = vmatprep.subr.bf16.mxu0 0
        %4615 = vmatpush1.bf16.msra.mxu0 %v3296
        %4616 = vmatprep.subr.bf16.mxu0 0
        %4617 = vmatpush1.bf16.msra.mxu0 %v3297
        %4618 = vmatprep.subr.bf16.mxu0 0
        %4619 = vmatpush1.bf16.msra.mxu0 %v3298
        %4620 = vmatprep.subr.bf16.mxu0 0
        %4621 = vmatpush1.bf16.msra.mxu0 %v3299
        %4622 = vmatprep.subr.bf16.mxu0 0
        %4623 = vmatpush1.bf16.msra.mxu0 %v3300
        %4624 = vmatprep.subr.bf16.mxu0 0
        %4625 = vmatpush1.bf16.msra.mxu0 %v3301
        %4626 = vmatprep.subr.bf16.mxu0 0
        %4627 = vmatpush1.bf16.msra.mxu0 %v3302
        %4628 = vmatprep.mubr.bf16.mxu0 %v586
        %4629 = vmatmul.mubr.bf16.gmra.mrb[0].mxu0 %v585
        %v4630 = vpop.f32.mrb[0].mxu0
        %v4631 = vadd.f32 %v4590, %v4630
        %v4632 = vpop.f32.mrb[0].mxu0
        %v4633 = vpop.f32.mrb[0].mxu0
        %v4634 = vadd.f32 %v4593, %v4633
        %v4635 = vpop.f32.mrb[0].mxu0
        %4636 = vdwg.mxu0
        %4637 = vmatprep.subr.bf16.mxu0 0
        %4638 = vmatpush1.bf16.msra.mxu0 %v3303
        %4639 = vmatprep.subr.bf16.mxu0 0
        %4640 = vmatpush1.bf16.msra.mxu0 %v3304
        %4641 = vmatprep.subr.bf16.mxu0 0
        %4642 = vmatpush1.bf16.msra.mxu0 %v3305
        %4643 = vmatprep.subr.bf16.mxu0 0
        %4644 = vmatpush1.bf16.msra.mxu0 %v3306
        %4645 = vmatprep.subr.bf16.mxu0 0
        %4646 = vmatpush1.bf16.msra.mxu0 %v3307
        %4647 = vmatprep.subr.bf16.mxu0 0
        %4648 = vmatpush1.bf16.msra.mxu0 %v3308
        %4649 = vmatprep.subr.bf16.mxu0 0
        %4650 = vmatpush1.bf16.msra.mxu0 %v3309
        %4651 = vmatprep.subr.bf16.mxu0 0
        %4652 = vmatpush1.bf16.msra.mxu0 %v3310
        %4653 = vmatprep.subr.bf16.mxu0 0
        %4654 = vmatpush1.bf16.msra.mxu0 %v3311
        %4655 = vmatprep.subr.bf16.mxu0 0
        %4656 = vmatpush1.bf16.msra.mxu0 %v3312
        %4657 = vmatprep.subr.bf16.mxu0 0
        %4658 = vmatpush1.bf16.msra.mxu0 %v3313
        %4659 = vmatprep.subr.bf16.mxu0 0
        %4660 = vmatpush1.bf16.msra.mxu0 %v3314
        %4661 = vmatprep.subr.bf16.mxu0 0
        %4662 = vmatpush1.bf16.msra.mxu0 %v3315
        %4663 = vmatprep.subr.bf16.mxu0 0
        %4664 = vmatpush1.bf16.msra.mxu0 %v3316
        %4665 = vmatprep.subr.bf16.mxu0 0
        %4666 = vmatpush1.bf16.msra.mxu0 %v3317
        %4667 = vmatprep.subr.bf16.mxu0 0
        %4668 = vmatpush1.bf16.msra.mxu0 %v3318
        %4669 = vmatprep.mubr.bf16.mxu0 %v588
        %4670 = vmatmul.mubr.bf16.gmra.mrb[0].mxu0 %v587
        %v4671 = vpop.f32.mrb[0].mxu0
        %v4672 = vadd.f32 %v4631, %v4671
        %v4673 = vpop.f32.mrb[0].mxu0
        %v4674 = vpop.f32.mrb[0].mxu0
        %v4675 = vadd.f32 %v4634, %v4674
        %v4676 = vpop.f32.mrb[0].mxu0
        %4677 = vdwg.mxu0
        %4678 = vmatprep.subr.bf16.mxu0 0
        %4679 = vmatpush1.bf16.msra.mxu0 %v3319
        %4680 = vmatprep.subr.bf16.mxu0 0
        %4681 = vmatpush1.bf16.msra.mxu0 %v3320
        %4682 = vmatprep.subr.bf16.mxu0 0
        %4683 = vmatpush1.bf16.msra.mxu0 %v3321
        %4684 = vmatprep.subr.bf16.mxu0 0
        %4685 = vmatpush1.bf16.msra.mxu0 %v3322
        %4686 = vmatprep.subr.bf16.mxu0 0
        %4687 = vmatpush1.bf16.msra.mxu0 %v3323
        %4688 = vmatprep.subr.bf16.mxu0 0
        %4689 = vmatpush1.bf16.msra.mxu0 %v3324
        %4690 = vmatprep.subr.bf16.mxu0 0
        %4691 = vmatpush1.bf16.msra.mxu0 %v3325
        %4692 = vmatprep.subr.bf16.mxu0 0
        %4693 = vmatpush1.bf16.msra.mxu0 %v3326
        %4694 = vmatprep.subr.bf16.mxu0 0
        %4695 = vmatpush1.bf16.msra.mxu0 %v3327
        %4696 = vmatprep.subr.bf16.mxu0 0
        %4697 = vmatpush1.bf16.msra.mxu0 %v3328
        %4698 = vmatprep.subr.bf16.mxu0 0
        %4699 = vmatpush1.bf16.msra.mxu0 %v3329
        %4700 = vmatprep.subr.bf16.mxu0 0
        %4701 = vmatpush1.bf16.msra.mxu0 %v3330
        %4702 = vmatprep.subr.bf16.mxu0 0
        %4703 = vmatpush1.bf16.msra.mxu0 %v3331
        %4704 = vmatprep.subr.bf16.mxu0 0
        %4705 = vmatpush1.bf16.msra.mxu0 %v3332
        %4706 = vmatprep.subr.bf16.mxu0 0
        %4707 = vmatpush1.bf16.msra.mxu0 %v3333
        %4708 = vmatprep.subr.bf16.mxu0 0
        %4709 = vmatpush1.bf16.msra.mxu0 %v3334
        %4710 = vmatprep.mubr.bf16.mxu0 %v590
        %4711 = vmatmul.mubr.bf16.gmra.mrb[0].mxu0 %v589
        %v4712 = vpop.f32.mrb[0].mxu0
        %v4713 = vadd.f32 %v4672, %v4712
        %v4714 = vpop.f32.mrb[0].mxu0
        %v4715 = vpop.f32.mrb[0].mxu0
        %v4716 = vadd.f32 %v4675, %v4715
        %v4717 = vpop.f32.mrb[0].mxu0
        %4718 = vdwg.mxu0
        %4719 = vmatprep.subr.bf16.mxu0 0
        %4720 = vmatpush1.bf16.msra.mxu0 %v3335
        %4721 = vmatprep.subr.bf16.mxu0 0
        %4722 = vmatpush1.bf16.msra.mxu0 %v3336
        %4723 = vmatprep.subr.bf16.mxu0 0
        %4724 = vmatpush1.bf16.msra.mxu0 %v3337
        %4725 = vmatprep.subr.bf16.mxu0 0
        %4726 = vmatpush1.bf16.msra.mxu0 %v3338
        %4727 = vmatprep.subr.bf16.mxu0 0
        %4728 = vmatpush1.bf16.msra.mxu0 %v3339
        %4729 = vmatprep.subr.bf16.mxu0 0
        %4730 = vmatpush1.bf16.msra.mxu0 %v3340
        %4731 = vmatprep.subr.bf16.mxu0 0
        %4732 = vmatpush1.bf16.msra.mxu0 %v3341
        %4733 = vmatprep.subr.bf16.mxu0 0
        %4734 = vmatpush1.bf16.msra.mxu0 %v3342
        %4735 = vmatprep.subr.bf16.mxu0 0
        %4736 = vmatpush1.bf16.msra.mxu0 0
        %4737 = vmatprep.subr.bf16.mxu0 0
        %4738 = vmatpush1.bf16.msra.mxu0 0
        %4739 = vmatprep.subr.bf16.mxu0 0
        %4740 = vmatpush1.bf16.msra.mxu0 0
        %4741 = vmatprep.subr.bf16.mxu0 0
        %4742 = vmatpush1.bf16.msra.mxu0 0
        %4743 = vmatprep.subr.bf16.mxu0 0
        %4744 = vmatpush1.bf16.msra.mxu0 0
        %4745 = vmatprep.subr.bf16.mxu0 0
        %4746 = vmatpush1.bf16.msra.mxu0 0
        %4747 = vmatprep.subr.bf16.mxu0 0
        %4748 = vmatpush1.bf16.msra.mxu0 0
        %4749 = vmatprep.subr.bf16.mxu0 0
        %4750 = vmatpush1.bf16.msra.mxu0 0
        %4751 = vmatprep.mubr.bf16.mxu0 0
        %4752 = vmatmul.mubr.bf16.gmra.mrb[0].mxu0 %v591
        %v4753 = vpop.f32.mrb[0].mxu0
        %v4754 = vadd.f32 %v4713, %v4753
        %v4755 = vpop.f32.mrb[0].mxu0
        %v4756 = vpop.f32.mrb[0].mxu0
        %v4757 = vadd.f32 %v4716, %v4756
        %v4758 = vpop.f32.mrb[0].mxu0
        %4759 = vdwg.mxu0
        %v4760 = vadd.f32 %v1381, %v4754
        %v4761 = vadd.f32 %v1382, %v4757
        %4762 = vst [vmem:[#allocation2] sm:$0xff] %v4760
        %4763 = vst [vmem:[#allocation2 + $0x8] sm:$0xff] %v4761
        %p4764 = scmp.eq.s32.totalorder %s35, 3
        // Predicated region
        $region85: #{tpu_custom_call.1} parent=55 // pred_check
          %p4765 = pneg %p4764
        $region86: #{tpu_custom_call.1} parent=55 // pred_check_branch
          %4767 = sbr.rel (%p4765) target = $region88
        $region87: #{tpu_custom_call.1} parent=55 // pred_region
          %v4768 = vld [vmem:[#allocation2] sm:$0xff]
          %v4769 = vld [vmem:[#allocation2 + $0x8] sm:$0xff]
          %v4770 = vld [vmem:[#allocation10] sm:$0x1]
          %v4772 = vlaneseq
          %v4773 = vshrl.u32 %v4772, 7
          %v4774 = vsub.s32 0, %v4773
          %v4775 = vrot.slane %v4770, %v4774
          %v4777 = vadd.f32 %v4768, %v4775
          %v4778 = vadd.f32 %v4769, %v4775
          %v4779 = vmax.f32 %v4777, 0.0
          %v4780 = vmax.f32 %v4778, 0.0
          %v4781 = vld [vmem:[#allocation11] sm:$0xff]
          %v4782 = vld [vmem:[#allocation11 + $0x8] sm:$0xff]
          %v4783 = vld [vmem:[#allocation11 + $0x10] sm:$0xff]
          %v4784 = vld [vmem:[#allocation11 + $0x18] sm:$0xff]
          %v4785 = vld [vmem:[#allocation11 + $0x20] sm:$0xff]
          %v4786 = vld [vmem:[#allocation11 + $0x28] sm:$0xff]
          %v4787 = vld [vmem:[#allocation11 + $0x30] sm:$0xff]
          %v4788 = vld [vmem:[#allocation11 + $0x38] sm:$0xff]
          %v4789 = vld [vmem:[#allocation13] sm:$0x1]
          %v4791 = vlaneseq
          %v4792 = vshrl.u32 %v4791, 7
          %v4793 = vsub.s32 0, %v4792
          %v4794 = vrot.slane %v4789, %v4793
          %vm4796 = vcmask 523264
          %v4798 = vsel %vm4796, %v4779, 0
          %v4801 = vsel %vm4796, %v4780, 0
          %4803 = vmatprep.subr.mxu0 0.0
          %4804 = vmatpush1.msra.mxu0 %v4781
          %4805 = vmatprep.subr.mxu0 0.0
          %4806 = vmatpush1.msra.mxu0 %v4782
          %4807 = vmatprep.subr.mxu0 0.0
          %4808 = vmatpush1.msra.mxu0 %v4783
          %4809 = vmatprep.subr.mxu0 0.0
          %4810 = vmatpush1.msra.mxu0 %v4784
          %4811 = vmatprep.subr.mxu0 0.0
          %4812 = vmatpush1.msra.mxu0 %v4785
          %4813 = vmatprep.subr.mxu0 0.0
          %4814 = vmatpush1.msra.mxu0 %v4786
          %4815 = vmatprep.subr.mxu0 0.0
          %4816 = vmatpush1.msra.mxu0 %v4787
          %4817 = vmatprep.subr.mxu0 0.0
          %4818 = vmatpush1.msra.mxu0 %v4788
          %4819 = vmatprep.subr.mxu0 0.0
          %4820 = vmatpush1.msra.mxu0 0.0
          %4821 = vmatprep.subr.mxu0 0.0
          %4822 = vmatpush1.msra.mxu0 0.0
          %4823 = vmatprep.subr.mxu0 0.0
          %4824 = vmatpush1.msra.mxu0 0.0
          %4825 = vmatprep.subr.mxu0 0.0
          %4826 = vmatpush1.msra.mxu0 0.0
          %4827 = vmatprep.subr.mxu0 0.0
          %4828 = vmatpush1.msra.mxu0 0.0
          %4829 = vmatprep.subr.mxu0 0.0
          %4830 = vmatpush1.msra.mxu0 0.0
          %4831 = vmatprep.subr.mxu0 0.0
          %4832 = vmatpush1.msra.mxu0 0.0
          %4833 = vmatprep.subr.mxu0 0.0
          %4834 = vmatpush1.msra.mxu0 0.0
          %4835 = vmatprep.subr.mxu0 0.0
          %4836 = vmatpush1.msra.mxu0 0.0
          %4837 = vmatprep.subr.mxu0 0.0
          %4838 = vmatpush1.msra.mxu0 0.0
          %4839 = vmatprep.subr.mxu0 0.0
          %4840 = vmatpush1.msra.mxu0 0.0
          %4841 = vmatprep.subr.mxu0 0.0
          %4842 = vmatpush1.msra.mxu0 0.0
          %4843 = vmatprep.subr.mxu0 0.0
          %4844 = vmatpush1.msra.mxu0 0.0
          %4845 = vmatprep.subr.mxu0 0.0
          %4846 = vmatpush1.msra.mxu0 0.0
          %4847 = vmatprep.subr.mxu0 0.0
          %4848 = vmatpush1.msra.mxu0 0.0
          %4849 = vmatprep.subr.mxu0 0.0
          %4850 = vmatpush1.msra.mxu0 0.0
          %4851 = vmatprep.subr.mxu0 0.0
          %4852 = vmatpush1.msra.mxu0 0.0
          %4853 = vmatprep.subr.mxu0 0.0
          %4854 = vmatpush1.msra.mxu0 0.0
          %4855 = vmatprep.subr.mxu0 0.0
          %4856 = vmatpush1.msra.mxu0 0.0
          %4857 = vmatprep.subr.mxu0 0.0
          %4858 = vmatpush1.msra.mxu0 0.0
          %4859 = vmatprep.subr.mxu0 0.0
          %4860 = vmatpush1.msra.mxu0 0.0
          %4861 = vmatprep.subr.mxu0 0.0
          %4862 = vmatpush1.msra.mxu0 0.0
          %4863 = vmatprep.subr.mxu0 0.0
          %4864 = vmatpush1.msra.mxu0 0.0
          %4865 = vmatprep.subr.mxu0 0.0
          %4866 = vmatpush1.msra.mxu0 0.0
          %4867 = vmatprep.mubr.f32.mxu0 0.0
          %4868 = vmatmul.mubr.f32.gmra.mrb[0].mxu0 %v4798
          %v4869 = vpop.f32.mrb[0].mxu0
          %v4870 = vadd.f32 %v4794, %v4869
          %v4871 = vpop.f32.mrb[0].mxu0
          %4872 = vmatprep.mubr.f32.mxu0 0.0
          %4873 = vmatmul.mubr.f32.gmra.mrb[0].mxu0 %v4801
          %v4874 = vpop.f32.mrb[0].mxu0
          %v4875 = vadd.f32 %v4794, %v4874
          %v4876 = vpop.f32.mrb[0].mxu0
          %4877 = vdwg.mxu0
          %v4878 = vmax.f32 %v4870, 0.0
          %v4879 = vmax.f32 %v4875, 0.0
          %v4880 = vld [vmem:[%s5] sm:$0xff]
          %v4881 = vld [vmem:[%s5 + $0x8] sm:$0xff]
          %v4882 = vld [vmem:[%s5 + $0x10] sm:$0xff]
          %v4883 = vld [vmem:[%s5 + $0x18] sm:$0xff]
          %v4884 = vld [vmem:[%s5 + $0x20] sm:$0xff]
          %v4885 = vld [vmem:[%s5 + $0x28] sm:$0xff]
          %v4886 = vld [vmem:[%s5 + $0x30] sm:$0xff]
          %v4887 = vld [vmem:[%s5 + $0x38] sm:$0xff]
          %v4888 = vld [vmem:[#allocation14] sm:$0x1]
          %v4890 = vlaneseq
          %v4891 = vshrl.u32 %v4890, 7
          %v4892 = vsub.s32 0, %v4891
          %v4893 = vrot.slane %v4888, %v4892
          %v4896 = vsel %vm4796, %v4878, 0
          %v4899 = vsel %vm4796, %v4879, 0
          %4901 = vmatprep.subr.mxu0 0.0
          %4902 = vmatpush1.msra.mxu0 %v4880
          %4903 = vmatprep.subr.mxu0 0.0
          %4904 = vmatpush1.msra.mxu0 %v4881
          %4905 = vmatprep.subr.mxu0 0.0
          %4906 = vmatpush1.msra.mxu0 %v4882
          %4907 = vmatprep.subr.mxu0 0.0
          %4908 = vmatpush1.msra.mxu0 %v4883
          %4909 = vmatprep.subr.mxu0 0.0
          %4910 = vmatpush1.msra.mxu0 %v4884
          %4911 = vmatprep.subr.mxu0 0.0
          %4912 = vmatpush1.msra.mxu0 %v4885
          %4913 = vmatprep.subr.mxu0 0.0
          %4914 = vmatpush1.msra.mxu0 %v4886
          %4915 = vmatprep.subr.mxu0 0.0
          %4916 = vmatpush1.msra.mxu0 %v4887
          %4917 = vmatprep.subr.mxu0 0.0
          %4918 = vmatpush1.msra.mxu0 0.0
          %4919 = vmatprep.subr.mxu0 0.0
          %4920 = vmatpush1.msra.mxu0 0.0
          %4921 = vmatprep.subr.mxu0 0.0
          %4922 = vmatpush1.msra.mxu0 0.0
          %4923 = vmatprep.subr.mxu0 0.0
          %4924 = vmatpush1.msra.mxu0 0.0
          %4925 = vmatprep.subr.mxu0 0.0
          %4926 = vmatpush1.msra.mxu0 0.0
          %4927 = vmatprep.subr.mxu0 0.0
          %4928 = vmatpush1.msra.mxu0 0.0
          %4929 = vmatprep.subr.mxu0 0.0
          %4930 = vmatpush1.msra.mxu0 0.0
          %4931 = vmatprep.subr.mxu0 0.0
          %4932 = vmatpush1.msra.mxu0 0.0
          %4933 = vmatprep.subr.mxu0 0.0
          %4934 = vmatpush1.msra.mxu0 0.0
          %4935 = vmatprep.subr.mxu0 0.0
          %4936 = vmatpush1.msra.mxu0 0.0
          %4937 = vmatprep.subr.mxu0 0.0
          %4938 = vmatpush1.msra.mxu0 0.0
          %4939 = vmatprep.subr.mxu0 0.0
          %4940 = vmatpush1.msra.mxu0 0.0
          %4941 = vmatprep.subr.mxu0 0.0
          %4942 = vmatpush1.msra.mxu0 0.0
          %4943 = vmatprep.subr.mxu0 0.0
          %4944 = vmatpush1.msra.mxu0 0.0
          %4945 = vmatprep.subr.mxu0 0.0
          %4946 = vmatpush1.msra.mxu0 0.0
          %4947 = vmatprep.subr.mxu0 0.0
          %4948 = vmatpush1.msra.mxu0 0.0
          %4949 = vmatprep.subr.mxu0 0.0
          %4950 = vmatpush1.msra.mxu0 0.0
          %4951 = vmatprep.subr.mxu0 0.0
          %4952 = vmatpush1.msra.mxu0 0.0
          %4953 = vmatprep.subr.mxu0 0.0
          %4954 = vmatpush1.msra.mxu0 0.0
          %4955 = vmatprep.subr.mxu0 0.0
          %4956 = vmatpush1.msra.mxu0 0.0
          %4957 = vmatprep.subr.mxu0 0.0
          %4958 = vmatpush1.msra.mxu0 0.0
          %4959 = vmatprep.subr.mxu0 0.0
          %4960 = vmatpush1.msra.mxu0 0.0
          %4961 = vmatprep.subr.mxu0 0.0
          %4962 = vmatpush1.msra.mxu0 0.0
          %4963 = vmatprep.subr.mxu0 0.0
          %4964 = vmatpush1.msra.mxu0 0.0
          %4965 = vmatprep.mubr.f32.mxu0 0.0
          %4966 = vmatmul.mubr.f32.gmra.mrb[0].mxu0 %v4896
          %v4967 = vpop.f32.mrb[0].mxu0
          %v4968 = vadd.f32 %v4893, %v4967
          %v4969 = vpop.f32.mrb[0].mxu0
          %4970 = vmatprep.mubr.f32.mxu0 0.0
          %4971 = vmatmul.mubr.f32.gmra.mrb[0].mxu0 %v4899
          %v4972 = vpop.f32.mrb[0].mxu0
          %v4973 = vadd.f32 %v4893, %v4972
          %v4974 = vpop.f32.mrb[0].mxu0
          %4975 = vdwg.mxu0
          %v4976 = vld [vmem:[%s7] sm:$0xff]
          %v4977 = vld [vmem:[%s7 + $0x8] sm:$0xff]
          %4979 = vset.pattern.permute.xlu0 0
          %4980 = vperm.xlu0 %4979, %v4976
          %v4981 = vpop.permute.xlu0 %4980
          %4984 = vset.pattern.permute.xlu0 0
          %4985 = vperm.xlu0 %4984, %v4977
          %v4986 = vpop.permute.xlu0 %4985
          %v4988 = vmul.f32 %v4968, %v4981
          %v4989 = vmul.f32 %v4973, %v4986
          %4990 = vset.pattern.permute.xlu0 1
          %4991 = vperm.xlu0 %4990, %v4976
          %v4992 = vpop.permute.xlu0 %4991
          %4994 = vset.pattern.permute.xlu0 1
          %4995 = vperm.xlu0 %4994, %v4977
          %v4996 = vpop.permute.xlu0 %4995
          %v4998 = vadd.f32 %v4988, %v4992
          %v4999 = vadd.f32 %v4989, %v4996
          %vm5000 = vcmask 80896
          %5001 = vst.msk [vmem:[#allocation3] sm:$0xff] %vm5000, %v4998
          %5002 = vst.msk [vmem:[#allocation3 + $0x8] sm:$0xff] %vm5000, %v4999
          %5003 = vset.pattern.permute.xlu0 2
          %5004 = vperm.xlu0 %5003, %v4976
          %v5005 = vpop.permute.xlu0 %5004
          %5007 = vset.pattern.permute.xlu0 2
          %5008 = vperm.xlu0 %5007, %v4977
          %v5009 = vpop.permute.xlu0 %5008
          %v5011 = vmul.f32 %v4777, %v5005
          %v5012 = vmul.f32 %v4778, %v5009
          %5015 = vrot.lane.b32.xlu0 %v5011, 80
          %v5016 = vpop.permute.xlu0 %5015
          %5017 = vrot.lane.b32.xlu0 %v5012, 80
          %v5018 = vpop.permute.xlu0 %5017
          %vm5021 = vcmask 212096
          %5022 = vst.msk [vmem:[#allocation3] sm:$0xff] %vm5021, %v5016
          %5023 = vst.msk [vmem:[#allocation3 + $0x8] sm:$0xff] %vm5021, %v5018
          %s5024 = sld [smem:[#allocation4]]
          %v5025 = vld [vmem:[#allocation3] ss:$8 sm:$0x3]
          %v5026 = vadd.f32 %v5025, 0.0
          %v5027 = vstv %s5024
          %vm5028 = vcmp.ge.f32.partialorder %v5026, %v5027
          %v5029 = vsel %vm5028, 0.0, 8.0
          %v5030 = vmin.f32 %v5029, 8.0
          %s5031 = scalar_lea.vmem [#allocation3], 1
          %v5032 = vld [vmem:[%s5031] ss:$8 sm:$0x3]
          %v5033 = vadd.f32 %v5026, %v5032
          %vm5034 = vcmp.ge.f32.partialorder %v5033, %v5027
          %v5035 = vsel %vm5034, 1.0, 8.0
          %v5036 = vmin.f32 %v5030, %v5035
          %s5037 = scalar_lea.vmem [#allocation3], 2
          %v5038 = vld [vmem:[%s5037] ss:$8 sm:$0x3]
          %v5039 = vadd.f32 %v5033, %v5038
          %vm5040 = vcmp.ge.f32.partialorder %v5039, %v5027
          %v5041 = vsel %vm5040, 2.0, 8.0
          %v5042 = vmin.f32 %v5036, %v5041
          %s5043 = scalar_lea.vmem [#allocation3], 3
          %v5044 = vld [vmem:[%s5043] ss:$8 sm:$0x3]
          %v5045 = vadd.f32 %v5039, %v5044
          %vm5046 = vcmp.ge.f32.partialorder %v5045, %v5027
          %v5047 = vsel %vm5046, 3.0, 8.0
          %v5048 = vmin.f32 %v5042, %v5047
          %s5049 = scalar_lea.vmem [#allocation3], 4
          %v5050 = vld [vmem:[%s5049] ss:$8 sm:$0x3]
          %v5051 = vadd.f32 %v5045, %v5050
          %vm5052 = vcmp.ge.f32.partialorder %v5051, %v5027
          %v5053 = vsel %vm5052, 4.0, 8.0
          %v5054 = vmin.f32 %v5048, %v5053
          %s5055 = scalar_lea.vmem [#allocation3], 5
          %v5056 = vld [vmem:[%s5055] ss:$8 sm:$0x3]
          %v5057 = vadd.f32 %v5051, %v5056
          %vm5058 = vcmp.ge.f32.partialorder %v5057, %v5027
          %v5059 = vsel %vm5058, 5.0, 8.0
          %v5060 = vmin.f32 %v5054, %v5059
          %s5061 = scalar_lea.vmem [#allocation3], 6
          %v5062 = vld [vmem:[%s5061] ss:$8 sm:$0x3]
          %v5063 = vadd.f32 %v5057, %v5062
          %vm5064 = vcmp.ge.f32.partialorder %v5063, %v5027
          %v5065 = vsel %vm5064, 6.0, 8.0
          %v5066 = vmin.f32 %v5060, %v5065
          %s5067 = scalar_lea.vmem [#allocation3], 7
          %v5068 = vld [vmem:[%s5067] ss:$8 sm:$0x3]
          %v5069 = vadd.f32 %v5063, %v5068
          %vm5070 = vcmp.ge.f32.partialorder %v5069, %v5027
          %v5071 = vsel %vm5070, 7.0, 8.0
          %v5072 = vmin.f32 %v5066, %v5071
          %vm5073 = vcmask 74752
          %v5074 = vsel %vm5073, %v5072, inf
          %5075 = vmin.xlane.f32.xlu0 %v5074
          %v5076 = vpop.xlane.xlu0 %5075
          %v5077 = vlaneseq
          %v5078 = vand.u32 %v5077, 127
          %v5079 = vcvt.s32.f32 %v5078
          %v5080 = vsub.f32 %v5076, %v5079
          %v5081 = vadd.f32 %v5080, 0.5
          %v5082 = vmul.f32 %v5081, 2.0
          %v5083 = vxor.u32 %v5082, 2147483648
          %v5084 = vmul.f32 %v5083, 1.442695
          %v5085 = vpow.pop %v5084
          %v5086 = vadd.f32 %v5085, 1.0
          %v5087 = vrcp.pop %v5086
          %v5088 = vmul.f32 1.0, %v5087
          %5090 = vset.pattern.permute.xlu0 0
          %5091 = vperm.xlu0 %5090, %v5088
          %v5092 = vpop.permute.xlu0 %5091
          %v5094 = vmul.f32 %v5025, %v5092
          %v5095 = vadd.f32 %v5094, 0.0
          %5096 = vset.pattern.permute.xlu0 1
          %5097 = vperm.xlu0 %5096, %v5088
          %v5098 = vpop.permute.xlu0 %5097
          %v5100 = vmul.f32 %v5032, %v5098
          %v5101 = vadd.f32 %v5095, %v5100
          %5102 = vset.pattern.permute.xlu0 2
          %5103 = vperm.xlu0 %5102, %v5088
          %v5104 = vpop.permute.xlu0 %5103
          %v5106 = vmul.f32 %v5038, %v5104
          %v5107 = vadd.f32 %v5101, %v5106
          %5108 = vset.pattern.permute.xlu0 3
          %5109 = vperm.xlu0 %5108, %v5088
          %v5110 = vpop.permute.xlu0 %5109
          %v5112 = vmul.f32 %v5044, %v5110
          %v5113 = vadd.f32 %v5107, %v5112
          %5114 = vset.pattern.permute.xlu0 4
          %5115 = vperm.xlu0 %5114, %v5088
          %v5116 = vpop.permute.xlu0 %5115
          %v5118 = vmul.f32 %v5050, %v5116
          %v5119 = vadd.f32 %v5113, %v5118
          %5120 = vset.pattern.permute.xlu0 5
          %5121 = vperm.xlu0 %5120, %v5088
          %v5122 = vpop.permute.xlu0 %5121
          %v5124 = vmul.f32 %v5056, %v5122
          %v5125 = vadd.f32 %v5119, %v5124
          %5126 = vset.pattern.permute.xlu0 6
          %5127 = vperm.xlu0 %5126, %v5088
          %v5128 = vpop.permute.xlu0 %5127
          %v5130 = vmul.f32 %v5062, %v5128
          %v5131 = vadd.f32 %v5125, %v5130
          %5132 = vset.pattern.permute.xlu0 7
          %5133 = vperm.xlu0 %5132, %v5088
          %v5134 = vpop.permute.xlu0 %5133
          %v5136 = vmul.f32 %v5068, %v5134
          %v5137 = vadd.f32 %v5131, %v5136
          %5139 = vrot.lane.b32.xlu0 %v5137, 112
          %v5140 = vpop.permute.xlu0 %5139
          %5142 = vst.msk [vmem:[%s435] sm:$0x3] %vm5073, %v5140
          %vm5143 = vcmask 83024
          %5144 = vst.msk [vmem:[%s435] sm:$0x3] %vm5143, %v5076
        $region88: #{tpu_custom_call.1} parent=55 // pred_fallthru
          _
        %s5145 = sand.u32 %s246, 1
        %s5146 = scalar_lea.sflag [#allocation7], %s5145
        %s5147 = sand.u32 %s246, 1
        %s5148 = smul.addr %s5147, 2
        %s5149 = scalar_lea.vmem [#allocation16], %s5148
        // Predicated region
        $region89: #{tpu_custom_call.1} parent=55 // pred_check
          %p5150 = pneg %p256
        $region90: #{tpu_custom_call.1} parent=55 // pred_check_branch
          %5152 = sbr.rel (%p5150) target = $region92
        $region91: #{tpu_custom_call.1} parent=55 // pred_region
          %s5154 = ssub.s32 32, 32
          %5155 = vsyncadd %s5146, %s5154
          %s5156 = smul.addr %s34, 32
          %s5157 = scalar_lea.hbm %s9, %s5156
          %s5159 = sshll.u32 %s5149, 4
          %s5160 = int_to_ptr.vmem [resolvable:$true] %s5159
          %5162 = dma.vmem_to_hbm [thread:$0]  %s5160, 32, %s5157, %s5146
        $region92: #{tpu_custom_call.1} parent=55 // pred_fallthru
          _
      $region56: #{tpu_custom_call.1} parent=5 // pred_fallthru
        _
      %p5163 = scmp.le.s32.totalorder 2, %s25
      // Predicated region
      $region93: #{tpu_custom_call.1} parent=5 // pred_check
        %p5164 = pneg %p5163
      $region94: #{tpu_custom_call.1} parent=5 // pred_check_branch
        %5166 = sbr.rel (%p5164) target = $region96
      $region95: #{tpu_custom_call.1} parent=5 // pred_region
        %s5167 = ssub.s32 %s25, 2
        // Predicated region
        $region97: #{tpu_custom_call.1} parent=95 // pred_check
          %p5168 = pneg %p262
        $region98: #{tpu_custom_call.1} parent=95 // pred_check_branch
          %5170 = sbr.rel (%p5168) target = $region100
        $region99: #{tpu_custom_call.1} parent=95 // pred_region
          %s5171 = sand.u32 %s247, 1
          %s5172 = scalar_lea.sflag [#allocation7], %s5171
          %s5173 = sand.u32 %s247, 1
          %s5174 = smul.addr %s5173, 2
          %s5175 = scalar_lea.vmem [#allocation16], %s5174
          %5176 = dma.done %s5172, 32
        $region100: #{tpu_custom_call.1} parent=95 // pred_fallthru
          _
      $region96: #{tpu_custom_call.1} parent=5 // pred_fallthru
        _
    $region6: #{tpu_custom_call.1} parent=1 // loop_footer
      %s29 = sadd.s32 1, %s25
    $region7: #{tpu_custom_call.1} parent=1 // loop_footer_branch
      %24 = sbr.rel target = $region3
    $region8: #{tpu_custom_call.1} parent=1 // loop_exit
      _
    %5177 = vsyncpa [#allocation6], 1
    %s5178 = scalar_lea.sflag [#allocation6], 1
    %5179 = vsyncpa %s5178, 1
    %5180 = vsyncpa [#allocation9], 1
    %5181 = vsyncpa [#allocation12], 1
    %5182 = vsyncpa [#allocation15], 1
    %5183 = vsyncpa [#allocation7], 1
    %s5184 = scalar_lea.sflag [#allocation7], 1
    %5185 = vsyncpa %s5184, 1

</llo_original>
